<compile_context>
chip_gen: v7x
topology: tpu7x:2x2x1
jax: 0.10.0
libtpu: 0.0.40
codegen_flags: <defaults>
</compile_context>

<pallas_src>
import functools
import math

import jax
import jax.numpy as jnp
from jax import lax
from jax.experimental import pallas as pl
from jax.experimental.pallas import tpu as pltpu

LANE = 128
NEG_INF = -1e9
_LN_EPS = 1e-5


def _rup(x, m=LANE):
    return ((x + m - 1) // m) * m


# ------------------------------ Pallas kernel ------------------------------

def _decoder_kernel(
        tgt_ref, mem_ref, tkpm_ref, mkpm_ref, pe_ref,
        pw1_ref, pw2_ref, pnw_ref, sb_ref, wh_ref,
        wqkv_ref, wos_ref, wqc_ref, wkvc_ref, woc_ref, wf1_ref, wf2_ref,
        lb_ref,
        out_ref,
        x_sc,
        *, nhead, dh_pad, e_true, e_pad, f_pad, hid_pad, head_pad,
        causal, stop_col, eps):
    """Whole decoder forward for one (batch element, layer) grid step."""
    f32 = jnp.float32
    bf16 = jnp.bfloat16
    l = pl.program_id(1)
    td = x_sc.shape[0]

    # --- prenet (fc1+relu, fc2+relu) + norm linear + alpha*PE  (layer 0 only)
    # TODO(synk): dropout layers (prenet p=0.2, pos p=0.1, layer p=0.1) are
    #             identity here (inference semantics).
    @pl.when(l == 0)
    def _():
        sb = sb_ref[...]
        t = tgt_ref[...].astype(bf16)                       # [Td, n_mels]
        h = jnp.dot(t, pw1_ref[...], preferred_element_type=f32) + sb[0:1, :hid_pad]
        h = jnp.maximum(h, 0.0)
        h = jnp.dot(h.astype(bf16), pw2_ref[...],
                    preferred_element_type=f32) + sb[1:2, :e_pad]
        h = jnp.maximum(h, 0.0)
        h = jnp.dot(h.astype(bf16), pnw_ref[...],
                    preferred_element_type=f32) + sb[2:3, :e_pad]
        x_sc[...] = h + pe_ref[...]                          # pads stay zero

    x = x_sc[...]                                            # [Td, e_pad] f32
    mem = mem_ref[...]                                       # [Te, e_pad] bf16
    lb = lb_ref[...]                                         # [16, Wb]  f32
    inv_e = 1.0 / e_true

    def add_ln(res, upd, g, b):
        # LayerNorm over the true E lanes: pads of res/upd/g/b are all zero so
        # sums with an explicit 1/E are exact and pad lanes stay exactly zero.
        v = res + upd
        mean = jnp.sum(v, axis=-1, keepdims=True) * inv_e
        msq = jnp.sum(v * v, axis=-1, keepdims=True) * inv_e
        var = msq - mean * mean
        return (v - mean) * lax.rsqrt(var + eps) * g + b

    def softmax(s):
        m = jnp.max(s, axis=-1, keepdims=True)
        p = jnp.exp(s - m)
        return p * pl.reciprocal(jnp.sum(p, axis=-1, keepdims=True), approx=True)

    def attend(q, kv, bias, wo_ref, bo):
        # q: [Td, e_pad] bf16 (scale pre-folded), kv: [Tk, 2*e_pad] bf16,
        # heads live in lane blocks of width dh_pad (only first dh real).
        outs = []
        for h in range(nhead):
            qh = q[:, h * dh_pad:(h + 1) * dh_pad]
            kh = kv[:, h * dh_pad:(h + 1) * dh_pad]
            vh = kv[:, e_pad + h * dh_pad:e_pad + (h + 1) * dh_pad]
            s = lax.dot_general(qh, kh, (((1,), (1,)), ((), ())),
                                preferred_element_type=f32)
            p = softmax(s + bias).astype(bf16)
            outs.append(jnp.dot(p, vh, preferred_element_type=f32))
        cat = jnp.concatenate(outs, axis=-1).astype(bf16)    # [Td, e_pad]
        # single out-projection, K = e_pad (weight rows head-block permuted)
        return jnp.dot(cat, wo_ref[...], preferred_element_type=f32) + bo

    # ----------------- self-attention (fused QKV, causal mask in-kernel) ----
    xb = x.astype(bf16)
    qkv = (jnp.dot(xb, wqkv_ref[...], preferred_element_type=f32)
           + lb[0:1, :3 * e_pad]).astype(bf16)               # [Td, 3*e_pad]
    sbias = tkpm_ref[...]                                    # [1, Td]
    if causal:
        r = lax.broadcasted_iota(jnp.int32, (td, td), 0)
        c = lax.broadcasted_iota(jnp.int32, (td, td), 1)
        sbias = jnp.where(c > r, jnp.float32(NEG_INF), jnp.float32(0.0)) + sbias
    sa = attend(qkv[:, :e_pad], qkv[:, e_pad:], sbias, wos_ref, lb[1:2, :e_pad])
    x = add_ln(x, sa, lb[2:3, :e_pad], lb[3:4, :e_pad])

    # ----------------- cross-attention (fused KV from encoder memory) -------
    xb = x.astype(bf16)
    q = (jnp.dot(xb, wqc_ref[...], preferred_element_type=f32)
         + lb[4:5, :e_pad]).astype(bf16)
    kv = (jnp.dot(mem, wkvc_ref[...], preferred_element_type=f32)
          + lb[5:6, :2 * e_pad]).astype(bf16)
    ca = attend(q, kv, mkpm_ref[...], woc_ref, lb[6:7, :e_pad])
    x = add_ln(x, ca, lb[7:8, :e_pad], lb[8:9, :e_pad])

    # ----------------- feed-forward ------------------------------------------
    hdn = jnp.dot(x.astype(bf16), wf1_ref[...],
                  preferred_element_type=f32) + lb[9:10, :f_pad]
    hdn = jnp.maximum(hdn, 0.0).astype(bf16)
    ff = jnp.dot(hdn, wf2_ref[...], preferred_element_type=f32) + lb[10:11, :e_pad]
    x = add_ln(x, ff, lb[11:12, :e_pad], lb[12:13, :e_pad])

    x_sc[...] = x

    # ----------------- merged mel + stop head (last layer only) --------------
    @pl.when(l == pl.num_programs(1) - 1)
    def _():
        sb = sb_ref[...]
        y = jnp.dot(x.astype(bf16), wh_ref[...],
                    preferred_element_type=f32) + sb[3:4, :head_pad]
        lane = lax.broadcasted_iota(jnp.int32, (td, head_pad), 1)
        out_ref[...] = jnp.where(lane == stop_col, jax.nn.sigmoid(y), y)


# ------------------------------ Parameters ---------------------------------

def _dense_init(key, din, dout):
    """Mimics torch.nn.Linear default init (uniform +- 1/sqrt(fan_in))."""
    scale = 1.0 / math.sqrt(din)
    wkey, bkey = jax.random.split(key)
    w = jax.random.uniform(wkey, (din, dout), jnp.float32, -scale, scale)
    b = jax.random.uniform(bkey, (dout,), jnp.float32, -scale, scale)
    return w, b


def make_pe(max_len, d_model):
    pos = jnp.arange(max_len, dtype=jnp.float32)[:, None]
    div = jnp.exp(jnp.arange(0, d_model, 2, dtype=jnp.float32)
                  * (-math.log(10000.0) / d_model))
    pe = jnp.zeros((max_len, d_model), jnp.float32)
    pe = pe.at[:, 0::2].set(jnp.sin(pos * div))
    pe = pe.at[:, 1::2].set(jnp.cos(pos * div))
    return pe


def init_params(key, embed_dim, nhead, num_layers, dim_ff, n_mels, max_len=5000):
    keys = jax.random.split(key, 5 + num_layers)
    p = {"embed_dim": embed_dim, "nhead": nhead, "dim_ff": dim_ff}
    p["prenet_w1"], p["prenet_b1"] = _dense_init(keys[0], n_mels, 2 * embed_dim)
    p["prenet_w2"], p["prenet_b2"] = _dense_init(keys[1], 2 * embed_dim, embed_dim)
    p["norm_w"], p["norm_b"] = _dense_init(keys[2], embed_dim, embed_dim)
    p["alpha"] = jnp.ones((1,), jnp.float32)
    p["pe"] = make_pe(max_len, embed_dim)
    p["mel_w"], p["mel_b"] = _dense_init(keys[3], embed_dim, n_mels)
    p["stop_w"], p["stop_b"] = _dense_init(keys[4], embed_dim, 1)

    layers = []
    for l in range(num_layers):
        lkeys = jax.random.split(keys[5 + l], 10)

        def attn_params(ks):
            wq, bq = _dense_init(ks[0], embed_dim, embed_dim)
            wk, bk = _dense_init(ks[1], embed_dim, embed_dim)
            wv, bv = _dense_init(ks[2], embed_dim, embed_dim)
            wo, bo = _dense_init(ks[3], embed_dim, embed_dim)
            return dict(wq=wq, bq=bq, wk=wk, bk=bk, wv=wv, bv=bv, wo=wo, bo=bo)

        lp = {"self_attn": attn_params(lkeys[0:4]),
              "cross_attn": attn_params(lkeys[4:8])}
        lp["ff_w1"], lp["ff_b1"] = _dense_init(lkeys[8], embed_dim, dim_ff)
        lp["ff_w2"], lp["ff_b2"] = _dense_init(lkeys[9], dim_ff, embed_dim)
        for n in ("ln1", "ln2", "ln3"):
            lp[n + "_g"] = jnp.ones((embed_dim,), jnp.float32)
            lp[n + "_b"] = jnp.zeros((embed_dim,), jnp.float32)
        layers.append(lp)
    p["layers"] = layers
    return p


# ----------------- one-time weight padding / packing (hoisted) -------------

def pack_params(params, n_mels):
    E = params["embed_dim"]
    H = params["nhead"]
    F = params["dim_ff"]
    assert E % H == 0
    dh = E // H
    e_pad = _rup(E)
    assert e_pad % H == 0, "nhead must divide the padded embed dim (128-mult)"
    dh_pad = e_pad // H
    f_pad = _rup(F)
    hid_pad = _rup(2 * E)
    head_pad = _rup(n_mels + 1)
    scale = 1.0 / math.sqrt(dh)
    bf16 = jnp.bfloat16
    L = len(params["layers"])

    def pad2(w, rows, cols):
        return jnp.pad(w, ((0, rows - w.shape[0]), (0, cols - w.shape[1])))

    def pad1(v, cols):
        return jnp.pad(v, (0, cols - v.shape[0]))

    def head_cols(w, s=1.0):
        # [din, E] -> [din, e_pad]; head h's dh real cols land at lane h*dh_pad.
        out = jnp.zeros((w.shape[0], e_pad), jnp.float32)
        for h in range(H):
            out = out.at[:, h * dh_pad:h * dh_pad + dh].set(w[:, h * dh:(h + 1) * dh] * s)
        return out

    def head_cols_b(b, s=1.0):
        out = jnp.zeros((e_pad,), jnp.float32)
        for h in range(H):
            out = out.at[h * dh_pad:h * dh_pad + dh].set(b[h * dh:(h + 1) * dh] * s)
        return out

    def head_rows(w):
        # [E, dout] -> [e_pad, dout]; head h's dh real rows land at row h*dh_pad.
        out = jnp.zeros((e_pad, w.shape[1]), jnp.float32)
        for h in range(H):
            out = out.at[h * dh_pad:h * dh_pad + dh, :].set(w[h * dh:(h + 1) * dh, :])
        return out

    wb = max(3 * e_pad, 2 * e_pad, f_pad)
    sw = max(hid_pad, e_pad, head_pad)

    wqkv, wos, wqc, wkvc, woc, wf1, wf2, lbias = [], [], [], [], [], [], [], []
    for lp in params["layers"]:
        sa, ca = lp["self_attn"], lp["cross_attn"]
        # 1/sqrt(dh) folded into Q weights & bias.
        wq = pad2(head_cols(sa["wq"], scale), e_pad, e_pad)
        wk = pad2(head_cols(sa["wk"]), e_pad, e_pad)
        wv = pad2(head_cols(sa["wv"]), e_pad, e_pad)
        wqkv.append(jnp.concatenate([wq, wk, wv], axis=1).astype(bf16))
        wos.append(pad2(head_rows(sa["wo"]), e_pad, e_pad).astype(bf16))
        wqc.append(pad2(head_cols(ca["wq"], scale), e_pad, e_pad).astype(bf16))
        wkc = pad2(head_cols(ca["wk"]), e_pad, e_pad)
        wvc = pad2(head_cols(ca["wv"]), e_pad, e_pad)
        wkvc.append(jnp.concatenate([wkc, wvc], axis=1).astype(bf16))
        woc.append(pad2(head_rows(ca["wo"]), e_pad, e_pad).astype(bf16))
        wf1.append(pad2(lp["ff_w1"], e_pad, f_pad).astype(bf16))
        wf2.append(pad2(lp["ff_w2"], f_pad, e_pad).astype(bf16))

        rows = jnp.zeros((16, wb), jnp.float32)
        rows = rows.at[0, :3 * e_pad].set(jnp.concatenate(
            [head_cols_b(sa["bq"], scale), head_cols_b(sa["bk"]),
             head_cols_b(sa["bv"])]))
        rows = rows.at[1, :e_pad].set(pad1(sa["bo"], e_pad))
        rows = rows.at[2, :e_pad].set(pad1(lp["ln1_g"], e_pad))
        rows = rows.at[3, :e_pad].set(pad1(lp["ln1_b"], e_pad))
        rows = rows.at[4, :e_pad].set(head_cols_b(ca["bq"], scale))
        rows = rows.at[5, :2 * e_pad].set(jnp.concatenate(
            [head_cols_b(ca["bk"]), head_cols_b(ca["bv"])]))
        rows = rows.at[6, :e_pad].set(pad1(ca["bo"], e_pad))
        rows = rows.at[7, :e_pad].set(pad1(lp["ln2_g"], e_pad))
        rows = rows.at[8, :e_pad].set(pad1(lp["ln2_b"], e_pad))
        rows = rows.at[9, :f_pad].set(pad1(lp["ff_b1"], f_pad))
        rows = rows.at[10, :e_pad].set(pad1(lp["ff_b2"], e_pad))
        rows = rows.at[11, :e_pad].set(pad1(lp["ln3_g"], e_pad))
        rows = rows.at[12, :e_pad].set(pad1(lp["ln3_b"], e_pad))
        lbias.append(rows)

    sb = jnp.zeros((8, sw), jnp.float32)
    sb = sb.at[0, :hid_pad].set(pad1(params["prenet_b1"], hid_pad))
    sb = sb.at[1, :e_pad].set(pad1(params["prenet_b2"], e_pad))
    sb = sb.at[2, :e_pad].set(pad1(params["norm_b"], e_pad))
    sb = sb.at[3, :head_pad].set(
        pad1(jnp.concatenate([params["mel_b"], params["stop_b"]]), head_pad))

    return {
        "cfg": dict(E=E, H=H, dh_pad=dh_pad, e_pad=e_pad, f_pad=f_pad,
                    hid_pad=hid_pad, head_pad=head_pad, wb=wb, sw=sw,
                    L=L, n_mels=n_mels),
        "pe_pad": jnp.pad(params["pe"], ((0, 0), (0, e_pad - E))),
        "alpha": params["alpha"],
        "pw1": pad2(params["prenet_w1"], n_mels, hid_pad).astype(bf16),
        "pw2": pad2(params["prenet_w2"], hid_pad, e_pad).astype(bf16),
        "pnw": pad2(params["norm_w"], e_pad, e_pad).astype(bf16),
        "sb": sb,
        "wh": pad2(jnp.concatenate([params["mel_w"], params["stop_w"]], axis=1),
                   e_pad, head_pad).astype(bf16),
        "wqkv": jnp.stack(wqkv), "wos": jnp.stack(wos),
        "wqc": jnp.stack(wqc), "wkvc": jnp.stack(wkvc), "woc": jnp.stack(woc),
        "wf1": jnp.stack(wf1), "wf2": jnp.stack(wf2),
        "lbias": jnp.stack(lbias),
    }


# ------------------------------- Forward ------------------------------------

def decoder_forward(packed, memory, tgt, causal=True,
                    memory_key_padding_mask=None, tgt_key_padding_mask=None):
    """memory: [B, T_enc, E]; tgt: [B, T_dec, n_mels]
       returns mel [B, T_dec, n_mels], stop [B, T_dec, 1].
       TODO(synk): only the standard causal tgt_mask (built in-kernel) and
       boolean key-padding masks are supported, not arbitrary dense tgt_mask."""
    cfg = packed["cfg"]
    B, Td, n_mels = tgt.shape
    Te = memory.shape[1]
    E, H, L = cfg["E"], cfg["H"], cfg["L"]
    e_pad, f_pad = cfg["e_pad"], cfg["f_pad"]
    hid_pad, head_pad = cfg["hid_pad"], cfg["head_pad"]
    wb, sw = cfg["wb"], cfg["sw"]
    assert n_mels == cfg["n_mels"] and memory.shape[2] == E

    # encoder memory: pad to 128 lanes + cast to bf16 once (lane-dense loads).
    memp = jnp.pad(memory, ((0, 0), (0, 0), (0, e_pad - E))).astype(jnp.bfloat16)
    pe = (packed["alpha"] * packed["pe_pad"][:Td]).astype(jnp.float32)

    if tgt_key_padding_mask is not None:
        tkpm = jnp.where(tgt_key_padding_mask, NEG_INF, 0.0
                         ).astype(jnp.float32).reshape(B, 1, Td)
    else:
        tkpm = jnp.zeros((B, 1, Td), jnp.float32)
    if memory_key_padding_mask is not None:
        mkpm = jnp.where(memory_key_padding_mask, NEG_INF, 0.0
                         ).astype(jnp.float32).reshape(B, 1, Te)
    else:
        mkpm = jnp.zeros((B, 1, Te), jnp.float32)

    kern = functools.partial(
        _decoder_kernel, nhead=H, dh_pad=cfg["dh_pad"], e_true=E, e_pad=e_pad,
        f_pad=f_pad, hid_pad=hid_pad, head_pad=head_pad, causal=causal,
        stop_col=n_mels, eps=_LN_EPS)

    def b3(shape):      # per-batch blocks (constant across the layer axis)
        return pl.BlockSpec(shape, lambda b, l: (b, 0, 0))

    def c2(shape):      # constant weight blocks (fetched once)
        return pl.BlockSpec(shape, lambda b, l: (0, 0))

    def l3(shape):      # per-layer stacked weight blocks (pipelined over l)
        return pl.BlockSpec(shape, lambda b, l: (l, 0, 0))

    in_specs = [
        b3((None, Td, n_mels)),            # tgt
        b3((None, Te, e_pad)),             # memory (bf16, lane-padded)
        b3((None, 1, Td)),                 # tgt key-padding additive row
        b3((None, 1, Te)),                 # memory key-padding additive row
        c2((Td, e_pad)),                   # alpha * positional encoding
        c2((n_mels, hid_pad)),             # prenet fc1
        c2((hid_pad, e_pad)),              # prenet fc2
        c2((e_pad, e_pad)),                # norm linear
        c2((8, sw)),                       # packed static biases
        c2((e_pad, head_pad)),             # merged mel+stop head weight
        l3((None, e_pad, 3 * e_pad)),      # wqkv (self)
        l3((None, e_pad, e_pad)),          # wo   (self)
        l3((None, e_pad, e_pad)),          # wq   (cross)
        l3((None, e_pad, 2 * e_pad)),      # wkv  (cross)
        l3((None, e_pad, e_pad)),          # wo   (cross)
        l3((None, e_pad, f_pad)),          # ff w1
        l3((None, f_pad, e_pad)),          # ff w2
        l3((None, 16, wb)),                # packed per-layer biases / LN params
    ]
    out_spec = b3((None, Td, head_pad))

    # explicit VMEM budget (double-buffered blocks + scratch + slack)
    def blk(shape, dt):
        sub = -(-shape[-2] // 8) * 8
        lane = -(-shape[-1] // 128) * 128
        return sub * lane * jnp.dtype(dt).itemsize

    f32, bf = jnp.float32, jnp.bfloat16
    total = sum(blk(s, d) for s, d in [
        ((Td, n_mels), f32), ((Te, e_pad), bf), ((1, Td), f32), ((1, Te), f32),
        ((Td, e_pad), f32), ((n_mels, hid_pad), bf), ((hid_pad, e_pad), bf),
        ((e_pad, e_pad), bf), ((8, sw), f32), ((e_pad, head_pad), bf),
        ((e_pad, 3 * e_pad), bf), ((e_pad, e_pad), bf), ((e_pad, e_pad), bf),
        ((e_pad, 2 * e_pad), bf), ((e_pad, e_pad), bf), ((e_pad, f_pad), bf),
        ((f_pad, e_pad), bf), ((16, wb), f32), ((Td, head_pad), f32),
        ((Td, e_pad), f32)])
    vmem_limit = int(max(32 << 20, min(64 << 20, 2 * total + (16 << 20))))

    out = pl.pallas_call(
        kern,
        out_shape=jax.ShapeDtypeStruct((B, Td, head_pad), jnp.float32),
        grid=(B, L),
        in_specs=in_specs,
        out_specs=out_spec,
        scratch_shapes=[pltpu.VMEM((Td, e_pad), jnp.float32)],
        compiler_params=pltpu.CompilerParams(
            dimension_semantics=("parallel", "arbitrary"),
            vmem_limit_bytes=vmem_limit),
    )(tgt, memp, tkpm, mkpm, pe,
      packed["pw1"], packed["pw2"], packed["pnw"], packed["sb"], packed["wh"],
      packed["wqkv"], packed["wos"], packed["wqc"], packed["wkvc"],
      packed["woc"], packed["wf1"], packed["wf2"], packed["lbias"])

    mel = out[..., :n_mels]
    stop = out[..., n_mels:n_mels + 1]
    return mel, stop


# --------------------------------- Main --------------------------------------

if __name__ == "__main__":
    embed_dim, nhead, num_layers, dim_ff, n_mels = 32, 4, 2, 64, 16
    B, Te, Td = 2, 8, 8

    key = jax.random.PRNGKey(0)
    pkey, mkey, tkey = jax.random.split(key, 3)
    params = init_params(pkey, embed_dim, nhead, num_layers, dim_ff, n_mels,
                         max_len=64)
    packed = pack_params(params, n_mels)       # one-time weight pack (hoisted)

    memory = jax.random.normal(mkey, (B, Te, embed_dim), jnp.float32)
    tgt = jax.random.normal(tkey, (B, Td, n_mels), jnp.float32)

    # causal decoder mask (== generate_square_subsequent_mask) built in-kernel.
    mel, stop = decoder_forward(packed, memory, tgt, causal=True)
    jax.block_until_ready((mel, stop))

    assert mel.shape == (B, Td, n_mels), mel.shape
    assert stop.shape == (B, Td, 1), stop.shape
    assert bool(jnp.all(jnp.isfinite(mel))) and bool(jnp.all(jnp.isfinite(stop)))
    assert bool(jnp.all((stop >= 0.0) & (stop <= 1.0)))
    print("KERNEL_OK")
</pallas_src>

<mosaic_0001>
module attributes {stable_mosaic.version = 11 : i64} {
  func.func @_decoder_kernel(%arg0: i32, %arg1: i32, %arg2: memref<1x8x16xf32, #tpu.memory_space<vmem>>, %arg3: memref<1x8x128xbf16, #tpu.memory_space<vmem>>, %arg4: memref<1x1x8xf32, #tpu.memory_space<vmem>>, %arg5: memref<1x1x8xf32, #tpu.memory_space<vmem>>, %arg6: memref<8x128xf32, #tpu.memory_space<vmem>>, %arg7: memref<16x128xbf16, #tpu.memory_space<vmem>>, %arg8: memref<128x128xbf16, #tpu.memory_space<vmem>>, %arg9: memref<128x128xbf16, #tpu.memory_space<vmem>>, %arg10: memref<8x128xf32, #tpu.memory_space<vmem>>, %arg11: memref<128x128xbf16, #tpu.memory_space<vmem>>, %arg12: memref<1x128x384xbf16, #tpu.memory_space<vmem>>, %arg13: memref<1x128x128xbf16, #tpu.memory_space<vmem>>, %arg14: memref<1x128x128xbf16, #tpu.memory_space<vmem>>, %arg15: memref<1x128x256xbf16, #tpu.memory_space<vmem>>, %arg16: memref<1x128x128xbf16, #tpu.memory_space<vmem>>, %arg17: memref<1x128x128xbf16, #tpu.memory_space<vmem>>, %arg18: memref<1x128x128xbf16, #tpu.memory_space<vmem>>, %arg19: memref<1x16x384xf32, #tpu.memory_space<vmem>>, %arg20: memref<1x8x128xf32, #tpu.memory_space<vmem>>, %arg21: memref<8x128xf32, #tpu.memory_space<vmem>>) attributes {dimension_semantics = [#tpu.dimension_semantics<parallel>, #tpu.dimension_semantics<arbitrary>], iteration_bounds = array<i64: 2, 2>, scalar_prefetch = 0 : i64, scratch_operands = 1 : i64, tpu.core_type = #tpu.core_type<tc>, window_params = [{transform_indices = @transform_0, window_bounds = array<i64: 1, 8, 16>}, {transform_indices = @transform_1, window_bounds = array<i64: 1, 8, 128>}, {transform_indices = @transform_2, window_bounds = array<i64: 1, 1, 8>}, {transform_indices = @transform_3, window_bounds = array<i64: 1, 1, 8>}, {pipeline_mode = #tpu.pipeline_mode<synchronous>, transform_indices = @transform_4, window_bounds = array<i64: 8, 128>}, {pipeline_mode = #tpu.pipeline_mode<synchronous>, transform_indices = @transform_5, window_bounds = array<i64: 16, 128>}, {pipeline_mode = #tpu.pipeline_mode<synchronous>, transform_indices = @transform_6, window_bounds = array<i64: 128, 128>}, {pipeline_mode = #tpu.pipeline_mode<synchronous>, transform_indices = @transform_7, window_bounds = array<i64: 128, 128>}, {pipeline_mode = #tpu.pipeline_mode<synchronous>, transform_indices = @transform_8, window_bounds = array<i64: 8, 128>}, {pipeline_mode = #tpu.pipeline_mode<synchronous>, transform_indices = @transform_9, window_bounds = array<i64: 128, 128>}, {transform_indices = @transform_10, window_bounds = array<i64: 1, 128, 384>}, {transform_indices = @transform_11, window_bounds = array<i64: 1, 128, 128>}, {transform_indices = @transform_12, window_bounds = array<i64: 1, 128, 128>}, {transform_indices = @transform_13, window_bounds = array<i64: 1, 128, 256>}, {transform_indices = @transform_14, window_bounds = array<i64: 1, 128, 128>}, {transform_indices = @transform_15, window_bounds = array<i64: 1, 128, 128>}, {transform_indices = @transform_16, window_bounds = array<i64: 1, 128, 128>}, {transform_indices = @transform_17, window_bounds = array<i64: 1, 16, 384>}, {transform_indices = @transform_18, window_bounds = array<i64: 1, 8, 128>}]} {
    %c0_i32 = arith.constant 0 : i32
    %0 = arith.cmpi eq, %arg1, %c0_i32 : i32
    %1 = arith.extui %0 : i1 to i32
    %c0_i32_0 = arith.constant 0 : i32
    %2 = arith.cmpi ne, %1, %c0_i32_0 : i32
    scf.if %2 {
      %c0_94 = arith.constant 0 : index
      %c0_95 = arith.constant 0 : index
      %296 = vector.load %arg10[%c0_94, %c0_95] : memref<8x128xf32, #tpu.memory_space<vmem>>, vector<8x128xf32>
      %c0_96 = arith.constant 0 : index
      %c0_97 = arith.constant 0 : index
      %c0_98 = arith.constant 0 : index
      %297 = vector.load %arg2[%c0_96, %c0_97, %c0_98] : memref<1x8x16xf32, #tpu.memory_space<vmem>>, vector<1x8x16xf32>
      %298 = vector.shape_cast %297 : vector<1x8x16xf32> to vector<8x16xf32>
      %299 = arith.truncf %298 : vector<8x16xf32> to vector<8x16xbf16>
      %c0_99 = arith.constant 0 : index
      %c0_100 = arith.constant 0 : index
      %300 = vector.load %arg7[%c0_99, %c0_100] : memref<16x128xbf16, #tpu.memory_space<vmem>>, vector<16x128xbf16>
      %cst_101 = arith.constant dense<0.000000e+00> : vector<8x128xf32>
      %301 = tpu.matmul %299, %300, %cst_101 {dimension_numbers = #tpu.dot_dimension_numbers<[1], [0], [0], [1], [0, 0, 1, 1], [], []>} : vector<8x16xbf16>, vector<16x128xbf16>, vector<8x128xf32> -> vector<8x128xf32>
      %302 = vector.extract_strided_slice %296 {offsets = [0, 0], sizes = [1, 128], strides = [1, 1]} : vector<8x128xf32> to vector<1x128xf32>
      %303 = vector.broadcast %302 : vector<1x128xf32> to vector<8x128xf32>
      %304 = arith.addf %301, %303 : vector<8x128xf32>
      %cst_102 = arith.constant 0.000000e+00 : f32
      %305 = vector.broadcast %cst_102 : f32 to vector<8x128xf32>
      %306 = arith.maximumf %304, %305 : vector<8x128xf32>
      %307 = arith.truncf %306 : vector<8x128xf32> to vector<8x128xbf16>
      %c0_103 = arith.constant 0 : index
      %c0_104 = arith.constant 0 : index
      %308 = vector.load %arg8[%c0_103, %c0_104] : memref<128x128xbf16, #tpu.memory_space<vmem>>, vector<128x128xbf16>
      %cst_105 = arith.constant dense<0.000000e+00> : vector<8x128xf32>
      %309 = tpu.matmul %307, %308, %cst_105 {dimension_numbers = #tpu.dot_dimension_numbers<[1], [0], [0], [1], [0, 0, 1, 1], [], []>} : vector<8x128xbf16>, vector<128x128xbf16>, vector<8x128xf32> -> vector<8x128xf32>
      %310 = vector.extract_strided_slice %296 {offsets = [1, 0], sizes = [1, 128], strides = [1, 1]} : vector<8x128xf32> to vector<1x128xf32>
      %311 = vector.broadcast %310 : vector<1x128xf32> to vector<8x128xf32>
      %312 = arith.addf %309, %311 : vector<8x128xf32>
      %cst_106 = arith.constant 0.000000e+00 : f32
      %313 = vector.broadcast %cst_106 : f32 to vector<8x128xf32>
      %314 = arith.maximumf %312, %313 : vector<8x128xf32>
      %315 = arith.truncf %314 : vector<8x128xf32> to vector<8x128xbf16>
      %c0_107 = arith.constant 0 : index
      %c0_108 = arith.constant 0 : index
      %316 = vector.load %arg9[%c0_107, %c0_108] : memref<128x128xbf16, #tpu.memory_space<vmem>>, vector<128x128xbf16>
      %cst_109 = arith.constant dense<0.000000e+00> : vector<8x128xf32>
      %317 = tpu.matmul %315, %316, %cst_109 {dimension_numbers = #tpu.dot_dimension_numbers<[1], [0], [0], [1], [0, 0, 1, 1], [], []>} : vector<8x128xbf16>, vector<128x128xbf16>, vector<8x128xf32> -> vector<8x128xf32>
      %318 = vector.extract_strided_slice %296 {offsets = [2, 0], sizes = [1, 128], strides = [1, 1]} : vector<8x128xf32> to vector<1x128xf32>
      %319 = vector.broadcast %318 : vector<1x128xf32> to vector<8x128xf32>
      %320 = arith.addf %317, %319 : vector<8x128xf32>
      %c0_110 = arith.constant 0 : index
      %c0_111 = arith.constant 0 : index
      %321 = vector.load %arg6[%c0_110, %c0_111] : memref<8x128xf32, #tpu.memory_space<vmem>>, vector<8x128xf32>
      %322 = arith.addf %320, %321 : vector<8x128xf32>
      %c0_112 = arith.constant 0 : index
      %c0_113 = arith.constant 0 : index
      %323 = vector.load %arg21[%c0_112, %c0_113] : memref<8x128xf32, #tpu.memory_space<vmem>>, vector<8x128xf32>
      tpu.vector_store %arg21[%c0_112, %c0_113], %322 {strides = array<i32>} : memref<8x128xf32, #tpu.memory_space<vmem>>, vector<8x128xf32>,
    } else {
    }
    %c0 = arith.constant 0 : index
    %c0_1 = arith.constant 0 : index
    %3 = vector.load %arg21[%c0, %c0_1] : memref<8x128xf32, #tpu.memory_space<vmem>>, vector<8x128xf32>
    %c0_2 = arith.constant 0 : index
    %c0_3 = arith.constant 0 : index
    %c0_4 = arith.constant 0 : index
    %4 = vector.load %arg3[%c0_2, %c0_3, %c0_4] : memref<1x8x128xbf16, #tpu.memory_space<vmem>>, vector<1x8x128xbf16>
    %5 = vector.shape_cast %4 : vector<1x8x128xbf16> to vector<8x128xbf16>
    %c0_5 = arith.constant 0 : index
    %c0_6 = arith.constant 0 : index
    %c0_7 = arith.constant 0 : index
    %6 = vector.load %arg19[%c0_5, %c0_6, %c0_7] : memref<1x16x384xf32, #tpu.memory_space<vmem>>, vector<1x16x384xf32>
    %7 = vector.shape_cast %6 : vector<1x16x384xf32> to vector<16x384xf32>
    %8 = arith.truncf %3 : vector<8x128xf32> to vector<8x128xbf16>
    %c0_8 = arith.constant 0 : index
    %c0_9 = arith.constant 0 : index
    %c0_10 = arith.constant 0 : index
    %9 = vector.load %arg12[%c0_8, %c0_9, %c0_10] : memref<1x128x384xbf16, #tpu.memory_space<vmem>>, vector<1x128x384xbf16>
    %10 = vector.shape_cast %9 : vector<1x128x384xbf16> to vector<128x384xbf16>
    %cst = arith.constant dense<0.000000e+00> : vector<8x384xf32>
    %11 = tpu.matmul %8, %10, %cst {dimension_numbers = #tpu.dot_dimension_numbers<[1], [0], [0], [1], [0, 0, 1, 1], [], []>} : vector<8x128xbf16>, vector<128x384xbf16>, vector<8x384xf32> -> vector<8x384xf32>
    %12 = vector.extract_strided_slice %7 {offsets = [0, 0], sizes = [1, 384], strides = [1, 1]} : vector<16x384xf32> to vector<1x384xf32>
    %13 = vector.broadcast %12 : vector<1x384xf32> to vector<8x384xf32>
    %14 = arith.addf %11, %13 : vector<8x384xf32>
    %15 = arith.truncf %14 : vector<8x384xf32> to vector<8x384xbf16>
    %c0_11 = arith.constant 0 : index
    %c0_12 = arith.constant 0 : index
    %c0_13 = arith.constant 0 : index
    %16 = vector.load %arg4[%c0_11, %c0_12, %c0_13] : memref<1x1x8xf32, #tpu.memory_space<vmem>>, vector<1x1x8xf32>
    %17 = vector.shape_cast %16 : vector<1x1x8xf32> to vector<1x8xf32>
    %18 = tpu.iota {dimensions = array<i32: 0>} : vector<8x8xi32>
    %19 = tpu.iota {dimensions = array<i32: 1>} : vector<8x8xi32>
    %20 = arith.cmpi sgt, %19, %18 : vector<8x8xi32>
    %cst_14 = arith.constant -1.000000e+09 : f32
    %cst_15 = arith.constant 0.000000e+00 : f32
    %21 = vector.broadcast %cst_14 : f32 to vector<8x8xf32>
    %22 = vector.broadcast %cst_15 : f32 to vector<8x8xf32>
    %23 = arith.select %20, %21, %22 : vector<8x8xi1>, vector<8x8xf32>
    %24 = vector.broadcast %17 : vector<1x8xf32> to vector<8x8xf32>
    %25 = arith.addf %23, %24 : vector<8x8xf32>
    %26 = vector.extract_strided_slice %15 {offsets = [0, 0], sizes = [8, 128], strides = [1, 1]} : vector<8x384xbf16> to vector<8x128xbf16>
    %27 = vector.extract_strided_slice %15 {offsets = [0, 128], sizes = [8, 256], strides = [1, 1]} : vector<8x384xbf16> to vector<8x256xbf16>
    %28 = vector.extract_strided_slice %7 {offsets = [1, 0], sizes = [1, 128], strides = [1, 1]} : vector<16x384xf32> to vector<1x128xf32>
    %29 = vector.extract_strided_slice %26 {offsets = [0, 0], sizes = [8, 32], strides = [1, 1]} : vector<8x128xbf16> to vector<8x32xbf16>
    %30 = vector.extract_strided_slice %27 {offsets = [0, 0], sizes = [8, 32], strides = [1, 1]} : vector<8x256xbf16> to vector<8x32xbf16>
    %31 = vector.extract_strided_slice %27 {offsets = [0, 128], sizes = [8, 32], strides = [1, 1]} : vector<8x256xbf16> to vector<8x32xbf16>
    %cst_16 = arith.constant dense<0.000000e+00> : vector<8x8xf32>
    %32 = tpu.matmul %29, %30, %cst_16 {dimension_numbers = #tpu.dot_dimension_numbers<[1], [1], [0], [0], [0, 0, 1, 0], [], []>} : vector<8x32xbf16>, vector<8x32xbf16>, vector<8x8xf32> -> vector<8x8xf32>
    %33 = arith.addf %32, %25 : vector<8x8xf32>
    %cst_17 = arith.constant dense<0xFF800000> : vector<8xf32>
    %34 = vector.multi_reduction <maximumf>, %33, %cst_17 [1] : vector<8x8xf32> to vector<8xf32>
    %35 = vector.shape_cast %34 : vector<8xf32> to vector<8x1xf32>
    %36 = vector.broadcast %35 : vector<8x1xf32> to vector<8x8xf32>
    %37 = arith.subf %33, %36 : vector<8x8xf32>
    %38 = math.exp %37 : vector<8x8xf32>
    %cst_18 = arith.constant dense<0.000000e+00> : vector<8xf32>
    %39 = vector.multi_reduction <add>, %38, %cst_18 [1] : vector<8x8xf32> to vector<8xf32>
    %40 = vector.shape_cast %39 : vector<8xf32> to vector<8x1xf32>
    %41 = tpu.reciprocal %40 {approx = true} : vector<8x1xf32> -> vector<8x1xf32>
    %42 = vector.broadcast %41 : vector<8x1xf32> to vector<8x8xf32>
    %43 = arith.mulf %38, %42 : vector<8x8xf32>
    %44 = arith.truncf %43 : vector<8x8xf32> to vector<8x8xbf16>
    %cst_19 = arith.constant dense<0.000000e+00> : vector<8x32xf32>
    %45 = tpu.matmul %44, %31, %cst_19 {dimension_numbers = #tpu.dot_dimension_numbers<[1], [0], [0], [1], [0, 0, 1, 1], [], []>} : vector<8x8xbf16>, vector<8x32xbf16>, vector<8x32xf32> -> vector<8x32xf32>
    %46 = vector.extract_strided_slice %26 {offsets = [0, 32], sizes = [8, 32], strides = [1, 1]} : vector<8x128xbf16> to vector<8x32xbf16>
    %47 = vector.extract_strided_slice %27 {offsets = [0, 32], sizes = [8, 32], strides = [1, 1]} : vector<8x256xbf16> to vector<8x32xbf16>
    %48 = vector.extract_strided_slice %27 {offsets = [0, 160], sizes = [8, 32], strides = [1, 1]} : vector<8x256xbf16> to vector<8x32xbf16>
    %cst_20 = arith.constant dense<0.000000e+00> : vector<8x8xf32>
    %49 = tpu.matmul %46, %47, %cst_20 {dimension_numbers = #tpu.dot_dimension_numbers<[1], [1], [0], [0], [0, 0, 1, 0], [], []>} : vector<8x32xbf16>, vector<8x32xbf16>, vector<8x8xf32> -> vector<8x8xf32>
    %50 = arith.addf %49, %25 : vector<8x8xf32>
    %cst_21 = arith.constant dense<0xFF800000> : vector<8xf32>
    %51 = vector.multi_reduction <maximumf>, %50, %cst_21 [1] : vector<8x8xf32> to vector<8xf32>
    %52 = vector.shape_cast %51 : vector<8xf32> to vector<8x1xf32>
    %53 = vector.broadcast %52 : vector<8x1xf32> to vector<8x8xf32>
    %54 = arith.subf %50, %53 : vector<8x8xf32>
    %55 = math.exp %54 : vector<8x8xf32>
    %cst_22 = arith.constant dense<0.000000e+00> : vector<8xf32>
    %56 = vector.multi_reduction <add>, %55, %cst_22 [1] : vector<8x8xf32> to vector<8xf32>
    %57 = vector.shape_cast %56 : vector<8xf32> to vector<8x1xf32>
    %58 = tpu.reciprocal %57 {approx = true} : vector<8x1xf32> -> vector<8x1xf32>
    %59 = vector.broadcast %58 : vector<8x1xf32> to vector<8x8xf32>
    %60 = arith.mulf %55, %59 : vector<8x8xf32>
    %61 = arith.truncf %60 : vector<8x8xf32> to vector<8x8xbf16>
    %cst_23 = arith.constant dense<0.000000e+00> : vector<8x32xf32>
    %62 = tpu.matmul %61, %48, %cst_23 {dimension_numbers = #tpu.dot_dimension_numbers<[1], [0], [0], [1], [0, 0, 1, 1], [], []>} : vector<8x8xbf16>, vector<8x32xbf16>, vector<8x32xf32> -> vector<8x32xf32>
    %63 = vector.extract_strided_slice %26 {offsets = [0, 64], sizes = [8, 32], strides = [1, 1]} : vector<8x128xbf16> to vector<8x32xbf16>
    %64 = vector.extract_strided_slice %27 {offsets = [0, 64], sizes = [8, 32], strides = [1, 1]} : vector<8x256xbf16> to vector<8x32xbf16>
    %65 = vector.extract_strided_slice %27 {offsets = [0, 192], sizes = [8, 32], strides = [1, 1]} : vector<8x256xbf16> to vector<8x32xbf16>
    %cst_24 = arith.constant dense<0.000000e+00> : vector<8x8xf32>
    %66 = tpu.matmul %63, %64, %cst_24 {dimension_numbers = #tpu.dot_dimension_numbers<[1], [1], [0], [0], [0, 0, 1, 0], [], []>} : vector<8x32xbf16>, vector<8x32xbf16>, vector<8x8xf32> -> vector<8x8xf32>
    %67 = arith.addf %66, %25 : vector<8x8xf32>
    %cst_25 = arith.constant dense<0xFF800000> : vector<8xf32>
    %68 = vector.multi_reduction <maximumf>, %67, %cst_25 [1] : vector<8x8xf32> to vector<8xf32>
    %69 = vector.shape_cast %68 : vector<8xf32> to vector<8x1xf32>
    %70 = vector.broadcast %69 : vector<8x1xf32> to vector<8x8xf32>
    %71 = arith.subf %67, %70 : vector<8x8xf32>
    %72 = math.exp %71 : vector<8x8xf32>
    %cst_26 = arith.constant dense<0.000000e+00> : vector<8xf32>
    %73 = vector.multi_reduction <add>, %72, %cst_26 [1] : vector<8x8xf32> to vector<8xf32>
    %74 = vector.shape_cast %73 : vector<8xf32> to vector<8x1xf32>
    %75 = tpu.reciprocal %74 {approx = true} : vector<8x1xf32> -> vector<8x1xf32>
    %76 = vector.broadcast %75 : vector<8x1xf32> to vector<8x8xf32>
    %77 = arith.mulf %72, %76 : vector<8x8xf32>
    %78 = arith.truncf %77 : vector<8x8xf32> to vector<8x8xbf16>
    %cst_27 = arith.constant dense<0.000000e+00> : vector<8x32xf32>
    %79 = tpu.matmul %78, %65, %cst_27 {dimension_numbers = #tpu.dot_dimension_numbers<[1], [0], [0], [1], [0, 0, 1, 1], [], []>} : vector<8x8xbf16>, vector<8x32xbf16>, vector<8x32xf32> -> vector<8x32xf32>
    %80 = vector.extract_strided_slice %26 {offsets = [0, 96], sizes = [8, 32], strides = [1, 1]} : vector<8x128xbf16> to vector<8x32xbf16>
    %81 = vector.extract_strided_slice %27 {offsets = [0, 96], sizes = [8, 32], strides = [1, 1]} : vector<8x256xbf16> to vector<8x32xbf16>
    %82 = vector.extract_strided_slice %27 {offsets = [0, 224], sizes = [8, 32], strides = [1, 1]} : vector<8x256xbf16> to vector<8x32xbf16>
    %cst_28 = arith.constant dense<0.000000e+00> : vector<8x8xf32>
    %83 = tpu.matmul %80, %81, %cst_28 {dimension_numbers = #tpu.dot_dimension_numbers<[1], [1], [0], [0], [0, 0, 1, 0], [], []>} : vector<8x32xbf16>, vector<8x32xbf16>, vector<8x8xf32> -> vector<8x8xf32>
    %84 = arith.addf %83, %25 : vector<8x8xf32>
    %cst_29 = arith.constant dense<0xFF800000> : vector<8xf32>
    %85 = vector.multi_reduction <maximumf>, %84, %cst_29 [1] : vector<8x8xf32> to vector<8xf32>
    %86 = vector.shape_cast %85 : vector<8xf32> to vector<8x1xf32>
    %87 = vector.broadcast %86 : vector<8x1xf32> to vector<8x8xf32>
    %88 = arith.subf %84, %87 : vector<8x8xf32>
    %89 = math.exp %88 : vector<8x8xf32>
    %cst_30 = arith.constant dense<0.000000e+00> : vector<8xf32>
    %90 = vector.multi_reduction <add>, %89, %cst_30 [1] : vector<8x8xf32> to vector<8xf32>
    %91 = vector.shape_cast %90 : vector<8xf32> to vector<8x1xf32>
    %92 = tpu.reciprocal %91 {approx = true} : vector<8x1xf32> -> vector<8x1xf32>
    %93 = vector.broadcast %92 : vector<8x1xf32> to vector<8x8xf32>
    %94 = arith.mulf %89, %93 : vector<8x8xf32>
    %95 = arith.truncf %94 : vector<8x8xf32> to vector<8x8xbf16>
    %cst_31 = arith.constant dense<0.000000e+00> : vector<8x32xf32>
    %96 = tpu.matmul %95, %82, %cst_31 {dimension_numbers = #tpu.dot_dimension_numbers<[1], [0], [0], [1], [0, 0, 1, 1], [], []>} : vector<8x8xbf16>, vector<8x32xbf16>, vector<8x32xf32> -> vector<8x32xf32>
    %97 = tpu.concatenate %45, %62, %79, %96 in 1 : vector<8x32xf32>, vector<8x32xf32>, vector<8x32xf32>, vector<8x32xf32> -> vector<8x128xf32>
    %98 = arith.truncf %97 : vector<8x128xf32> to vector<8x128xbf16>
    %c0_32 = arith.constant 0 : index
    %c0_33 = arith.constant 0 : index
    %c0_34 = arith.constant 0 : index
    %99 = vector.load %arg13[%c0_32, %c0_33, %c0_34] : memref<1x128x128xbf16, #tpu.memory_space<vmem>>, vector<1x128x128xbf16>
    %100 = vector.shape_cast %99 : vector<1x128x128xbf16> to vector<128x128xbf16>
    %cst_35 = arith.constant dense<0.000000e+00> : vector<8x128xf32>
    %101 = tpu.matmul %98, %100, %cst_35 {dimension_numbers = #tpu.dot_dimension_numbers<[1], [0], [0], [1], [0, 0, 1, 1], [], []>} : vector<8x128xbf16>, vector<128x128xbf16>, vector<8x128xf32> -> vector<8x128xf32>
    %102 = vector.broadcast %28 : vector<1x128xf32> to vector<8x128xf32>
    %103 = arith.addf %101, %102 : vector<8x128xf32>
    %104 = vector.extract_strided_slice %7 {offsets = [2, 0], sizes = [1, 128], strides = [1, 1]} : vector<16x384xf32> to vector<1x128xf32>
    %105 = vector.extract_strided_slice %7 {offsets = [3, 0], sizes = [1, 128], strides = [1, 1]} : vector<16x384xf32> to vector<1x128xf32>
    %106 = arith.addf %3, %103 : vector<8x128xf32>
    %cst_36 = arith.constant dense<0.000000e+00> : vector<8xf32>
    %107 = vector.multi_reduction <add>, %106, %cst_36 [1] : vector<8x128xf32> to vector<8xf32>
    %108 = vector.shape_cast %107 : vector<8xf32> to vector<8x1xf32>
    %cst_37 = arith.constant 3.125000e-02 : f32
    %109 = vector.broadcast %cst_37 : f32 to vector<8x1xf32>
    %110 = arith.mulf %108, %109 : vector<8x1xf32>
    %111 = arith.mulf %106, %106 : vector<8x128xf32>
    %cst_38 = arith.constant dense<0.000000e+00> : vector<8xf32>
    %112 = vector.multi_reduction <add>, %111, %cst_38 [1] : vector<8x128xf32> to vector<8xf32>
    %113 = vector.shape_cast %112 : vector<8xf32> to vector<8x1xf32>
    %cst_39 = arith.constant 3.125000e-02 : f32
    %114 = vector.broadcast %cst_39 : f32 to vector<8x1xf32>
    %115 = arith.mulf %113, %114 : vector<8x1xf32>
    %116 = arith.mulf %110, %110 : vector<8x1xf32>
    %117 = arith.subf %115, %116 : vector<8x1xf32>
    %118 = vector.broadcast %110 : vector<8x1xf32> to vector<8x128xf32>
    %119 = arith.subf %106, %118 : vector<8x128xf32>
    %cst_40 = arith.constant 9.99999974E-6 : f32
    %120 = vector.broadcast %cst_40 : f32 to vector<8x1xf32>
    %121 = arith.addf %117, %120 : vector<8x1xf32>
    %122 = math.rsqrt %121 : vector<8x1xf32>
    %123 = vector.broadcast %122 : vector<8x1xf32> to vector<8x128xf32>
    %124 = arith.mulf %119, %123 : vector<8x128xf32>
    %125 = vector.broadcast %104 : vector<1x128xf32> to vector<8x128xf32>
    %126 = arith.mulf %124, %125 : vector<8x128xf32>
    %127 = vector.broadcast %105 : vector<1x128xf32> to vector<8x128xf32>
    %128 = arith.addf %126, %127 : vector<8x128xf32>
    %129 = arith.truncf %128 : vector<8x128xf32> to vector<8x128xbf16>
    %c0_41 = arith.constant 0 : index
    %c0_42 = arith.constant 0 : index
    %c0_43 = arith.constant 0 : index
    %130 = vector.load %arg14[%c0_41, %c0_42, %c0_43] : memref<1x128x128xbf16, #tpu.memory_space<vmem>>, vector<1x128x128xbf16>
    %131 = vector.shape_cast %130 : vector<1x128x128xbf16> to vector<128x128xbf16>
    %cst_44 = arith.constant dense<0.000000e+00> : vector<8x128xf32>
    %132 = tpu.matmul %129, %131, %cst_44 {dimension_numbers = #tpu.dot_dimension_numbers<[1], [0], [0], [1], [0, 0, 1, 1], [], []>} : vector<8x128xbf16>, vector<128x128xbf16>, vector<8x128xf32> -> vector<8x128xf32>
    %133 = vector.extract_strided_slice %7 {offsets = [4, 0], sizes = [1, 128], strides = [1, 1]} : vector<16x384xf32> to vector<1x128xf32>
    %134 = vector.broadcast %133 : vector<1x128xf32> to vector<8x128xf32>
    %135 = arith.addf %132, %134 : vector<8x128xf32>
    %136 = arith.truncf %135 : vector<8x128xf32> to vector<8x128xbf16>
    %c0_45 = arith.constant 0 : index
    %c0_46 = arith.constant 0 : index
    %c0_47 = arith.constant 0 : index
    %137 = vector.load %arg15[%c0_45, %c0_46, %c0_47] : memref<1x128x256xbf16, #tpu.memory_space<vmem>>, vector<1x128x256xbf16>
    %138 = vector.shape_cast %137 : vector<1x128x256xbf16> to vector<128x256xbf16>
    %cst_48 = arith.constant dense<0.000000e+00> : vector<8x256xf32>
    %139 = tpu.matmul %5, %138, %cst_48 {dimension_numbers = #tpu.dot_dimension_numbers<[1], [0], [0], [1], [0, 0, 1, 1], [], []>} : vector<8x128xbf16>, vector<128x256xbf16>, vector<8x256xf32> -> vector<8x256xf32>
    %140 = vector.extract_strided_slice %7 {offsets = [5, 0], sizes = [1, 256], strides = [1, 1]} : vector<16x384xf32> to vector<1x256xf32>
    %141 = vector.broadcast %140 : vector<1x256xf32> to vector<8x256xf32>
    %142 = arith.addf %139, %141 : vector<8x256xf32>
    %143 = arith.truncf %142 : vector<8x256xf32> to vector<8x256xbf16>
    %c0_49 = arith.constant 0 : index
    %c0_50 = arith.constant 0 : index
    %c0_51 = arith.constant 0 : index
    %144 = vector.load %arg5[%c0_49, %c0_50, %c0_51] : memref<1x1x8xf32, #tpu.memory_space<vmem>>, vector<1x1x8xf32>
    %145 = vector.shape_cast %144 : vector<1x1x8xf32> to vector<1x8xf32>
    %146 = vector.extract_strided_slice %7 {offsets = [6, 0], sizes = [1, 128], strides = [1, 1]} : vector<16x384xf32> to vector<1x128xf32>
    %147 = vector.extract_strided_slice %136 {offsets = [0, 0], sizes = [8, 32], strides = [1, 1]} : vector<8x128xbf16> to vector<8x32xbf16>
    %148 = vector.extract_strided_slice %143 {offsets = [0, 0], sizes = [8, 32], strides = [1, 1]} : vector<8x256xbf16> to vector<8x32xbf16>
    %149 = vector.extract_strided_slice %143 {offsets = [0, 128], sizes = [8, 32], strides = [1, 1]} : vector<8x256xbf16> to vector<8x32xbf16>
    %cst_52 = arith.constant dense<0.000000e+00> : vector<8x8xf32>
    %150 = tpu.matmul %147, %148, %cst_52 {dimension_numbers = #tpu.dot_dimension_numbers<[1], [1], [0], [0], [0, 0, 1, 0], [], []>} : vector<8x32xbf16>, vector<8x32xbf16>, vector<8x8xf32> -> vector<8x8xf32>
    %151 = vector.broadcast %145 : vector<1x8xf32> to vector<8x8xf32>
    %152 = arith.addf %150, %151 : vector<8x8xf32>
    %cst_53 = arith.constant dense<0xFF800000> : vector<8xf32>
    %153 = vector.multi_reduction <maximumf>, %152, %cst_53 [1] : vector<8x8xf32> to vector<8xf32>
    %154 = vector.shape_cast %153 : vector<8xf32> to vector<8x1xf32>
    %155 = vector.broadcast %154 : vector<8x1xf32> to vector<8x8xf32>
    %156 = arith.subf %152, %155 : vector<8x8xf32>
    %157 = math.exp %156 : vector<8x8xf32>
    %cst_54 = arith.constant dense<0.000000e+00> : vector<8xf32>
    %158 = vector.multi_reduction <add>, %157, %cst_54 [1] : vector<8x8xf32> to vector<8xf32>
    %159 = vector.shape_cast %158 : vector<8xf32> to vector<8x1xf32>
    %160 = tpu.reciprocal %159 {approx = true} : vector<8x1xf32> -> vector<8x1xf32>
    %161 = vector.broadcast %160 : vector<8x1xf32> to vector<8x8xf32>
    %162 = arith.mulf %157, %161 : vector<8x8xf32>
    %163 = arith.truncf %162 : vector<8x8xf32> to vector<8x8xbf16>
    %cst_55 = arith.constant dense<0.000000e+00> : vector<8x32xf32>
    %164 = tpu.matmul %163, %149, %cst_55 {dimension_numbers = #tpu.dot_dimension_numbers<[1], [0], [0], [1], [0, 0, 1, 1], [], []>} : vector<8x8xbf16>, vector<8x32xbf16>, vector<8x32xf32> -> vector<8x32xf32>
    %165 = vector.extract_strided_slice %136 {offsets = [0, 32], sizes = [8, 32], strides = [1, 1]} : vector<8x128xbf16> to vector<8x32xbf16>
    %166 = vector.extract_strided_slice %143 {offsets = [0, 32], sizes = [8, 32], strides = [1, 1]} : vector<8x256xbf16> to vector<8x32xbf16>
    %167 = vector.extract_strided_slice %143 {offsets = [0, 160], sizes = [8, 32], strides = [1, 1]} : vector<8x256xbf16> to vector<8x32xbf16>
    %cst_56 = arith.constant dense<0.000000e+00> : vector<8x8xf32>
    %168 = tpu.matmul %165, %166, %cst_56 {dimension_numbers = #tpu.dot_dimension_numbers<[1], [1], [0], [0], [0, 0, 1, 0], [], []>} : vector<8x32xbf16>, vector<8x32xbf16>, vector<8x8xf32> -> vector<8x8xf32>
    %169 = vector.broadcast %145 : vector<1x8xf32> to vector<8x8xf32>
    %170 = arith.addf %168, %169 : vector<8x8xf32>
    %cst_57 = arith.constant dense<0xFF800000> : vector<8xf32>
    %171 = vector.multi_reduction <maximumf>, %170, %cst_57 [1] : vector<8x8xf32> to vector<8xf32>
    %172 = vector.shape_cast %171 : vector<8xf32> to vector<8x1xf32>
    %173 = vector.broadcast %172 : vector<8x1xf32> to vector<8x8xf32>
    %174 = arith.subf %170, %173 : vector<8x8xf32>
    %175 = math.exp %174 : vector<8x8xf32>
    %cst_58 = arith.constant dense<0.000000e+00> : vector<8xf32>
    %176 = vector.multi_reduction <add>, %175, %cst_58 [1] : vector<8x8xf32> to vector<8xf32>
    %177 = vector.shape_cast %176 : vector<8xf32> to vector<8x1xf32>
    %178 = tpu.reciprocal %177 {approx = true} : vector<8x1xf32> -> vector<8x1xf32>
    %179 = vector.broadcast %178 : vector<8x1xf32> to vector<8x8xf32>
    %180 = arith.mulf %175, %179 : vector<8x8xf32>
    %181 = arith.truncf %180 : vector<8x8xf32> to vector<8x8xbf16>
    %cst_59 = arith.constant dense<0.000000e+00> : vector<8x32xf32>
    %182 = tpu.matmul %181, %167, %cst_59 {dimension_numbers = #tpu.dot_dimension_numbers<[1], [0], [0], [1], [0, 0, 1, 1], [], []>} : vector<8x8xbf16>, vector<8x32xbf16>, vector<8x32xf32> -> vector<8x32xf32>
    %183 = vector.extract_strided_slice %136 {offsets = [0, 64], sizes = [8, 32], strides = [1, 1]} : vector<8x128xbf16> to vector<8x32xbf16>
    %184 = vector.extract_strided_slice %143 {offsets = [0, 64], sizes = [8, 32], strides = [1, 1]} : vector<8x256xbf16> to vector<8x32xbf16>
    %185 = vector.extract_strided_slice %143 {offsets = [0, 192], sizes = [8, 32], strides = [1, 1]} : vector<8x256xbf16> to vector<8x32xbf16>
    %cst_60 = arith.constant dense<0.000000e+00> : vector<8x8xf32>
    %186 = tpu.matmul %183, %184, %cst_60 {dimension_numbers = #tpu.dot_dimension_numbers<[1], [1], [0], [0], [0, 0, 1, 0], [], []>} : vector<8x32xbf16>, vector<8x32xbf16>, vector<8x8xf32> -> vector<8x8xf32>
    %187 = vector.broadcast %145 : vector<1x8xf32> to vector<8x8xf32>
    %188 = arith.addf %186, %187 : vector<8x8xf32>
    %cst_61 = arith.constant dense<0xFF800000> : vector<8xf32>
    %189 = vector.multi_reduction <maximumf>, %188, %cst_61 [1] : vector<8x8xf32> to vector<8xf32>
    %190 = vector.shape_cast %189 : vector<8xf32> to vector<8x1xf32>
    %191 = vector.broadcast %190 : vector<8x1xf32> to vector<8x8xf32>
    %192 = arith.subf %188, %191 : vector<8x8xf32>
    %193 = math.exp %192 : vector<8x8xf32>
    %cst_62 = arith.constant dense<0.000000e+00> : vector<8xf32>
    %194 = vector.multi_reduction <add>, %193, %cst_62 [1] : vector<8x8xf32> to vector<8xf32>
    %195 = vector.shape_cast %194 : vector<8xf32> to vector<8x1xf32>
    %196 = tpu.reciprocal %195 {approx = true} : vector<8x1xf32> -> vector<8x1xf32>
    %197 = vector.broadcast %196 : vector<8x1xf32> to vector<8x8xf32>
    %198 = arith.mulf %193, %197 : vector<8x8xf32>
    %199 = arith.truncf %198 : vector<8x8xf32> to vector<8x8xbf16>
    %cst_63 = arith.constant dense<0.000000e+00> : vector<8x32xf32>
    %200 = tpu.matmul %199, %185, %cst_63 {dimension_numbers = #tpu.dot_dimension_numbers<[1], [0], [0], [1], [0, 0, 1, 1], [], []>} : vector<8x8xbf16>, vector<8x32xbf16>, vector<8x32xf32> -> vector<8x32xf32>
    %201 = vector.extract_strided_slice %136 {offsets = [0, 96], sizes = [8, 32], strides = [1, 1]} : vector<8x128xbf16> to vector<8x32xbf16>
    %202 = vector.extract_strided_slice %143 {offsets = [0, 96], sizes = [8, 32], strides = [1, 1]} : vector<8x256xbf16> to vector<8x32xbf16>
    %203 = vector.extract_strided_slice %143 {offsets = [0, 224], sizes = [8, 32], strides = [1, 1]} : vector<8x256xbf16> to vector<8x32xbf16>
    %cst_64 = arith.constant dense<0.000000e+00> : vector<8x8xf32>
    %204 = tpu.matmul %201, %202, %cst_64 {dimension_numbers = #tpu.dot_dimension_numbers<[1], [1], [0], [0], [0, 0, 1, 0], [], []>} : vector<8x32xbf16>, vector<8x32xbf16>, vector<8x8xf32> -> vector<8x8xf32>
    %205 = vector.broadcast %145 : vector<1x8xf32> to vector<8x8xf32>
    %206 = arith.addf %204, %205 : vector<8x8xf32>
    %cst_65 = arith.constant dense<0xFF800000> : vector<8xf32>
    %207 = vector.multi_reduction <maximumf>, %206, %cst_65 [1] : vector<8x8xf32> to vector<8xf32>
    %208 = vector.shape_cast %207 : vector<8xf32> to vector<8x1xf32>
    %209 = vector.broadcast %208 : vector<8x1xf32> to vector<8x8xf32>
    %210 = arith.subf %206, %209 : vector<8x8xf32>
    %211 = math.exp %210 : vector<8x8xf32>
    %cst_66 = arith.constant dense<0.000000e+00> : vector<8xf32>
    %212 = vector.multi_reduction <add>, %211, %cst_66 [1] : vector<8x8xf32> to vector<8xf32>
    %213 = vector.shape_cast %212 : vector<8xf32> to vector<8x1xf32>
    %214 = tpu.reciprocal %213 {approx = true} : vector<8x1xf32> -> vector<8x1xf32>
    %215 = vector.broadcast %214 : vector<8x1xf32> to vector<8x8xf32>
    %216 = arith.mulf %211, %215 : vector<8x8xf32>
    %217 = arith.truncf %216 : vector<8x8xf32> to vector<8x8xbf16>
    %cst_67 = arith.constant dense<0.000000e+00> : vector<8x32xf32>
    %218 = tpu.matmul %217, %203, %cst_67 {dimension_numbers = #tpu.dot_dimension_numbers<[1], [0], [0], [1], [0, 0, 1, 1], [], []>} : vector<8x8xbf16>, vector<8x32xbf16>, vector<8x32xf32> -> vector<8x32xf32>
    %219 = tpu.concatenate %164, %182, %200, %218 in 1 : vector<8x32xf32>, vector<8x32xf32>, vector<8x32xf32>, vector<8x32xf32> -> vector<8x128xf32>
    %220 = arith.truncf %219 : vector<8x128xf32> to vector<8x128xbf16>
    %c0_68 = arith.constant 0 : index
    %c0_69 = arith.constant 0 : index
    %c0_70 = arith.constant 0 : index
    %221 = vector.load %arg16[%c0_68, %c0_69, %c0_70] : memref<1x128x128xbf16, #tpu.memory_space<vmem>>, vector<1x128x128xbf16>
    %222 = vector.shape_cast %221 : vector<1x128x128xbf16> to vector<128x128xbf16>
    %cst_71 = arith.constant dense<0.000000e+00> : vector<8x128xf32>
    %223 = tpu.matmul %220, %222, %cst_71 {dimension_numbers = #tpu.dot_dimension_numbers<[1], [0], [0], [1], [0, 0, 1, 1], [], []>} : vector<8x128xbf16>, vector<128x128xbf16>, vector<8x128xf32> -> vector<8x128xf32>
    %224 = vector.broadcast %146 : vector<1x128xf32> to vector<8x128xf32>
    %225 = arith.addf %223, %224 : vector<8x128xf32>
    %226 = vector.extract_strided_slice %7 {offsets = [7, 0], sizes = [1, 128], strides = [1, 1]} : vector<16x384xf32> to vector<1x128xf32>
    %227 = vector.extract_strided_slice %7 {offsets = [8, 0], sizes = [1, 128], strides = [1, 1]} : vector<16x384xf32> to vector<1x128xf32>
    %228 = arith.addf %128, %225 : vector<8x128xf32>
    %cst_72 = arith.constant dense<0.000000e+00> : vector<8xf32>
    %229 = vector.multi_reduction <add>, %228, %cst_72 [1] : vector<8x128xf32> to vector<8xf32>
    %230 = vector.shape_cast %229 : vector<8xf32> to vector<8x1xf32>
    %cst_73 = arith.constant 3.125000e-02 : f32
    %231 = vector.broadcast %cst_73 : f32 to vector<8x1xf32>
    %232 = arith.mulf %230, %231 : vector<8x1xf32>
    %233 = arith.mulf %228, %228 : vector<8x128xf32>
    %cst_74 = arith.constant dense<0.000000e+00> : vector<8xf32>
    %234 = vector.multi_reduction <add>, %233, %cst_74 [1] : vector<8x128xf32> to vector<8xf32>
    %235 = vector.shape_cast %234 : vector<8xf32> to vector<8x1xf32>
    %cst_75 = arith.constant 3.125000e-02 : f32
    %236 = vector.broadcast %cst_75 : f32 to vector<8x1xf32>
    %237 = arith.mulf %235, %236 : vector<8x1xf32>
    %238 = arith.mulf %232, %232 : vector<8x1xf32>
    %239 = arith.subf %237, %238 : vector<8x1xf32>
    %240 = vector.broadcast %232 : vector<8x1xf32> to vector<8x128xf32>
    %241 = arith.subf %228, %240 : vector<8x128xf32>
    %cst_76 = arith.constant 9.99999974E-6 : f32
    %242 = vector.broadcast %cst_76 : f32 to vector<8x1xf32>
    %243 = arith.addf %239, %242 : vector<8x1xf32>
    %244 = math.rsqrt %243 : vector<8x1xf32>
    %245 = vector.broadcast %244 : vector<8x1xf32> to vector<8x128xf32>
    %246 = arith.mulf %241, %245 : vector<8x128xf32>
    %247 = vector.broadcast %226 : vector<1x128xf32> to vector<8x128xf32>
    %248 = arith.mulf %246, %247 : vector<8x128xf32>
    %249 = vector.broadcast %227 : vector<1x128xf32> to vector<8x128xf32>
    %250 = arith.addf %248, %249 : vector<8x128xf32>
    %251 = arith.truncf %250 : vector<8x128xf32> to vector<8x128xbf16>
    %c0_77 = arith.constant 0 : index
    %c0_78 = arith.constant 0 : index
    %c0_79 = arith.constant 0 : index
    %252 = vector.load %arg17[%c0_77, %c0_78, %c0_79] : memref<1x128x128xbf16, #tpu.memory_space<vmem>>, vector<1x128x128xbf16>
    %253 = vector.shape_cast %252 : vector<1x128x128xbf16> to vector<128x128xbf16>
    %cst_80 = arith.constant dense<0.000000e+00> : vector<8x128xf32>
    %254 = tpu.matmul %251, %253, %cst_80 {dimension_numbers = #tpu.dot_dimension_numbers<[1], [0], [0], [1], [0, 0, 1, 1], [], []>} : vector<8x128xbf16>, vector<128x128xbf16>, vector<8x128xf32> -> vector<8x128xf32>
    %255 = vector.extract_strided_slice %7 {offsets = [9, 0], sizes = [1, 128], strides = [1, 1]} : vector<16x384xf32> to vector<1x128xf32>
    %256 = vector.broadcast %255 : vector<1x128xf32> to vector<8x128xf32>
    %257 = arith.addf %254, %256 : vector<8x128xf32>
    %cst_81 = arith.constant 0.000000e+00 : f32
    %258 = vector.broadcast %cst_81 : f32 to vector<8x128xf32>
    %259 = arith.maximumf %257, %258 : vector<8x128xf32>
    %260 = arith.truncf %259 : vector<8x128xf32> to vector<8x128xbf16>
    %c0_82 = arith.constant 0 : index
    %c0_83 = arith.constant 0 : index
    %c0_84 = arith.constant 0 : index
    %261 = vector.load %arg18[%c0_82, %c0_83, %c0_84] : memref<1x128x128xbf16, #tpu.memory_space<vmem>>, vector<1x128x128xbf16>
    %262 = vector.shape_cast %261 : vector<1x128x128xbf16> to vector<128x128xbf16>
    %cst_85 = arith.constant dense<0.000000e+00> : vector<8x128xf32>
    %263 = tpu.matmul %260, %262, %cst_85 {dimension_numbers = #tpu.dot_dimension_numbers<[1], [0], [0], [1], [0, 0, 1, 1], [], []>} : vector<8x128xbf16>, vector<128x128xbf16>, vector<8x128xf32> -> vector<8x128xf32>
    %264 = vector.extract_strided_slice %7 {offsets = [10, 0], sizes = [1, 128], strides = [1, 1]} : vector<16x384xf32> to vector<1x128xf32>
    %265 = vector.broadcast %264 : vector<1x128xf32> to vector<8x128xf32>
    %266 = arith.addf %263, %265 : vector<8x128xf32>
    %267 = vector.extract_strided_slice %7 {offsets = [11, 0], sizes = [1, 128], strides = [1, 1]} : vector<16x384xf32> to vector<1x128xf32>
    %268 = vector.extract_strided_slice %7 {offsets = [12, 0], sizes = [1, 128], strides = [1, 1]} : vector<16x384xf32> to vector<1x128xf32>
    %269 = arith.addf %250, %266 : vector<8x128xf32>
    %cst_86 = arith.constant dense<0.000000e+00> : vector<8xf32>
    %270 = vector.multi_reduction <add>, %269, %cst_86 [1] : vector<8x128xf32> to vector<8xf32>
    %271 = vector.shape_cast %270 : vector<8xf32> to vector<8x1xf32>
    %cst_87 = arith.constant 3.125000e-02 : f32
    %272 = vector.broadcast %cst_87 : f32 to vector<8x1xf32>
    %273 = arith.mulf %271, %272 : vector<8x1xf32>
    %274 = arith.mulf %269, %269 : vector<8x128xf32>
    %cst_88 = arith.constant dense<0.000000e+00> : vector<8xf32>
    %275 = vector.multi_reduction <add>, %274, %cst_88 [1] : vector<8x128xf32> to vector<8xf32>
    %276 = vector.shape_cast %275 : vector<8xf32> to vector<8x1xf32>
    %cst_89 = arith.constant 3.125000e-02 : f32
    %277 = vector.broadcast %cst_89 : f32 to vector<8x1xf32>
    %278 = arith.mulf %276, %277 : vector<8x1xf32>
    %279 = arith.mulf %273, %273 : vector<8x1xf32>
    %280 = arith.subf %278, %279 : vector<8x1xf32>
    %281 = vector.broadcast %273 : vector<8x1xf32> to vector<8x128xf32>
    %282 = arith.subf %269, %281 : vector<8x128xf32>
    %cst_90 = arith.constant 9.99999974E-6 : f32
    %283 = vector.broadcast %cst_90 : f32 to vector<8x1xf32>
    %284 = arith.addf %280, %283 : vector<8x1xf32>
    %285 = math.rsqrt %284 : vector<8x1xf32>
    %286 = vector.broadcast %285 : vector<8x1xf32> to vector<8x128xf32>
    %287 = arith.mulf %282, %286 : vector<8x128xf32>
    %288 = vector.broadcast %267 : vector<1x128xf32> to vector<8x128xf32>
    %289 = arith.mulf %287, %288 : vector<8x128xf32>
    %290 = vector.broadcast %268 : vector<1x128xf32> to vector<8x128xf32>
    %291 = arith.addf %289, %290 : vector<8x128xf32>
    %c0_91 = arith.constant 0 : index
    %c0_92 = arith.constant 0 : index
    %292 = vector.load %arg21[%c0_91, %c0_92] : memref<8x128xf32, #tpu.memory_space<vmem>>, vector<8x128xf32>
    tpu.vector_store %arg21[%c0_91, %c0_92], %291 {strides = array<i32>} : memref<8x128xf32, #tpu.memory_space<vmem>>, vector<8x128xf32>,
    %c1_i32 = arith.constant 1 : i32
    %293 = arith.cmpi eq, %arg1, %c1_i32 : i32
    %294 = arith.extui %293 : i1 to i32
    %c0_i32_93 = arith.constant 0 : i32
    %295 = arith.cmpi ne, %294, %c0_i32_93 : i32
    scf.if %295 {
      %c0_94 = arith.constant 0 : index
      %c0_95 = arith.constant 0 : index
      %296 = vector.load %arg10[%c0_94, %c0_95] : memref<8x128xf32, #tpu.memory_space<vmem>>, vector<8x128xf32>
      %297 = arith.truncf %291 : vector<8x128xf32> to vector<8x128xbf16>
      %c0_96 = arith.constant 0 : index
      %c0_97 = arith.constant 0 : index
      %298 = vector.load %arg11[%c0_96, %c0_97] : memref<128x128xbf16, #tpu.memory_space<vmem>>, vector<128x128xbf16>
      %cst_98 = arith.constant dense<0.000000e+00> : vector<8x128xf32>
      %299 = tpu.matmul %297, %298, %cst_98 {dimension_numbers = #tpu.dot_dimension_numbers<[1], [0], [0], [1], [0, 0, 1, 1], [], []>} : vector<8x128xbf16>, vector<128x128xbf16>, vector<8x128xf32> -> vector<8x128xf32>
      %300 = vector.extract_strided_slice %296 {offsets = [3, 0], sizes = [1, 128], strides = [1, 1]} : vector<8x128xf32> to vector<1x128xf32>
      %301 = vector.broadcast %300 : vector<1x128xf32> to vector<8x128xf32>
      %302 = arith.addf %299, %301 : vector<8x128xf32>
      %303 = tpu.iota {dimensions = array<i32: 1>} : vector<8x128xi32>
      %c16_i32 = arith.constant 16 : i32
      %304 = vector.broadcast %c16_i32 : i32 to vector<8x128xi32>
      %305 = arith.cmpi eq, %303, %304 : vector<8x128xi32>
      %306 = arith.negf %302 : vector<8x128xf32>
      %307 = math.exp %306 : vector<8x128xf32>
      %cst_99 = arith.constant 1.000000e+00 : f32
      %308 = vector.broadcast %cst_99 : f32 to vector<8x128xf32>
      %309 = arith.addf %308, %307 : vector<8x128xf32>
      %310 = arith.divf %308, %309 : vector<8x128xf32>
      %311 = arith.select %305, %310, %302 : vector<8x128xi1>, vector<8x128xf32>
      %c0_100 = arith.constant 0 : index
      %c0_101 = arith.constant 0 : index
      %c0_102 = arith.constant 0 : index
      %312 = vector.load %arg20[%c0_100, %c0_101, %c0_102] : memref<1x8x128xf32, #tpu.memory_space<vmem>>, vector<1x8x128xf32>
      %313 = vector.shape_cast %312 : vector<1x8x128xf32> to vector<8x128xf32>
      %314 = vector.shape_cast %311 : vector<8x128xf32> to vector<1x8x128xf32>
      tpu.vector_store %arg20[%c0_100, %c0_101, %c0_102], %314 {strides = array<i32>} : memref<1x8x128xf32, #tpu.memory_space<vmem>>, vector<1x8x128xf32>,
    } else {
    }
    return
  }
  func.func @transform_0(%arg0: i32, %arg1: i32) -> (i32, i32, i32) {
    %c0_i32 = arith.constant 0 : i32
    %c0_i32_0 = arith.constant 0 : i32
    %c0_i32_1 = arith.constant 0 : i32
    return %arg0, %c0_i32, %c0_i32_0 : i32, i32, i32
  }
  func.func @transform_1(%arg0: i32, %arg1: i32) -> (i32, i32, i32) {
    %c0_i32 = arith.constant 0 : i32
    %c0_i32_0 = arith.constant 0 : i32
    %c0_i32_1 = arith.constant 0 : i32
    return %arg0, %c0_i32, %c0_i32_0 : i32, i32, i32
  }
  func.func @transform_2(%arg0: i32, %arg1: i32) -> (i32, i32, i32) {
    %c0_i32 = arith.constant 0 : i32
    %c0_i32_0 = arith.constant 0 : i32
    %c0_i32_1 = arith.constant 0 : i32
    return %arg0, %c0_i32, %c0_i32_0 : i32, i32, i32
  }
  func.func @transform_3(%arg0: i32, %arg1: i32) -> (i32, i32, i32) {
    %c0_i32 = arith.constant 0 : i32
    %c0_i32_0 = arith.constant 0 : i32
    %c0_i32_1 = arith.constant 0 : i32
    return %arg0, %c0_i32, %c0_i32_0 : i32, i32, i32
  }
  func.func @transform_4(%arg0: i32, %arg1: i32) -> (i32, i32) {
    %c0_i32 = arith.constant 0 : i32
    %c0_i32_0 = arith.constant 0 : i32
    %c0_i32_1 = arith.constant 0 : i32
    return %c0_i32, %c0_i32_0 : i32, i32
  }
  func.func @transform_5(%arg0: i32, %arg1: i32) -> (i32, i32) {
    %c0_i32 = arith.constant 0 : i32
    %c0_i32_0 = arith.constant 0 : i32
    %c0_i32_1 = arith.constant 0 : i32
    return %c0_i32, %c0_i32_0 : i32, i32
  }
  func.func @transform_6(%arg0: i32, %arg1: i32) -> (i32, i32) {
    %c0_i32 = arith.constant 0 : i32
    %c0_i32_0 = arith.constant 0 : i32
    %c0_i32_1 = arith.constant 0 : i32
    return %c0_i32, %c0_i32_0 : i32, i32
  }
  func.func @transform_7(%arg0: i32, %arg1: i32) -> (i32, i32) {
    %c0_i32 = arith.constant 0 : i32
    %c0_i32_0 = arith.constant 0 : i32
    %c0_i32_1 = arith.constant 0 : i32
    return %c0_i32, %c0_i32_0 : i32, i32
  }
  func.func @transform_8(%arg0: i32, %arg1: i32) -> (i32, i32) {
    %c0_i32 = arith.constant 0 : i32
    %c0_i32_0 = arith.constant 0 : i32
    %c0_i32_1 = arith.constant 0 : i32
    return %c0_i32, %c0_i32_0 : i32, i32
  }
  func.func @transform_9(%arg0: i32, %arg1: i32) -> (i32, i32) {
    %c0_i32 = arith.constant 0 : i32
    %c0_i32_0 = arith.constant 0 : i32
    %c0_i32_1 = arith.constant 0 : i32
    return %c0_i32, %c0_i32_0 : i32, i32
  }
  func.func @transform_10(%arg0: i32, %arg1: i32) -> (i32, i32, i32) {
    %c0_i32 = arith.constant 0 : i32
    %c0_i32_0 = arith.constant 0 : i32
    %c0_i32_1 = arith.constant 0 : i32
    return %arg1, %c0_i32, %c0_i32_0 : i32, i32, i32
  }
  func.func @transform_11(%arg0: i32, %arg1: i32) -> (i32, i32, i32) {
    %c0_i32 = arith.constant 0 : i32
    %c0_i32_0 = arith.constant 0 : i32
    %c0_i32_1 = arith.constant 0 : i32
    return %arg1, %c0_i32, %c0_i32_0 : i32, i32, i32
  }
  func.func @transform_12(%arg0: i32, %arg1: i32) -> (i32, i32, i32) {
    %c0_i32 = arith.constant 0 : i32
    %c0_i32_0 = arith.constant 0 : i32
    %c0_i32_1 = arith.constant 0 : i32
    return %arg1, %c0_i32, %c0_i32_0 : i32, i32, i32
  }
  func.func @transform_13(%arg0: i32, %arg1: i32) -> (i32, i32, i32) {
    %c0_i32 = arith.constant 0 : i32
    %c0_i32_0 = arith.constant 0 : i32
    %c0_i32_1 = arith.constant 0 : i32
    return %arg1, %c0_i32, %c0_i32_0 : i32, i32, i32
  }
  func.func @transform_14(%arg0: i32, %arg1: i32) -> (i32, i32, i32) {
    %c0_i32 = arith.constant 0 : i32
    %c0_i32_0 = arith.constant 0 : i32
    %c0_i32_1 = arith.constant 0 : i32
    return %arg1, %c0_i32, %c0_i32_0 : i32, i32, i32
  }
  func.func @transform_15(%arg0: i32, %arg1: i32) -> (i32, i32, i32) {
    %c0_i32 = arith.constant 0 : i32
    %c0_i32_0 = arith.constant 0 : i32
    %c0_i32_1 = arith.constant 0 : i32
    return %arg1, %c0_i32, %c0_i32_0 : i32, i32, i32
  }
  func.func @transform_16(%arg0: i32, %arg1: i32) -> (i32, i32, i32) {
    %c0_i32 = arith.constant 0 : i32
    %c0_i32_0 = arith.constant 0 : i32
    %c0_i32_1 = arith.constant 0 : i32
    return %arg1, %c0_i32, %c0_i32_0 : i32, i32, i32
  }
  func.func @transform_17(%arg0: i32, %arg1: i32) -> (i32, i32, i32) {
    %c0_i32 = arith.constant 0 : i32
    %c0_i32_0 = arith.constant 0 : i32
    %c0_i32_1 = arith.constant 0 : i32
    return %arg1, %c0_i32, %c0_i32_0 : i32, i32, i32
  }
  func.func @transform_18(%arg0: i32, %arg1: i32) -> (i32, i32, i32) {
    %c0_i32 = arith.constant 0 : i32
    %c0_i32_0 = arith.constant 0 : i32
    %c0_i32_1 = arith.constant 0 : i32
    return %arg0, %c0_i32, %c0_i32_0 : i32, i32, i32
  }
}

</mosaic_0001>

<llo_original>
// kernel: tpu_custom_call.1
$region0: #{tpu_custom_call.1}
  #allocation0 [shape = 'u32[]', space=smem, size = 0x4, offset = 0x4, fixed_abs, tag = 'smem constant byte address 0x4 - core index']
  #allocation1 [shape = 'u32[144,128]{1,0:T(1,128)}', space=vmem, size = 0x12000, scoped, tag = 'internal scratch']
  #allocation2 [shape = 'f32[8,128]{1,0:T(8,128)}', space=vmem, size = 0x1000, scoped, tag = 'scratch operand']
  %s0 = inlined_call_operand.hbm [shape: f32[2,8,16], index: 0, kind: input, shape index: {}]
  %s1 = inlined_call_operand.hbm [shape: bf16[2,8,128], index: 1, kind: input, shape index: {}]
  %s2 = inlined_call_operand.vmem [shape: f32[2,1,8], index: 2, kind: input, shape index: {}]
  %s3 = inlined_call_operand.hbm [shape: f32[2,1,8], index: 3, kind: input, shape index: {}]
  %s4 = inlined_call_operand.vmem [shape: f32[8,128], index: 4, kind: input, shape index: {}]
  %s5 = inlined_call_operand.vmem [shape: bf16[16,128], index: 5, kind: input, shape index: {}]
  %s6 = inlined_call_operand.hbm [shape: bf16[128,128], index: 6, kind: input, shape index: {}]
  %s7 = inlined_call_operand.hbm [shape: bf16[128,128], index: 7, kind: input, shape index: {}]
  %s8 = inlined_call_operand.vmem [shape: f32[8,128], index: 8, kind: input, shape index: {}]
  %s9 = inlined_call_operand.hbm [shape: bf16[128,128], index: 9, kind: input, shape index: {}]
  %s10 = inlined_call_operand.hbm [shape: bf16[2,128,384], index: 10, kind: input, shape index: {}]
  %s11 = inlined_call_operand.hbm [shape: bf16[2,128,128], index: 11, kind: input, shape index: {}]
  %s12 = inlined_call_operand.hbm [shape: bf16[2,128,128], index: 12, kind: input, shape index: {}]
  %s13 = inlined_call_operand.hbm [shape: bf16[2,128,256], index: 13, kind: input, shape index: {}]
  %s14 = inlined_call_operand.hbm [shape: bf16[2,128,128], index: 14, kind: input, shape index: {}]
  %s15 = inlined_call_operand.hbm [shape: bf16[2,128,128], index: 15, kind: input, shape index: {}]
  %s16 = inlined_call_operand.hbm [shape: bf16[2,128,128], index: 16, kind: input, shape index: {}]
  %s17 = inlined_call_operand.hbm [shape: f32[2,16,384], index: 17, kind: input, shape index: {}]
  %s18 = inlined_call_operand.hbm [shape: f32[2,8,128], index: 18, kind: output, shape index: {}]
  %s19 = sld [smem:[#allocation0]]
  $region169: #{tpu_custom_call.1} parent=0
    _
  %s21 = ssub.s32 1, %s19
  %s22 = scalar_select 0, %s21, %s19
  $region1: #{tpu_custom_call.1} parent=0
    #allocation3 [shape = 'u8[8192]{0}', space=vmem, size = 0x2000, scoped, tag = 'input window, operand 0']
    #allocation4 [shape = 's32[2]{0}', space=sflag, size = 0x8, scoped, tag = 'scoped memory for tpu_custom_call.1']
    #allocation5 [shape = 's32[2]{0}', space=sflag, size = 0x8, scoped, tag = 'scoped memory for tpu_custom_call.1']
    #allocation6 [shape = 'u8[4096]{0}', space=vmem, size = 0x1000, scoped, tag = 'input window, operand 1']
    #allocation7 [shape = 's32[2]{0}', space=sflag, size = 0x8, scoped, tag = 'scoped memory for tpu_custom_call.1']
    #allocation8 [shape = 'u8[1024]{0}', space=vmem, size = 0x400, scoped, tag = 'input window, operand 3']
    #allocation9 [shape = 'u8[32768]{0}', space=vmem, size = 0x8000, scoped, tag = 'input window, operand 6, single buffered']
    #allocation10 [shape = 's32[1]{0}', space=sflag, size = 0x4, scoped, tag = 'scoped memory for tpu_custom_call.1']
    #allocation11 [shape = 'u8[32768]{0}', space=vmem, size = 0x8000, scoped, tag = 'input window, operand 7, single buffered']
    #allocation12 [shape = 'u8[32768]{0}', space=vmem, size = 0x8000, scoped, tag = 'input window, operand 9, single buffered']
    #allocation13 [shape = 's32[1]{0}', space=sflag, size = 0x4, scoped, tag = 'scoped memory for tpu_custom_call.1']
    #allocation14 [shape = 'u8[196608]{0}', space=vmem, size = 0x30000, scoped, tag = 'input window, operand 10']
    #allocation15 [shape = 'u8[65536]{0}', space=vmem, size = 0x10000, scoped, tag = 'input window, operand 11']
    #allocation16 [shape = 'u8[65536]{0}', space=vmem, size = 0x10000, scoped, tag = 'input window, operand 12']
    #allocation17 [shape = 'u8[131072]{0}', space=vmem, size = 0x20000, scoped, tag = 'input window, operand 13']
    #allocation18 [shape = 'u8[65536]{0}', space=vmem, size = 0x10000, scoped, tag = 'input window, operand 14']
    #allocation19 [shape = 'u8[65536]{0}', space=vmem, size = 0x10000, scoped, tag = 'input window, operand 15']
    #allocation20 [shape = 'u8[65536]{0}', space=vmem, size = 0x10000, scoped, tag = 'input window, operand 16']
    #allocation21 [shape = 'u8[49152]{0}', space=vmem, size = 0xc000, scoped, tag = 'input window, operand 17']
    #allocation22 [shape = 'u8[8192]{0}', space=vmem, size = 0x2000, scoped, tag = 'output window, operand 0']
    %23 = vsyncpa [#allocation4], 0
    %s24 = scalar_lea.sflag [#allocation4], 1
    %25 = vsyncpa %s24, 0
    %26 = vsyncpa [#allocation7], 0
    %s27 = scalar_lea.sflag [#allocation7], 1
    %28 = vsyncpa %s27, 0
    %29 = vsyncpa [#allocation10], 0
    %30 = vsyncpa [#allocation13], 0
    %31 = vsyncpa [#allocation5], 0
    %s32 = scalar_lea.sflag [#allocation5], 1
    %33 = vsyncpa %s32, 0
    loop: start=0, step=1, limit=6
    $region2: #{tpu_custom_call.1} parent=1 // loop_pre_header
      _
    $region3: #{tpu_custom_call.1} parent=1 // loop_header
      %s35 = sphi 0, %s39
      %p36 = scmp.ge.s32.totalorder %s35, 6
      %s42 = sphi 0, %s54
      %s43 = sphi 0, %s50
      %s44 = sphi 0, %s42
      %s45 = sphi 0, %s43
      %s46 = sphi 0, %s44
      %s47 = sphi 0, %s45
      %s57 = sphi 0, %s59
      %s60 = sphi 0, %s57
      %s61 = sphi 0, %s60
      %s77 = sphi 0, %s61
      %s83 = sphi 0, %s85
      %s86 = sphi 0, %s83
      %s87 = sphi 0, %s86
      %s103 = sphi 0, %s87
      %s109 = sphi 0, %s111
      %s112 = sphi 0, %s109
      %s113 = sphi 0, %s112
      %s129 = sphi 0, %s113
      %s135 = sphi 0, %s137
      %s138 = sphi 0, %s135
      %s139 = sphi 0, %s138
      %s155 = sphi 0, %s139
      %s159 = sphi 0, %s159
      %s161 = sphi 0, %s159
      %s162 = sphi 0, %s161
      %s176 = sphi 0, %s162
      %s180 = sphi 0, %s180
      %s182 = sphi 0, %s180
      %s183 = sphi 0, %s182
      %s197 = sphi 0, %s183
      %s201 = sphi 0, %s201
      %s203 = sphi 0, %s201
      %s204 = sphi 0, %s203
      %s218 = sphi 0, %s204
      %s222 = sphi 0, %s222
      %s224 = sphi 0, %s222
      %s225 = sphi 0, %s224
      %s239 = sphi 0, %s225
      %s243 = sphi 0, %s243
      %s245 = sphi 0, %s243
      %s246 = sphi 0, %s245
      %s260 = sphi 0, %s246
      %s264 = sphi 0, %s264
      %s266 = sphi 0, %s264
      %s267 = sphi 0, %s266
      %s281 = sphi 0, %s267
      %s287 = sphi 0, %s289
      %s290 = sphi 0, %s287
      %s291 = sphi 0, %s290
      %s307 = sphi 0, %s291
      %s313 = sphi 0, %s315
      %s316 = sphi 0, %s313
      %s317 = sphi 0, %s316
      %s333 = sphi 0, %s317
      %s339 = sphi 0, %s341
      %s342 = sphi 0, %s339
      %s343 = sphi 0, %s342
      %s359 = sphi 0, %s343
      %s365 = sphi 0, %s367
      %s368 = sphi 0, %s365
      %s369 = sphi 0, %s368
      %s385 = sphi 0, %s369
      %s391 = sphi 0, %s393
      %s394 = sphi 0, %s391
      %s395 = sphi 0, %s394
      %s411 = sphi 0, %s395
      %s417 = sphi 0, %s419
      %s420 = sphi 0, %s417
      %s421 = sphi 0, %s420
      %s437 = sphi 0, %s421
      %s443 = sphi 0, %s445
      %s446 = sphi 0, %s443
      %s447 = sphi 0, %s446
      %s463 = sphi 0, %s447
      %s469 = sphi 0, %s471
      %s472 = sphi 0, %s469
      %s473 = sphi 0, %s472
      %s489 = sphi 0, %s473
      %s495 = sphi 0, %s497
      %s498 = sphi 0, %s495
      %s499 = sphi 0, %s498
      %s515 = sphi 0, %s499
    $region4: #{tpu_custom_call.1} parent=1 // loop_header_branch
      %38 = sbr.rel (%p36) target = $region8
    $region5: #{tpu_custom_call.1} parent=1 // loop_body
      %s40 = ssub.s32 %s35, 1
      %s41 = ssub.s32 %s35, 2
      %s48 = sadd.s32 1, %s43
      %p49 = scmp.ge.s32.totalorder %s48, 2
      %s50 = scalar_select %p49, 0, %s48
      %s51 = sadd.s32 1, %s42
      %s52 = scalar_select %p49, %s51, %s42
      %p53 = scmp.ge.s32.totalorder %s52, 2
      %s54 = scalar_select %p53, 0, %s52
      %s55 = ssub.s32 %s42, %s54
      %p56 = scmp.eq.s32.totalorder %s55, 0
      %s58 = sadd.s32 %s57, 1
      %s59 = scalar_select %p56, %s57, %s58
      %p62 = pneg %p56
      %p63 = scmp.eq.s32.totalorder %s35, 3
      %p64 = por %p62, %p63
      %p65 = scmp.ne.s32.totalorder %s57, %s60
      %p66 = scmp.eq.s32.totalorder %s35, 0
      %p67 = por %p65, %p66
      %p68 = scmp.ne.s32.totalorder %s57, %s60
      %p69 = scmp.eq.s32.totalorder %s40, 3
      %p70 = por %p68, %p69
      %p71 = scmp.ne.s32.totalorder %s60, %s61
      %p72 = scmp.eq.s32.totalorder %s40, 0
      %p73 = por %p71, %p72
      %p74 = scmp.ne.s32.totalorder %s60, %s61
      %p75 = scmp.eq.s32.totalorder %s41, 3
      %p76 = por %p74, %p75
      %p78 = scmp.ne.s32.totalorder %s61, %s77
      %p79 = scmp.eq.s32.totalorder %s41, 0
      %p80 = por %p78, %p79
      %s81 = ssub.s32 %s42, %s54
      %p82 = scmp.eq.s32.totalorder %s81, 0
      %s84 = sadd.s32 %s83, 1
      %s85 = scalar_select %p82, %s83, %s84
      %p88 = pneg %p82
      %p89 = scmp.eq.s32.totalorder %s35, 3
      %p90 = por %p88, %p89
      %p91 = scmp.ne.s32.totalorder %s83, %s86
      %p92 = scmp.eq.s32.totalorder %s35, 0
      %p93 = por %p91, %p92
      %p94 = scmp.ne.s32.totalorder %s83, %s86
      %p95 = scmp.eq.s32.totalorder %s40, 3
      %p96 = por %p94, %p95
      %p97 = scmp.ne.s32.totalorder %s86, %s87
      %p98 = scmp.eq.s32.totalorder %s40, 0
      %p99 = por %p97, %p98
      %p100 = scmp.ne.s32.totalorder %s86, %s87
      %p101 = scmp.eq.s32.totalorder %s41, 3
      %p102 = por %p100, %p101
      %p104 = scmp.ne.s32.totalorder %s87, %s103
      %p105 = scmp.eq.s32.totalorder %s41, 0
      %p106 = por %p104, %p105
      %s107 = ssub.s32 %s42, %s54
      %p108 = scmp.eq.s32.totalorder %s107, 0
      %s110 = sadd.s32 %s109, 1
      %s111 = scalar_select %p108, %s109, %s110
      %p114 = pneg %p108
      %p115 = scmp.eq.s32.totalorder %s35, 3
      %p116 = por %p114, %p115
      %p117 = scmp.ne.s32.totalorder %s109, %s112
      %p118 = scmp.eq.s32.totalorder %s35, 0
      %p119 = por %p117, %p118
      %p120 = scmp.ne.s32.totalorder %s109, %s112
      %p121 = scmp.eq.s32.totalorder %s40, 3
      %p122 = por %p120, %p121
      %p123 = scmp.ne.s32.totalorder %s112, %s113
      %p124 = scmp.eq.s32.totalorder %s40, 0
      %p125 = por %p123, %p124
      %p126 = scmp.ne.s32.totalorder %s112, %s113
      %p127 = scmp.eq.s32.totalorder %s41, 3
      %p128 = por %p126, %p127
      %p130 = scmp.ne.s32.totalorder %s113, %s129
      %p131 = scmp.eq.s32.totalorder %s41, 0
      %p132 = por %p130, %p131
      %s133 = ssub.s32 %s42, %s54
      %p134 = scmp.eq.s32.totalorder %s133, 0
      %s136 = sadd.s32 %s135, 1
      %s137 = scalar_select %p134, %s135, %s136
      %p140 = pneg %p134
      %p141 = scmp.eq.s32.totalorder %s35, 3
      %p142 = por %p140, %p141
      %p143 = scmp.ne.s32.totalorder %s135, %s138
      %p144 = scmp.eq.s32.totalorder %s35, 0
      %p145 = por %p143, %p144
      %p146 = scmp.ne.s32.totalorder %s135, %s138
      %p147 = scmp.eq.s32.totalorder %s40, 3
      %p148 = por %p146, %p147
      %p149 = scmp.ne.s32.totalorder %s138, %s139
      %p150 = scmp.eq.s32.totalorder %s40, 0
      %p151 = por %p149, %p150
      %p152 = scmp.ne.s32.totalorder %s138, %s139
      %p153 = scmp.eq.s32.totalorder %s41, 3
      %p154 = por %p152, %p153
      %p156 = scmp.ne.s32.totalorder %s139, %s155
      %p157 = scmp.eq.s32.totalorder %s41, 0
      %p158 = por %p156, %p157
      %s160 = sadd.s32 %s159, 1
      %p163 = scmp.eq.s32.totalorder %s35, 3
      %p164 = scmp.ne.s32.totalorder %s159, %s161
      %p165 = scmp.eq.s32.totalorder %s35, 0
      %p166 = por %p164, %p165
      %p167 = scmp.ne.s32.totalorder %s159, %s161
      %p168 = scmp.eq.s32.totalorder %s40, 3
      %p169 = por %p167, %p168
      %p170 = scmp.ne.s32.totalorder %s161, %s162
      %p171 = scmp.eq.s32.totalorder %s40, 0
      %p172 = por %p170, %p171
      %p173 = scmp.ne.s32.totalorder %s161, %s162
      %p174 = scmp.eq.s32.totalorder %s41, 3
      %p175 = por %p173, %p174
      %p177 = scmp.ne.s32.totalorder %s162, %s176
      %p178 = scmp.eq.s32.totalorder %s41, 0
      %p179 = por %p177, %p178
      %s181 = sadd.s32 %s180, 1
      %p184 = scmp.eq.s32.totalorder %s35, 3
      %p185 = scmp.ne.s32.totalorder %s180, %s182
      %p186 = scmp.eq.s32.totalorder %s35, 0
      %p187 = por %p185, %p186
      %p188 = scmp.ne.s32.totalorder %s180, %s182
      %p189 = scmp.eq.s32.totalorder %s40, 3
      %p190 = por %p188, %p189
      %p191 = scmp.ne.s32.totalorder %s182, %s183
      %p192 = scmp.eq.s32.totalorder %s40, 0
      %p193 = por %p191, %p192
      %p194 = scmp.ne.s32.totalorder %s182, %s183
      %p195 = scmp.eq.s32.totalorder %s41, 3
      %p196 = por %p194, %p195
      %p198 = scmp.ne.s32.totalorder %s183, %s197
      %p199 = scmp.eq.s32.totalorder %s41, 0
      %p200 = por %p198, %p199
      %s202 = sadd.s32 %s201, 1
      %p205 = scmp.eq.s32.totalorder %s35, 3
      %p206 = scmp.ne.s32.totalorder %s201, %s203
      %p207 = scmp.eq.s32.totalorder %s35, 0
      %p208 = por %p206, %p207
      %p209 = scmp.ne.s32.totalorder %s201, %s203
      %p210 = scmp.eq.s32.totalorder %s40, 3
      %p211 = por %p209, %p210
      %p212 = scmp.ne.s32.totalorder %s203, %s204
      %p213 = scmp.eq.s32.totalorder %s40, 0
      %p214 = por %p212, %p213
      %p215 = scmp.ne.s32.totalorder %s203, %s204
      %p216 = scmp.eq.s32.totalorder %s41, 3
      %p217 = por %p215, %p216
      %p219 = scmp.ne.s32.totalorder %s204, %s218
      %p220 = scmp.eq.s32.totalorder %s41, 0
      %p221 = por %p219, %p220
      %s223 = sadd.s32 %s222, 1
      %p226 = scmp.eq.s32.totalorder %s35, 3
      %p227 = scmp.ne.s32.totalorder %s222, %s224
      %p228 = scmp.eq.s32.totalorder %s35, 0
      %p229 = por %p227, %p228
      %p230 = scmp.ne.s32.totalorder %s222, %s224
      %p231 = scmp.eq.s32.totalorder %s40, 3
      %p232 = por %p230, %p231
      %p233 = scmp.ne.s32.totalorder %s224, %s225
      %p234 = scmp.eq.s32.totalorder %s40, 0
      %p235 = por %p233, %p234
      %p236 = scmp.ne.s32.totalorder %s224, %s225
      %p237 = scmp.eq.s32.totalorder %s41, 3
      %p238 = por %p236, %p237
      %p240 = scmp.ne.s32.totalorder %s225, %s239
      %p241 = scmp.eq.s32.totalorder %s41, 0
      %p242 = por %p240, %p241
      %s244 = sadd.s32 %s243, 1
      %p247 = scmp.eq.s32.totalorder %s35, 3
      %p248 = scmp.ne.s32.totalorder %s243, %s245
      %p249 = scmp.eq.s32.totalorder %s35, 0
      %p250 = por %p248, %p249
      %p251 = scmp.ne.s32.totalorder %s243, %s245
      %p252 = scmp.eq.s32.totalorder %s40, 3
      %p253 = por %p251, %p252
      %p254 = scmp.ne.s32.totalorder %s245, %s246
      %p255 = scmp.eq.s32.totalorder %s40, 0
      %p256 = por %p254, %p255
      %p257 = scmp.ne.s32.totalorder %s245, %s246
      %p258 = scmp.eq.s32.totalorder %s41, 3
      %p259 = por %p257, %p258
      %p261 = scmp.ne.s32.totalorder %s246, %s260
      %p262 = scmp.eq.s32.totalorder %s41, 0
      %p263 = por %p261, %p262
      %s265 = sadd.s32 %s264, 1
      %p268 = scmp.eq.s32.totalorder %s35, 3
      %p269 = scmp.ne.s32.totalorder %s264, %s266
      %p270 = scmp.eq.s32.totalorder %s35, 0
      %p271 = por %p269, %p270
      %p272 = scmp.ne.s32.totalorder %s264, %s266
      %p273 = scmp.eq.s32.totalorder %s40, 3
      %p274 = por %p272, %p273
      %p275 = scmp.ne.s32.totalorder %s266, %s267
      %p276 = scmp.eq.s32.totalorder %s40, 0
      %p277 = por %p275, %p276
      %p278 = scmp.ne.s32.totalorder %s266, %s267
      %p279 = scmp.eq.s32.totalorder %s41, 3
      %p280 = por %p278, %p279
      %p282 = scmp.ne.s32.totalorder %s267, %s281
      %p283 = scmp.eq.s32.totalorder %s41, 0
      %p284 = por %p282, %p283
      %s285 = ssub.s32 %s43, %s50
      %p286 = scmp.eq.s32.totalorder %s285, 0
      %s288 = sadd.s32 %s287, 1
      %s289 = scalar_select %p286, %s287, %s288
      %p292 = pneg %p286
      %p293 = scmp.eq.s32.totalorder %s35, 3
      %p294 = por %p292, %p293
      %p295 = scmp.ne.s32.totalorder %s287, %s290
      %p296 = scmp.eq.s32.totalorder %s35, 0
      %p297 = por %p295, %p296
      %p298 = scmp.ne.s32.totalorder %s287, %s290
      %p299 = scmp.eq.s32.totalorder %s40, 3
      %p300 = por %p298, %p299
      %p301 = scmp.ne.s32.totalorder %s290, %s291
      %p302 = scmp.eq.s32.totalorder %s40, 0
      %p303 = por %p301, %p302
      %p304 = scmp.ne.s32.totalorder %s290, %s291
      %p305 = scmp.eq.s32.totalorder %s41, 3
      %p306 = por %p304, %p305
      %p308 = scmp.ne.s32.totalorder %s291, %s307
      %p309 = scmp.eq.s32.totalorder %s41, 0
      %p310 = por %p308, %p309
      %s311 = ssub.s32 %s43, %s50
      %p312 = scmp.eq.s32.totalorder %s311, 0
      %s314 = sadd.s32 %s313, 1
      %s315 = scalar_select %p312, %s313, %s314
      %p318 = pneg %p312
      %p319 = scmp.eq.s32.totalorder %s35, 3
      %p320 = por %p318, %p319
      %p321 = scmp.ne.s32.totalorder %s313, %s316
      %p322 = scmp.eq.s32.totalorder %s35, 0
      %p323 = por %p321, %p322
      %p324 = scmp.ne.s32.totalorder %s313, %s316
      %p325 = scmp.eq.s32.totalorder %s40, 3
      %p326 = por %p324, %p325
      %p327 = scmp.ne.s32.totalorder %s316, %s317
      %p328 = scmp.eq.s32.totalorder %s40, 0
      %p329 = por %p327, %p328
      %p330 = scmp.ne.s32.totalorder %s316, %s317
      %p331 = scmp.eq.s32.totalorder %s41, 3
      %p332 = por %p330, %p331
      %p334 = scmp.ne.s32.totalorder %s317, %s333
      %p335 = scmp.eq.s32.totalorder %s41, 0
      %p336 = por %p334, %p335
      %s337 = ssub.s32 %s43, %s50
      %p338 = scmp.eq.s32.totalorder %s337, 0
      %s340 = sadd.s32 %s339, 1
      %s341 = scalar_select %p338, %s339, %s340
      %p344 = pneg %p338
      %p345 = scmp.eq.s32.totalorder %s35, 3
      %p346 = por %p344, %p345
      %p347 = scmp.ne.s32.totalorder %s339, %s342
      %p348 = scmp.eq.s32.totalorder %s35, 0
      %p349 = por %p347, %p348
      %p350 = scmp.ne.s32.totalorder %s339, %s342
      %p351 = scmp.eq.s32.totalorder %s40, 3
      %p352 = por %p350, %p351
      %p353 = scmp.ne.s32.totalorder %s342, %s343
      %p354 = scmp.eq.s32.totalorder %s40, 0
      %p355 = por %p353, %p354
      %p356 = scmp.ne.s32.totalorder %s342, %s343
      %p357 = scmp.eq.s32.totalorder %s41, 3
      %p358 = por %p356, %p357
      %p360 = scmp.ne.s32.totalorder %s343, %s359
      %p361 = scmp.eq.s32.totalorder %s41, 0
      %p362 = por %p360, %p361
      %s363 = ssub.s32 %s43, %s50
      %p364 = scmp.eq.s32.totalorder %s363, 0
      %s366 = sadd.s32 %s365, 1
      %s367 = scalar_select %p364, %s365, %s366
      %p370 = pneg %p364
      %p371 = scmp.eq.s32.totalorder %s35, 3
      %p372 = por %p370, %p371
      %p373 = scmp.ne.s32.totalorder %s365, %s368
      %p374 = scmp.eq.s32.totalorder %s35, 0
      %p375 = por %p373, %p374
      %p376 = scmp.ne.s32.totalorder %s365, %s368
      %p377 = scmp.eq.s32.totalorder %s40, 3
      %p378 = por %p376, %p377
      %p379 = scmp.ne.s32.totalorder %s368, %s369
      %p380 = scmp.eq.s32.totalorder %s40, 0
      %p381 = por %p379, %p380
      %p382 = scmp.ne.s32.totalorder %s368, %s369
      %p383 = scmp.eq.s32.totalorder %s41, 3
      %p384 = por %p382, %p383
      %p386 = scmp.ne.s32.totalorder %s369, %s385
      %p387 = scmp.eq.s32.totalorder %s41, 0
      %p388 = por %p386, %p387
      %s389 = ssub.s32 %s43, %s50
      %p390 = scmp.eq.s32.totalorder %s389, 0
      %s392 = sadd.s32 %s391, 1
      %s393 = scalar_select %p390, %s391, %s392
      %p396 = pneg %p390
      %p397 = scmp.eq.s32.totalorder %s35, 3
      %p398 = por %p396, %p397
      %p399 = scmp.ne.s32.totalorder %s391, %s394
      %p400 = scmp.eq.s32.totalorder %s35, 0
      %p401 = por %p399, %p400
      %p402 = scmp.ne.s32.totalorder %s391, %s394
      %p403 = scmp.eq.s32.totalorder %s40, 3
      %p404 = por %p402, %p403
      %p405 = scmp.ne.s32.totalorder %s394, %s395
      %p406 = scmp.eq.s32.totalorder %s40, 0
      %p407 = por %p405, %p406
      %p408 = scmp.ne.s32.totalorder %s394, %s395
      %p409 = scmp.eq.s32.totalorder %s41, 3
      %p410 = por %p408, %p409
      %p412 = scmp.ne.s32.totalorder %s395, %s411
      %p413 = scmp.eq.s32.totalorder %s41, 0
      %p414 = por %p412, %p413
      %s415 = ssub.s32 %s43, %s50
      %p416 = scmp.eq.s32.totalorder %s415, 0
      %s418 = sadd.s32 %s417, 1
      %s419 = scalar_select %p416, %s417, %s418
      %p422 = pneg %p416
      %p423 = scmp.eq.s32.totalorder %s35, 3
      %p424 = por %p422, %p423
      %p425 = scmp.ne.s32.totalorder %s417, %s420
      %p426 = scmp.eq.s32.totalorder %s35, 0
      %p427 = por %p425, %p426
      %p428 = scmp.ne.s32.totalorder %s417, %s420
      %p429 = scmp.eq.s32.totalorder %s40, 3
      %p430 = por %p428, %p429
      %p431 = scmp.ne.s32.totalorder %s420, %s421
      %p432 = scmp.eq.s32.totalorder %s40, 0
      %p433 = por %p431, %p432
      %p434 = scmp.ne.s32.totalorder %s420, %s421
      %p435 = scmp.eq.s32.totalorder %s41, 3
      %p436 = por %p434, %p435
      %p438 = scmp.ne.s32.totalorder %s421, %s437
      %p439 = scmp.eq.s32.totalorder %s41, 0
      %p440 = por %p438, %p439
      %s441 = ssub.s32 %s43, %s50
      %p442 = scmp.eq.s32.totalorder %s441, 0
      %s444 = sadd.s32 %s443, 1
      %s445 = scalar_select %p442, %s443, %s444
      %p448 = pneg %p442
      %p449 = scmp.eq.s32.totalorder %s35, 3
      %p450 = por %p448, %p449
      %p451 = scmp.ne.s32.totalorder %s443, %s446
      %p452 = scmp.eq.s32.totalorder %s35, 0
      %p453 = por %p451, %p452
      %p454 = scmp.ne.s32.totalorder %s443, %s446
      %p455 = scmp.eq.s32.totalorder %s40, 3
      %p456 = por %p454, %p455
      %p457 = scmp.ne.s32.totalorder %s446, %s447
      %p458 = scmp.eq.s32.totalorder %s40, 0
      %p459 = por %p457, %p458
      %p460 = scmp.ne.s32.totalorder %s446, %s447
      %p461 = scmp.eq.s32.totalorder %s41, 3
      %p462 = por %p460, %p461
      %p464 = scmp.ne.s32.totalorder %s447, %s463
      %p465 = scmp.eq.s32.totalorder %s41, 0
      %p466 = por %p464, %p465
      %s467 = ssub.s32 %s43, %s50
      %p468 = scmp.eq.s32.totalorder %s467, 0
      %s470 = sadd.s32 %s469, 1
      %s471 = scalar_select %p468, %s469, %s470
      %p474 = pneg %p468
      %p475 = scmp.eq.s32.totalorder %s35, 3
      %p476 = por %p474, %p475
      %p477 = scmp.ne.s32.totalorder %s469, %s472
      %p478 = scmp.eq.s32.totalorder %s35, 0
      %p479 = por %p477, %p478
      %p480 = scmp.ne.s32.totalorder %s469, %s472
      %p481 = scmp.eq.s32.totalorder %s40, 3
      %p482 = por %p480, %p481
      %p483 = scmp.ne.s32.totalorder %s472, %s473
      %p484 = scmp.eq.s32.totalorder %s40, 0
      %p485 = por %p483, %p484
      %p486 = scmp.ne.s32.totalorder %s472, %s473
      %p487 = scmp.eq.s32.totalorder %s41, 3
      %p488 = por %p486, %p487
      %p490 = scmp.ne.s32.totalorder %s473, %s489
      %p491 = scmp.eq.s32.totalorder %s41, 0
      %p492 = por %p490, %p491
      %s493 = ssub.s32 %s42, %s54
      %p494 = scmp.eq.s32.totalorder %s493, 0
      %s496 = sadd.s32 %s495, 1
      %s497 = scalar_select %p494, %s495, %s496
      %p500 = pneg %p494
      %p501 = scmp.eq.s32.totalorder %s35, 3
      %p502 = por %p500, %p501
      %p503 = scmp.ne.s32.totalorder %s495, %s498
      %p504 = scmp.eq.s32.totalorder %s35, 0
      %p505 = por %p503, %p504
      %p506 = scmp.ne.s32.totalorder %s495, %s498
      %p507 = scmp.eq.s32.totalorder %s40, 3
      %p508 = por %p506, %p507
      %p509 = scmp.ne.s32.totalorder %s498, %s499
      %p510 = scmp.eq.s32.totalorder %s40, 0
      %p511 = por %p509, %p510
      %p512 = scmp.ne.s32.totalorder %s498, %s499
      %p513 = scmp.eq.s32.totalorder %s41, 3
      %p514 = por %p512, %p513
      %p516 = scmp.ne.s32.totalorder %s499, %s515
      %p517 = scmp.eq.s32.totalorder %s41, 0
      %p518 = por %p516, %p517
      %p519 = scmp.le.s32.totalorder 1, %s35
      %p520 = scmp.lt.s32.totalorder %s35, 5
      %p521 = pnand %p519, %p520
      %p522 = pneg %p521
      // Predicated region
      $region9: #{tpu_custom_call.1} parent=5 // pred_check
        _
      $region10: #{tpu_custom_call.1} parent=5 // pred_check_branch
        %524 = sbr.rel (%p521) target = $region12
      $region11: #{tpu_custom_call.1} parent=5 // pred_region
        %s525 = ssub.s32 %s35, 1
        // Predicated region
        $region13: #{tpu_custom_call.1} parent=11 // pred_check
          %p526 = pneg %p172
        $region14: #{tpu_custom_call.1} parent=11 // pred_check_branch
          %528 = sbr.rel (%p526) target = $region16
        $region15: #{tpu_custom_call.1} parent=11 // pred_region
          _
        $region16: #{tpu_custom_call.1} parent=11 // pred_fallthru
          _
        // Predicated region
        $region17: #{tpu_custom_call.1} parent=11 // pred_check
          %p529 = pneg %p193
        $region18: #{tpu_custom_call.1} parent=11 // pred_check_branch
          %531 = sbr.rel (%p529) target = $region20
        $region19: #{tpu_custom_call.1} parent=11 // pred_region
          _
        $region20: #{tpu_custom_call.1} parent=11 // pred_fallthru
          _
        // Predicated region
        $region21: #{tpu_custom_call.1} parent=11 // pred_check
          %p532 = pneg %p214
        $region22: #{tpu_custom_call.1} parent=11 // pred_check_branch
          %534 = sbr.rel (%p532) target = $region24
        $region23: #{tpu_custom_call.1} parent=11 // pred_region
          %s536 = ssub.s32 1024, 1024
          %537 = vsyncadd [#allocation10], %s536
          %s538 = sshll.u32 [#allocation9], 4
          %s539 = int_to_ptr.vmem [resolvable:$true] %s538
          %544 = dma.hbm_to_vmem [thread:$0]  %s6, 1024, %s539, [#allocation10], 64, 64, 4
        $region24: #{tpu_custom_call.1} parent=11 // pred_fallthru
          _
        // Predicated region
        $region25: #{tpu_custom_call.1} parent=11 // pred_check
          %p545 = pneg %p235
        $region26: #{tpu_custom_call.1} parent=11 // pred_check_branch
          %547 = sbr.rel (%p545) target = $region28
        $region27: #{tpu_custom_call.1} parent=11 // pred_region
          %s549 = ssub.s32 1024, 1024
          %550 = vsyncadd [#allocation10], %s549
          %s551 = sshll.u32 [#allocation11], 4
          %s552 = int_to_ptr.vmem [resolvable:$true] %s551
          %557 = dma.hbm_to_vmem [thread:$0]  %s7, 1024, %s552, [#allocation10], 64, 64, 4
        $region28: #{tpu_custom_call.1} parent=11 // pred_fallthru
          _
        // Predicated region
        $region29: #{tpu_custom_call.1} parent=11 // pred_check
          %p558 = pneg %p256
        $region30: #{tpu_custom_call.1} parent=11 // pred_check_branch
          %560 = sbr.rel (%p558) target = $region32
        $region31: #{tpu_custom_call.1} parent=11 // pred_region
          _
        $region32: #{tpu_custom_call.1} parent=11 // pred_fallthru
          _
        // Predicated region
        $region33: #{tpu_custom_call.1} parent=11 // pred_check
          %p561 = pneg %p277
        $region34: #{tpu_custom_call.1} parent=11 // pred_check_branch
          %563 = sbr.rel (%p561) target = $region36
        $region35: #{tpu_custom_call.1} parent=11 // pred_region
          %s565 = ssub.s32 1024, 1024
          %566 = vsyncadd [#allocation13], %s565
          %s567 = sshll.u32 [#allocation12], 4
          %s568 = int_to_ptr.vmem [resolvable:$true] %s567
          %573 = dma.hbm_to_vmem [thread:$0]  %s9, 1024, %s568, [#allocation13], 64, 64, 4
        $region36: #{tpu_custom_call.1} parent=11 // pred_fallthru
          _
      $region12: #{tpu_custom_call.1} parent=5 // pred_fallthru
        _
      %p574 = scmp.lt.s32.totalorder %s35, 4
      // Predicated region
      $region37: #{tpu_custom_call.1} parent=5 // pred_check
        %p575 = pneg %p574
      $region38: #{tpu_custom_call.1} parent=5 // pred_check_branch
        %577 = sbr.rel (%p575) target = $region40
      $region39: #{tpu_custom_call.1} parent=5 // pred_region
        // Predicated region
        $region41: #{tpu_custom_call.1} parent=39 // pred_check
          %p578 = pneg %p67
        $region42: #{tpu_custom_call.1} parent=39 // pred_check_branch
          %580 = sbr.rel (%p578) target = $region44
        $region43: #{tpu_custom_call.1} parent=39 // pred_region
          %s581 = sand.u32 %s35, 1
          %s582 = scalar_lea.sflag [#allocation4], %s581
          %s583 = sand.u32 %s57, 1
          %s584 = smul.addr %s583, 8
          %s585 = scalar_lea.vmem [#allocation3], %s584
          %s587 = ssub.s32 128, 128
          %588 = vsyncadd %s582, %s587
          %s589 = smul.addr %s42, 128
          %s590 = scalar_lea.hbm %s0, %s589
          %s592 = sshll.u32 %s585, 4
          %s593 = int_to_ptr.vmem [resolvable:$true] %s592
          %595 = dma.hbm_to_vmem [thread:$0]  %s590, 128, %s593, %s582
        $region44: #{tpu_custom_call.1} parent=39 // pred_fallthru
          _
        // Predicated region
        $region45: #{tpu_custom_call.1} parent=39 // pred_check
          %p596 = pneg %p93
        $region46: #{tpu_custom_call.1} parent=39 // pred_check_branch
          %598 = sbr.rel (%p596) target = $region48
        $region47: #{tpu_custom_call.1} parent=39 // pred_region
          %s599 = sand.u32 %s35, 1
          %s600 = scalar_lea.sflag [#allocation7], %s599
          %s601 = sand.u32 %s83, 1
          %s602 = smul.addr %s601, 4
          %s603 = scalar_lea.vmem [#allocation6], %s602
          %s605 = ssub.s32 64, 64
          %606 = vsyncadd %s600, %s605
          %s607 = smul.addr %s42, 64
          %s608 = scalar_lea.hbm %s1, %s607
          %s610 = sshll.u32 %s603, 4
          %s611 = int_to_ptr.vmem [resolvable:$true] %s610
          %613 = dma.hbm_to_vmem [thread:$0]  %s608, 64, %s611, %s600
        $region48: #{tpu_custom_call.1} parent=39 // pred_fallthru
          _
        // Predicated region
        $region49: #{tpu_custom_call.1} parent=39 // pred_check
          %p614 = pneg %p119
        $region50: #{tpu_custom_call.1} parent=39 // pred_check_branch
          %616 = sbr.rel (%p614) target = $region52
        $region51: #{tpu_custom_call.1} parent=39 // pred_region
          %p617 = scmp.lt.s32.totalorder %s42, 1
          %s618 = scalar_select %p617, %s42, 1
          %s619 = scalar_lea.vmem %s2, %s618
        $region52: #{tpu_custom_call.1} parent=39 // pred_fallthru
          _
        // Predicated region
        $region53: #{tpu_custom_call.1} parent=39 // pred_check
          %p620 = pneg %p145
        $region54: #{tpu_custom_call.1} parent=39 // pred_check_branch
          %622 = sbr.rel (%p620) target = $region56
        $region55: #{tpu_custom_call.1} parent=39 // pred_region
          %s623 = sand.u32 %s35, 1
          %s624 = scalar_lea.sflag [#allocation7], %s623
          %s625 = sand.u32 %s135, 1
          %s626 = scalar_lea.vmem [#allocation8], %s625
          %s628 = ssub.s32 16, 16
          %629 = vsyncadd %s624, %s628
          %s630 = smul.addr %s42, 16
          %s631 = scalar_lea.hbm %s3, %s630
          %s633 = sshll.u32 %s626, 4
          %s634 = int_to_ptr.vmem [resolvable:$true] %s633
          %636 = dma.hbm_to_vmem [thread:$0]  %s631, 16, %s634, %s624
        $region56: #{tpu_custom_call.1} parent=39 // pred_fallthru
          _
        // Predicated region
        $region57: #{tpu_custom_call.1} parent=39 // pred_check
          %p637 = pneg %p297
        $region58: #{tpu_custom_call.1} parent=39 // pred_check_branch
          %639 = sbr.rel (%p637) target = $region60
        $region59: #{tpu_custom_call.1} parent=39 // pred_region
          %s640 = sand.u32 %s35, 1
          %s641 = scalar_lea.sflag [#allocation4], %s640
          %s642 = sand.u32 %s287, 1
          %s643 = smul.addr %s642, 192
          %s644 = scalar_lea.vmem [#allocation14], %s643
          %s646 = ssub.s32 3072, 3072
          %647 = vsyncadd %s641, %s646
          %s648 = smul.addr %s43, 48
          %s649 = smul.addr %s648, 64
          %s650 = scalar_lea.hbm %s10, %s649
          %s651 = sshll.u32 %s644, 4
          %s652 = int_to_ptr.vmem [resolvable:$true] %s651
          %657 = dma.hbm_to_vmem [thread:$0]  %s650, 3072, %s652, %s641, 192, 192, 12
        $region60: #{tpu_custom_call.1} parent=39 // pred_fallthru
          _
        // Predicated region
        $region61: #{tpu_custom_call.1} parent=39 // pred_check
          %p658 = pneg %p323
        $region62: #{tpu_custom_call.1} parent=39 // pred_check_branch
          %660 = sbr.rel (%p658) target = $region64
        $region63: #{tpu_custom_call.1} parent=39 // pred_region
          %s661 = sand.u32 %s35, 1
          %s662 = scalar_lea.sflag [#allocation7], %s661
          %s663 = sand.u32 %s313, 1
          %s664 = smul.addr %s663, 64
          %s665 = scalar_lea.vmem [#allocation15], %s664
          %s667 = ssub.s32 1024, 1024
          %668 = vsyncadd %s662, %s667
          %s669 = smul.addr %s43, 16
          %s670 = smul.addr %s669, 64
          %s671 = scalar_lea.hbm %s11, %s670
          %s672 = sshll.u32 %s665, 4
          %s673 = int_to_ptr.vmem [resolvable:$true] %s672
          %678 = dma.hbm_to_vmem [thread:$0]  %s671, 1024, %s673, %s662, 64, 64, 4
        $region64: #{tpu_custom_call.1} parent=39 // pred_fallthru
          _
        // Predicated region
        $region65: #{tpu_custom_call.1} parent=39 // pred_check
          %p679 = pneg %p349
        $region66: #{tpu_custom_call.1} parent=39 // pred_check_branch
          %681 = sbr.rel (%p679) target = $region68
        $region67: #{tpu_custom_call.1} parent=39 // pred_region
          %s682 = sand.u32 %s35, 1
          %s683 = scalar_lea.sflag [#allocation4], %s682
          %s684 = sand.u32 %s339, 1
          %s685 = smul.addr %s684, 64
          %s686 = scalar_lea.vmem [#allocation16], %s685
          %s688 = ssub.s32 1024, 1024
          %689 = vsyncadd %s683, %s688
          %s690 = smul.addr %s43, 16
          %s691 = smul.addr %s690, 64
          %s692 = scalar_lea.hbm %s12, %s691
          %s693 = sshll.u32 %s686, 4
          %s694 = int_to_ptr.vmem [resolvable:$true] %s693
          %699 = dma.hbm_to_vmem [thread:$0]  %s692, 1024, %s694, %s683, 64, 64, 4
        $region68: #{tpu_custom_call.1} parent=39 // pred_fallthru
          _
        // Predicated region
        $region69: #{tpu_custom_call.1} parent=39 // pred_check
          %p700 = pneg %p375
        $region70: #{tpu_custom_call.1} parent=39 // pred_check_branch
          %702 = sbr.rel (%p700) target = $region72
        $region71: #{tpu_custom_call.1} parent=39 // pred_region
          %s703 = sand.u32 %s35, 1
          %s704 = scalar_lea.sflag [#allocation7], %s703
          %s705 = sand.u32 %s365, 1
          %s706 = smul.addr %s705, 128
          %s707 = scalar_lea.vmem [#allocation17], %s706
          %s709 = ssub.s32 2048, 2048
          %710 = vsyncadd %s704, %s709
          %s711 = smul.addr %s43, 32
          %s712 = smul.addr %s711, 64
          %s713 = scalar_lea.hbm %s13, %s712
          %s714 = sshll.u32 %s707, 4
          %s715 = int_to_ptr.vmem [resolvable:$true] %s714
          %720 = dma.hbm_to_vmem [thread:$0]  %s713, 2048, %s715, %s704, 128, 128, 8
        $region72: #{tpu_custom_call.1} parent=39 // pred_fallthru
          _
        // Predicated region
        $region73: #{tpu_custom_call.1} parent=39 // pred_check
          %p721 = pneg %p401
        $region74: #{tpu_custom_call.1} parent=39 // pred_check_branch
          %723 = sbr.rel (%p721) target = $region76
        $region75: #{tpu_custom_call.1} parent=39 // pred_region
          %s724 = sand.u32 %s35, 1
          %s725 = scalar_lea.sflag [#allocation4], %s724
          %s726 = sand.u32 %s391, 1
          %s727 = smul.addr %s726, 64
          %s728 = scalar_lea.vmem [#allocation18], %s727
          %s730 = ssub.s32 1024, 1024
          %731 = vsyncadd %s725, %s730
          %s732 = smul.addr %s43, 16
          %s733 = smul.addr %s732, 64
          %s734 = scalar_lea.hbm %s14, %s733
          %s735 = sshll.u32 %s728, 4
          %s736 = int_to_ptr.vmem [resolvable:$true] %s735
          %741 = dma.hbm_to_vmem [thread:$0]  %s734, 1024, %s736, %s725, 64, 64, 4
        $region76: #{tpu_custom_call.1} parent=39 // pred_fallthru
          _
        // Predicated region
        $region77: #{tpu_custom_call.1} parent=39 // pred_check
          %p742 = pneg %p427
        $region78: #{tpu_custom_call.1} parent=39 // pred_check_branch
          %744 = sbr.rel (%p742) target = $region80
        $region79: #{tpu_custom_call.1} parent=39 // pred_region
          %s745 = sand.u32 %s35, 1
          %s746 = scalar_lea.sflag [#allocation7], %s745
          %s747 = sand.u32 %s417, 1
          %s748 = smul.addr %s747, 64
          %s749 = scalar_lea.vmem [#allocation19], %s748
          %s751 = ssub.s32 1024, 1024
          %752 = vsyncadd %s746, %s751
          %s753 = smul.addr %s43, 16
          %s754 = smul.addr %s753, 64
          %s755 = scalar_lea.hbm %s15, %s754
          %s756 = sshll.u32 %s749, 4
          %s757 = int_to_ptr.vmem [resolvable:$true] %s756
          %762 = dma.hbm_to_vmem [thread:$0]  %s755, 1024, %s757, %s746, 64, 64, 4
        $region80: #{tpu_custom_call.1} parent=39 // pred_fallthru
          _
        // Predicated region
        $region81: #{tpu_custom_call.1} parent=39 // pred_check
          %p763 = pneg %p453
        $region82: #{tpu_custom_call.1} parent=39 // pred_check_branch
          %765 = sbr.rel (%p763) target = $region84
        $region83: #{tpu_custom_call.1} parent=39 // pred_region
          %s766 = sand.u32 %s35, 1
          %s767 = scalar_lea.sflag [#allocation4], %s766
          %s768 = sand.u32 %s443, 1
          %s769 = smul.addr %s768, 64
          %s770 = scalar_lea.vmem [#allocation20], %s769
          %s772 = ssub.s32 1024, 1024
          %773 = vsyncadd %s767, %s772
          %s774 = smul.addr %s43, 16
          %s775 = smul.addr %s774, 64
          %s776 = scalar_lea.hbm %s16, %s775
          %s777 = sshll.u32 %s770, 4
          %s778 = int_to_ptr.vmem [resolvable:$true] %s777
          %783 = dma.hbm_to_vmem [thread:$0]  %s776, 1024, %s778, %s767, 64, 64, 4
        $region84: #{tpu_custom_call.1} parent=39 // pred_fallthru
          _
        // Predicated region
        $region85: #{tpu_custom_call.1} parent=39 // pred_check
          %p784 = pneg %p479
        $region86: #{tpu_custom_call.1} parent=39 // pred_check_branch
          %786 = sbr.rel (%p784) target = $region88
        $region87: #{tpu_custom_call.1} parent=39 // pred_region
          %s787 = sand.u32 %s35, 1
          %s788 = scalar_lea.sflag [#allocation7], %s787
          %s789 = sand.u32 %s469, 1
          %s790 = smul.addr %s789, 48
          %s791 = scalar_lea.vmem [#allocation21], %s790
          %s793 = ssub.s32 768, 768
          %794 = vsyncadd %s788, %s793
          %s795 = smul.addr %s43, 6
          %s796 = smul.addr %s795, 128
          %s797 = scalar_lea.hbm %s17, %s796
          %s798 = sshll.u32 %s791, 4
          %s799 = int_to_ptr.vmem [resolvable:$true] %s798
          %804 = dma.hbm_to_vmem [thread:$0]  %s797, 768, %s799, %s788, 384, 384, 24
        $region88: #{tpu_custom_call.1} parent=39 // pred_fallthru
          _
      $region40: #{tpu_custom_call.1} parent=5 // pred_fallthru
        _
      %p805 = scmp.le.s32.totalorder 1, %s35
      %p806 = scmp.lt.s32.totalorder %s35, 5
      %p807 = pnand %p805, %p806
      %p808 = pneg %p807
      // Predicated region
      $region89: #{tpu_custom_call.1} parent=5 // pred_check
        _
      $region90: #{tpu_custom_call.1} parent=5 // pred_check_branch
        %810 = sbr.rel (%p807) target = $region92
      $region91: #{tpu_custom_call.1} parent=5 // pred_region
        %s811 = ssub.s32 %s35, 1
        %s812 = sand.u32 %s40, 1
        %s813 = scalar_lea.sflag [#allocation4], %s812
        %s814 = sand.u32 %s60, 1
        %s815 = smul.addr %s814, 8
        %s816 = scalar_lea.vmem [#allocation3], %s815
        // Predicated region
        $region93: #{tpu_custom_call.1} parent=91 // pred_check
          %p817 = pneg %p73
        $region94: #{tpu_custom_call.1} parent=91 // pred_check_branch
          %819 = sbr.rel (%p817) target = $region96
        $region95: #{tpu_custom_call.1} parent=91 // pred_region
          %820 = dma.done %s813, 128
        $region96: #{tpu_custom_call.1} parent=91 // pred_fallthru
          _
        %s821 = sand.u32 %s40, 1
        %s822 = scalar_lea.sflag [#allocation7], %s821
        %s823 = sand.u32 %s86, 1
        %s824 = smul.addr %s823, 4
        %s825 = scalar_lea.vmem [#allocation6], %s824
        // Predicated region
        $region97: #{tpu_custom_call.1} parent=91 // pred_check
          %p826 = pneg %p99
        $region98: #{tpu_custom_call.1} parent=91 // pred_check_branch
          %828 = sbr.rel (%p826) target = $region100
        $region99: #{tpu_custom_call.1} parent=91 // pred_region
          %829 = dma.done %s822, 64
        $region100: #{tpu_custom_call.1} parent=91 // pred_fallthru
          _
        %s830 = sand.u32 %s40, 1
        %s831 = scalar_lea.sflag [#allocation7], %s830
        %s832 = sand.u32 %s138, 1
        %s833 = scalar_lea.vmem [#allocation8], %s832
        // Predicated region
        $region101: #{tpu_custom_call.1} parent=91 // pred_check
          %p834 = pneg %p151
        $region102: #{tpu_custom_call.1} parent=91 // pred_check_branch
          %836 = sbr.rel (%p834) target = $region104
        $region103: #{tpu_custom_call.1} parent=91 // pred_region
          %837 = dma.done %s831, 16
        $region104: #{tpu_custom_call.1} parent=91 // pred_fallthru
          _
        // Predicated region
        $region105: #{tpu_custom_call.1} parent=91 // pred_check
          %p838 = pneg %p214
        $region106: #{tpu_custom_call.1} parent=91 // pred_check_branch
          %840 = sbr.rel (%p838) target = $region108
        $region107: #{tpu_custom_call.1} parent=91 // pred_region
          %841 = dma.done [#allocation10], 1024
        $region108: #{tpu_custom_call.1} parent=91 // pred_fallthru
          _
        // Predicated region
        $region109: #{tpu_custom_call.1} parent=91 // pred_check
          %p842 = pneg %p235
        $region110: #{tpu_custom_call.1} parent=91 // pred_check_branch
          %844 = sbr.rel (%p842) target = $region112
        $region111: #{tpu_custom_call.1} parent=91 // pred_region
          %845 = dma.done [#allocation10], 1024
        $region112: #{tpu_custom_call.1} parent=91 // pred_fallthru
          _
        // Predicated region
        $region113: #{tpu_custom_call.1} parent=91 // pred_check
          %p846 = pneg %p277
        $region114: #{tpu_custom_call.1} parent=91 // pred_check_branch
          %848 = sbr.rel (%p846) target = $region116
        $region115: #{tpu_custom_call.1} parent=91 // pred_region
          %849 = dma.done [#allocation13], 1024
        $region116: #{tpu_custom_call.1} parent=91 // pred_fallthru
          _
        %s850 = sand.u32 %s40, 1
        %s851 = scalar_lea.sflag [#allocation4], %s850
        %s852 = sand.u32 %s290, 1
        %s853 = smul.addr %s852, 192
        %s854 = scalar_lea.vmem [#allocation14], %s853
        // Predicated region
        $region117: #{tpu_custom_call.1} parent=91 // pred_check
          %p855 = pneg %p303
        $region118: #{tpu_custom_call.1} parent=91 // pred_check_branch
          %857 = sbr.rel (%p855) target = $region120
        $region119: #{tpu_custom_call.1} parent=91 // pred_region
          %858 = dma.done %s851, 3072
        $region120: #{tpu_custom_call.1} parent=91 // pred_fallthru
          _
        %s859 = sand.u32 %s40, 1
        %s860 = scalar_lea.sflag [#allocation7], %s859
        %s861 = sand.u32 %s316, 1
        %s862 = smul.addr %s861, 64
        %s863 = scalar_lea.vmem [#allocation15], %s862
        // Predicated region
        $region121: #{tpu_custom_call.1} parent=91 // pred_check
          %p864 = pneg %p329
        $region122: #{tpu_custom_call.1} parent=91 // pred_check_branch
          %866 = sbr.rel (%p864) target = $region124
        $region123: #{tpu_custom_call.1} parent=91 // pred_region
          %867 = dma.done %s860, 1024
        $region124: #{tpu_custom_call.1} parent=91 // pred_fallthru
          _
        %s868 = sand.u32 %s40, 1
        %s869 = scalar_lea.sflag [#allocation4], %s868
        %s870 = sand.u32 %s342, 1
        %s871 = smul.addr %s870, 64
        %s872 = scalar_lea.vmem [#allocation16], %s871
        // Predicated region
        $region125: #{tpu_custom_call.1} parent=91 // pred_check
          %p873 = pneg %p355
        $region126: #{tpu_custom_call.1} parent=91 // pred_check_branch
          %875 = sbr.rel (%p873) target = $region128
        $region127: #{tpu_custom_call.1} parent=91 // pred_region
          %876 = dma.done %s869, 1024
        $region128: #{tpu_custom_call.1} parent=91 // pred_fallthru
          _
        %s877 = sand.u32 %s40, 1
        %s878 = scalar_lea.sflag [#allocation7], %s877
        %s879 = sand.u32 %s368, 1
        %s880 = smul.addr %s879, 128
        %s881 = scalar_lea.vmem [#allocation17], %s880
        // Predicated region
        $region129: #{tpu_custom_call.1} parent=91 // pred_check
          %p882 = pneg %p381
        $region130: #{tpu_custom_call.1} parent=91 // pred_check_branch
          %884 = sbr.rel (%p882) target = $region132
        $region131: #{tpu_custom_call.1} parent=91 // pred_region
          %885 = dma.done %s878, 2048
        $region132: #{tpu_custom_call.1} parent=91 // pred_fallthru
          _
        %s886 = sand.u32 %s40, 1
        %s887 = scalar_lea.sflag [#allocation4], %s886
        %s888 = sand.u32 %s394, 1
        %s889 = smul.addr %s888, 64
        %s890 = scalar_lea.vmem [#allocation18], %s889
        // Predicated region
        $region133: #{tpu_custom_call.1} parent=91 // pred_check
          %p891 = pneg %p407
        $region134: #{tpu_custom_call.1} parent=91 // pred_check_branch
          %893 = sbr.rel (%p891) target = $region136
        $region135: #{tpu_custom_call.1} parent=91 // pred_region
          %894 = dma.done %s887, 1024
        $region136: #{tpu_custom_call.1} parent=91 // pred_fallthru
          _
        %s895 = sand.u32 %s40, 1
        %s896 = scalar_lea.sflag [#allocation7], %s895
        %s897 = sand.u32 %s420, 1
        %s898 = smul.addr %s897, 64
        %s899 = scalar_lea.vmem [#allocation19], %s898
        // Predicated region
        $region137: #{tpu_custom_call.1} parent=91 // pred_check
          %p900 = pneg %p433
        $region138: #{tpu_custom_call.1} parent=91 // pred_check_branch
          %902 = sbr.rel (%p900) target = $region140
        $region139: #{tpu_custom_call.1} parent=91 // pred_region
          %903 = dma.done %s896, 1024
        $region140: #{tpu_custom_call.1} parent=91 // pred_fallthru
          _
        %s904 = sand.u32 %s40, 1
        %s905 = scalar_lea.sflag [#allocation4], %s904
        %s906 = sand.u32 %s446, 1
        %s907 = smul.addr %s906, 64
        %s908 = scalar_lea.vmem [#allocation20], %s907
        // Predicated region
        $region141: #{tpu_custom_call.1} parent=91 // pred_check
          %p909 = pneg %p459
        $region142: #{tpu_custom_call.1} parent=91 // pred_check_branch
          %911 = sbr.rel (%p909) target = $region144
        $region143: #{tpu_custom_call.1} parent=91 // pred_region
          %912 = dma.done %s905, 1024
        $region144: #{tpu_custom_call.1} parent=91 // pred_fallthru
          _
        %s913 = sand.u32 %s40, 1
        %s914 = scalar_lea.sflag [#allocation7], %s913
        %s915 = sand.u32 %s472, 1
        %s916 = smul.addr %s915, 48
        %s917 = scalar_lea.vmem [#allocation21], %s916
        // Predicated region
        $region145: #{tpu_custom_call.1} parent=91 // pred_check
          %p918 = pneg %p485
        $region146: #{tpu_custom_call.1} parent=91 // pred_check_branch
          %920 = sbr.rel (%p918) target = $region148
        $region147: #{tpu_custom_call.1} parent=91 // pred_region
          %921 = dma.done %s914, 768
        $region148: #{tpu_custom_call.1} parent=91 // pred_fallthru
          _
        %s922 = sand.u32 %s40, 1
        %s923 = scalar_lea.sflag [#allocation4], %s922
        %s924 = sand.u32 %s60, 1
        %s925 = smul.addr %s924, 8
        %s926 = scalar_lea.vmem [#allocation3], %s925
        %p927 = pneg %p73
        %p928 = pneg %p70
        %s929 = sand.u32 %s40, 1
        %s930 = scalar_lea.sflag [#allocation7], %s929
        %s931 = sand.u32 %s86, 1
        %s932 = smul.addr %s931, 4
        %s933 = scalar_lea.vmem [#allocation6], %s932
        %p934 = pneg %p99
        %p935 = pneg %p96
        %p936 = scmp.lt.s32.totalorder %s44, 1
        %s937 = scalar_select %p936, %s44, 1
        %s938 = scalar_lea.vmem %s2, %s937
        %p939 = pneg %p125
        %p940 = pneg %p122
        %s941 = sand.u32 %s40, 1
        %s942 = scalar_lea.sflag [#allocation7], %s941
        %s943 = sand.u32 %s138, 1
        %s944 = scalar_lea.vmem [#allocation8], %s943
        %p945 = pneg %p151
        %p946 = pneg %p148
        %p947 = pneg %p172
        %p948 = pneg %p169
        %p949 = pneg %p193
        %p950 = pneg %p190
        %p951 = pneg %p214
        %p952 = pneg %p211
        %p953 = pneg %p235
        %p954 = pneg %p232
        %p955 = pneg %p256
        %p956 = pneg %p253
        %p957 = pneg %p277
        %p958 = pneg %p274
        %s959 = sand.u32 %s40, 1
        %s960 = scalar_lea.sflag [#allocation4], %s959
        %s961 = sand.u32 %s290, 1
        %s962 = smul.addr %s961, 192
        %s963 = scalar_lea.vmem [#allocation14], %s962
        %p964 = pneg %p303
        %p965 = pneg %p300
        %s966 = sand.u32 %s40, 1
        %s967 = scalar_lea.sflag [#allocation7], %s966
        %s968 = sand.u32 %s316, 1
        %s969 = smul.addr %s968, 64
        %s970 = scalar_lea.vmem [#allocation15], %s969
        %p971 = pneg %p329
        %p972 = pneg %p326
        %s973 = sand.u32 %s40, 1
        %s974 = scalar_lea.sflag [#allocation4], %s973
        %s975 = sand.u32 %s342, 1
        %s976 = smul.addr %s975, 64
        %s977 = scalar_lea.vmem [#allocation16], %s976
        %p978 = pneg %p355
        %p979 = pneg %p352
        %s980 = sand.u32 %s40, 1
        %s981 = scalar_lea.sflag [#allocation7], %s980
        %s982 = sand.u32 %s368, 1
        %s983 = smul.addr %s982, 128
        %s984 = scalar_lea.vmem [#allocation17], %s983
        %p985 = pneg %p381
        %p986 = pneg %p378
        %s987 = sand.u32 %s40, 1
        %s988 = scalar_lea.sflag [#allocation4], %s987
        %s989 = sand.u32 %s394, 1
        %s990 = smul.addr %s989, 64
        %s991 = scalar_lea.vmem [#allocation18], %s990
        %p992 = pneg %p407
        %p993 = pneg %p404
        %s994 = sand.u32 %s40, 1
        %s995 = scalar_lea.sflag [#allocation7], %s994
        %s996 = sand.u32 %s420, 1
        %s997 = smul.addr %s996, 64
        %s998 = scalar_lea.vmem [#allocation19], %s997
        %p999 = pneg %p433
        %p1000 = pneg %p430
        %s1001 = sand.u32 %s40, 1
        %s1002 = scalar_lea.sflag [#allocation4], %s1001
        %s1003 = sand.u32 %s446, 1
        %s1004 = smul.addr %s1003, 64
        %s1005 = scalar_lea.vmem [#allocation20], %s1004
        %p1006 = pneg %p459
        %p1007 = pneg %p456
        %s1008 = sand.u32 %s40, 1
        %s1009 = scalar_lea.sflag [#allocation7], %s1008
        %s1010 = sand.u32 %s472, 1
        %s1011 = smul.addr %s1010, 48
        %s1012 = scalar_lea.vmem [#allocation21], %s1011
        %p1013 = pneg %p485
        %p1014 = pneg %p482
        %p1015 = pneg %p511
        %p1016 = pneg %p508
        %s1017 = sand.u32 %s498, 1
        %s1018 = scalar_lea.sflag [#allocation5], %s1017
        %s1019 = sand.u32 %s498, 1
        %s1020 = smul.addr %s1019, 8
        %s1021 = scalar_lea.vmem [#allocation22], %s1020
        %p1022 = scmp.lt.s32.totalorder %s44, 1
        %s1023 = scalar_select %p1022, %s44, 1
        %s1024 = scalar_lea.vmem %s2, %s1023
        %p1026 = scmp.eq.s32.totalorder %s45, 0
        // Predicated region
        $region149: #{tpu_custom_call.1} parent=91 // pred_check
          %p1027 = pneg %p1026
        $region150: #{tpu_custom_call.1} parent=91 // pred_check_branch
          %1029 = sbr.rel (%p1027) target = $region152
        $region151: #{tpu_custom_call.1} parent=91 // pred_region
          %v1030 = vld [vmem:[%s8] sm:$0xff]
          %v1031 = vld [vmem:[%s816] sm:$0xff]
          %v1032 = vpack.c.bf16 %v1031, %v1031
          %v1033 = vld [vmem:[%s5] sm:$0xf]
          %v1034 = vld [vmem:[%s5 + $0x4] sm:$0xf]
          %v1035 = vlaneseq
          %v1036 = vshrl.u32 %v1035, 7
          %v1037 = vsub.s32 0, %v1036
          %v1038 = vrot.slane %v1030, %v1037
          %v1041 = vunpack.c.l.b16 %v1033
          %v1042 = vunpack.c.l.b16 %v1034
          %v1043 = vpack.c.b16 %v1042, %v1041
          %vm1045 = vcmask 130048
          %v1047 = vsel %vm1045, %v1032, 0
          %1049 = vmatprep.subr.bf16.mxu0 0
          %1050 = vmatpush1.bf16.msra.mxu0 %v1043
          %1051 = vmatprep.subr.bf16.mxu0 0
          %1052 = vmatpush1.bf16.msra.mxu0 0
          %1053 = vmatprep.subr.bf16.mxu0 0
          %1054 = vmatpush1.bf16.msra.mxu0 0
          %1055 = vmatprep.subr.bf16.mxu0 0
          %1056 = vmatpush1.bf16.msra.mxu0 0
          %1057 = vmatprep.subr.bf16.mxu0 0
          %1058 = vmatpush1.bf16.msra.mxu0 0
          %1059 = vmatprep.subr.bf16.mxu0 0
          %1060 = vmatpush1.bf16.msra.mxu0 0
          %1061 = vmatprep.subr.bf16.mxu0 0
          %1062 = vmatpush1.bf16.msra.mxu0 0
          %1063 = vmatprep.subr.bf16.mxu0 0
          %1064 = vmatpush1.bf16.msra.mxu0 0
          %1065 = vmatprep.subr.bf16.mxu0 0
          %1066 = vmatpush1.bf16.msra.mxu0 0
          %1067 = vmatprep.subr.bf16.mxu0 0
          %1068 = vmatpush1.bf16.msra.mxu0 0
          %1069 = vmatprep.subr.bf16.mxu0 0
          %1070 = vmatpush1.bf16.msra.mxu0 0
          %1071 = vmatprep.subr.bf16.mxu0 0
          %1072 = vmatpush1.bf16.msra.mxu0 0
          %1073 = vmatprep.subr.bf16.mxu0 0
          %1074 = vmatpush1.bf16.msra.mxu0 0
          %1075 = vmatprep.subr.bf16.mxu0 0
          %1076 = vmatpush1.bf16.msra.mxu0 0
          %1077 = vmatprep.subr.bf16.mxu0 0
          %1078 = vmatpush1.bf16.msra.mxu0 0
          %1079 = vmatprep.subr.bf16.mxu0 0
          %1080 = vmatpush1.bf16.msra.mxu0 0
          %1081 = vmatprep.mubr.bf16.mxu0 0
          %1082 = vmatmul.mubr.bf16.gmra.mrb[0].mxu0 %v1047
          %v1083 = vpop.f32.mrb[0].mxu0
          %v1084 = vadd.f32 %v1038, %v1083
          %v1085 = vpop.f32.mrb[0].mxu0
          %v1086 = vpop.f32.mrb[0].mxu0
          %v1087 = vpop.f32.mrb[0].mxu0
          %1088 = vdwg.mxu0
          %v1089 = vmax.f32 %v1084, 0.0
          %v1090 = vpack.c.bf16 %v1089, %v1089
          %v1091 = vld [vmem:[#allocation9] sm:$0xf]
          %v1092 = vld [vmem:[#allocation9 + $0x4] sm:$0xf]
          %v1093 = vld [vmem:[#allocation9 + $0x8] sm:$0xf]
          %v1094 = vld [vmem:[#allocation9 + $0xc] sm:$0xf]
          %v1095 = vld [vmem:[#allocation9 + $0x10] sm:$0xf]
          %v1096 = vld [vmem:[#allocation9 + $0x14] sm:$0xf]
          %v1097 = vld [vmem:[#allocation9 + $0x18] sm:$0xf]
          %v1098 = vld [vmem:[#allocation9 + $0x1c] sm:$0xf]
          %v1099 = vld [vmem:[#allocation9 + $0x20] sm:$0xf]
          %v1100 = vld [vmem:[#allocation9 + $0x24] sm:$0xf]
          %v1101 = vld [vmem:[#allocation9 + $0x28] sm:$0xf]
          %v1102 = vld [vmem:[#allocation9 + $0x2c] sm:$0xf]
          %v1103 = vld [vmem:[#allocation9 + $0x30] sm:$0xf]
          %v1104 = vld [vmem:[#allocation9 + $0x34] sm:$0xf]
          %v1105 = vld [vmem:[#allocation9 + $0x38] sm:$0xf]
          %v1106 = vld [vmem:[#allocation9 + $0x3c] sm:$0xf]
          %v1107 = vlaneseq
          %v1108 = vshrl.u32 %v1107, 7
          %v1109 = vsub.s32 1, %v1108
          %v1110 = vrot.slane %v1030, %v1109
          %v1127 = vunpack.c.l.b16 %v1091
          %v1128 = vunpack.c.l.b16 %v1092
          %v1129 = vunpack.c.l.b16 %v1093
          %v1130 = vunpack.c.l.b16 %v1094
          %v1131 = vunpack.c.l.b16 %v1095
          %v1132 = vunpack.c.l.b16 %v1096
          %v1133 = vunpack.c.l.b16 %v1097
          %v1134 = vunpack.c.l.b16 %v1098
          %v1135 = vunpack.c.l.b16 %v1099
          %v1136 = vunpack.c.l.b16 %v1100
          %v1137 = vunpack.c.l.b16 %v1101
          %v1138 = vunpack.c.l.b16 %v1102
          %v1139 = vunpack.c.l.b16 %v1103
          %v1140 = vunpack.c.l.b16 %v1104
          %v1141 = vunpack.c.l.b16 %v1105
          %v1142 = vunpack.c.l.b16 %v1106
          %v1143 = vpack.c.b16 %v1128, %v1127
          %v1144 = vpack.c.b16 %v1130, %v1129
          %v1145 = vpack.c.b16 %v1132, %v1131
          %v1146 = vpack.c.b16 %v1134, %v1133
          %v1147 = vpack.c.b16 %v1136, %v1135
          %v1148 = vpack.c.b16 %v1138, %v1137
          %v1149 = vpack.c.b16 %v1140, %v1139
          %v1150 = vpack.c.b16 %v1142, %v1141
          %1159 = vmatprep.subr.bf16.mxu0 0
          %1160 = vmatpush1.bf16.msra.mxu0 %v1143
          %1161 = vmatprep.subr.bf16.mxu0 0
          %1162 = vmatpush1.bf16.msra.mxu0 %v1144
          %1163 = vmatprep.subr.bf16.mxu0 0
          %1164 = vmatpush1.bf16.msra.mxu0 %v1145
          %1165 = vmatprep.subr.bf16.mxu0 0
          %1166 = vmatpush1.bf16.msra.mxu0 %v1146
          %1167 = vmatprep.subr.bf16.mxu0 0
          %1168 = vmatpush1.bf16.msra.mxu0 %v1147
          %1169 = vmatprep.subr.bf16.mxu0 0
          %1170 = vmatpush1.bf16.msra.mxu0 %v1148
          %1171 = vmatprep.subr.bf16.mxu0 0
          %1172 = vmatpush1.bf16.msra.mxu0 %v1149
          %1173 = vmatprep.subr.bf16.mxu0 0
          %1174 = vmatpush1.bf16.msra.mxu0 %v1150
          %1175 = vmatprep.subr.bf16.mxu0 0
          %1176 = vmatpush1.bf16.msra.mxu0 0
          %1177 = vmatprep.subr.bf16.mxu0 0
          %1178 = vmatpush1.bf16.msra.mxu0 0
          %1179 = vmatprep.subr.bf16.mxu0 0
          %1180 = vmatpush1.bf16.msra.mxu0 0
          %1181 = vmatprep.subr.bf16.mxu0 0
          %1182 = vmatpush1.bf16.msra.mxu0 0
          %1183 = vmatprep.subr.bf16.mxu0 0
          %1184 = vmatpush1.bf16.msra.mxu0 0
          %1185 = vmatprep.subr.bf16.mxu0 0
          %1186 = vmatpush1.bf16.msra.mxu0 0
          %1187 = vmatprep.subr.bf16.mxu0 0
          %1188 = vmatpush1.bf16.msra.mxu0 0
          %1189 = vmatprep.subr.bf16.mxu0 0
          %1190 = vmatpush1.bf16.msra.mxu0 0
          %1191 = vmatprep.mubr.bf16.mxu0 0
          %1192 = vmatmul.mubr.bf16.gmra.mrb[0].mxu0 %v1090
          %v1193 = vpop.f32.mrb[0].mxu0
          %v1194 = vadd.f32 %v1110, %v1193
          %v1195 = vpop.f32.mrb[0].mxu0
          %v1196 = vpop.f32.mrb[0].mxu0
          %v1197 = vpop.f32.mrb[0].mxu0
          %1198 = vdwg.mxu0
          %v1199 = vmax.f32 %v1194, 0.0
          %v1200 = vpack.c.bf16 %v1199, %v1199
          %v1201 = vld [vmem:[#allocation11] sm:$0xf]
          %v1202 = vld [vmem:[#allocation11 + $0x4] sm:$0xf]
          %v1203 = vld [vmem:[#allocation11 + $0x8] sm:$0xf]
          %v1204 = vld [vmem:[#allocation11 + $0xc] sm:$0xf]
          %v1205 = vld [vmem:[#allocation11 + $0x10] sm:$0xf]
          %v1206 = vld [vmem:[#allocation11 + $0x14] sm:$0xf]
          %v1207 = vld [vmem:[#allocation11 + $0x18] sm:$0xf]
          %v1208 = vld [vmem:[#allocation11 + $0x1c] sm:$0xf]
          %v1209 = vld [vmem:[#allocation11 + $0x20] sm:$0xf]
          %v1210 = vld [vmem:[#allocation11 + $0x24] sm:$0xf]
          %v1211 = vld [vmem:[#allocation11 + $0x28] sm:$0xf]
          %v1212 = vld [vmem:[#allocation11 + $0x2c] sm:$0xf]
          %v1213 = vld [vmem:[#allocation11 + $0x30] sm:$0xf]
          %v1214 = vld [vmem:[#allocation11 + $0x34] sm:$0xf]
          %v1215 = vld [vmem:[#allocation11 + $0x38] sm:$0xf]
          %v1216 = vld [vmem:[#allocation11 + $0x3c] sm:$0xf]
          %v1217 = vlaneseq
          %v1218 = vshrl.u32 %v1217, 7
          %v1219 = vsub.s32 2, %v1218
          %v1220 = vrot.slane %v1030, %v1219
          %v1237 = vunpack.c.l.b16 %v1201
          %v1238 = vunpack.c.l.b16 %v1202
          %v1239 = vunpack.c.l.b16 %v1203
          %v1240 = vunpack.c.l.b16 %v1204
          %v1241 = vunpack.c.l.b16 %v1205
          %v1242 = vunpack.c.l.b16 %v1206
          %v1243 = vunpack.c.l.b16 %v1207
          %v1244 = vunpack.c.l.b16 %v1208
          %v1245 = vunpack.c.l.b16 %v1209
          %v1246 = vunpack.c.l.b16 %v1210
          %v1247 = vunpack.c.l.b16 %v1211
          %v1248 = vunpack.c.l.b16 %v1212
          %v1249 = vunpack.c.l.b16 %v1213
          %v1250 = vunpack.c.l.b16 %v1214
          %v1251 = vunpack.c.l.b16 %v1215
          %v1252 = vunpack.c.l.b16 %v1216
          %v1253 = vpack.c.b16 %v1238, %v1237
          %v1254 = vpack.c.b16 %v1240, %v1239
          %v1255 = vpack.c.b16 %v1242, %v1241
          %v1256 = vpack.c.b16 %v1244, %v1243
          %v1257 = vpack.c.b16 %v1246, %v1245
          %v1258 = vpack.c.b16 %v1248, %v1247
          %v1259 = vpack.c.b16 %v1250, %v1249
          %v1260 = vpack.c.b16 %v1252, %v1251
          %1269 = vmatprep.subr.bf16.mxu0 0
          %1270 = vmatpush1.bf16.msra.mxu0 %v1253
          %1271 = vmatprep.subr.bf16.mxu0 0
          %1272 = vmatpush1.bf16.msra.mxu0 %v1254
          %1273 = vmatprep.subr.bf16.mxu0 0
          %1274 = vmatpush1.bf16.msra.mxu0 %v1255
          %1275 = vmatprep.subr.bf16.mxu0 0
          %1276 = vmatpush1.bf16.msra.mxu0 %v1256
          %1277 = vmatprep.subr.bf16.mxu0 0
          %1278 = vmatpush1.bf16.msra.mxu0 %v1257
          %1279 = vmatprep.subr.bf16.mxu0 0
          %1280 = vmatpush1.bf16.msra.mxu0 %v1258
          %1281 = vmatprep.subr.bf16.mxu0 0
          %1282 = vmatpush1.bf16.msra.mxu0 %v1259
          %1283 = vmatprep.subr.bf16.mxu0 0
          %1284 = vmatpush1.bf16.msra.mxu0 %v1260
          %1285 = vmatprep.subr.bf16.mxu0 0
          %1286 = vmatpush1.bf16.msra.mxu0 0
          %1287 = vmatprep.subr.bf16.mxu0 0
          %1288 = vmatpush1.bf16.msra.mxu0 0
          %1289 = vmatprep.subr.bf16.mxu0 0
          %1290 = vmatpush1.bf16.msra.mxu0 0
          %1291 = vmatprep.subr.bf16.mxu0 0
          %1292 = vmatpush1.bf16.msra.mxu0 0
          %1293 = vmatprep.subr.bf16.mxu0 0
          %1294 = vmatpush1.bf16.msra.mxu0 0
          %1295 = vmatprep.subr.bf16.mxu0 0
          %1296 = vmatpush1.bf16.msra.mxu0 0
          %1297 = vmatprep.subr.bf16.mxu0 0
          %1298 = vmatpush1.bf16.msra.mxu0 0
          %1299 = vmatprep.subr.bf16.mxu0 0
          %1300 = vmatpush1.bf16.msra.mxu0 0
          %1301 = vmatprep.mubr.bf16.mxu0 0
          %1302 = vmatmul.mubr.bf16.gmra.mrb[0].mxu0 %v1200
          %v1303 = vpop.f32.mrb[0].mxu0
          %v1304 = vadd.f32 %v1220, %v1303
          %v1305 = vpop.f32.mrb[0].mxu0
          %v1306 = vpop.f32.mrb[0].mxu0
          %v1307 = vpop.f32.mrb[0].mxu0
          %1308 = vdwg.mxu0
          %v1309 = vld [vmem:[%s4] sm:$0xff]
          %v1310 = vadd.f32 %v1304, %v1309
          %1311 = vst [vmem:[#allocation2] sm:$0xff] %v1310
        $region152: #{tpu_custom_call.1} parent=91 // pred_fallthru
          _
        %v1312 = vld [vmem:[#allocation2] sm:$0xff]
        %v1313 = vld [vmem:[%s825] sm:$0xf]
        %v1314 = vld [vmem:[%s917] sm:$0xff]
        %v1315 = vld [vmem:[%s917 + $0x8] sm:$0xff]
        %v1316 = vld [vmem:[%s917 + $0x10] sm:$0xff]
        %v1317 = vld [vmem:[%s917 + $0x18] sm:$0xff]
        %v1318 = vpack.c.bf16 %v1312, %v1312
        %v1319 = vld [vmem:[%s854] sm:$0xff]
        %v1320 = vld [vmem:[%s854 + $0x8] sm:$0xf]
        %v1321 = vld [vmem:[%s854 + $0xc] sm:$0xff]
        %v1322 = vld [vmem:[%s854 + $0x14] sm:$0xf]
        %v1323 = vld [vmem:[%s854 + $0x18] sm:$0xff]
        %v1324 = vld [vmem:[%s854 + $0x20] sm:$0xf]
        %v1325 = vld [vmem:[%s854 + $0x24] sm:$0xff]
        %v1326 = vld [vmem:[%s854 + $0x2c] sm:$0xf]
        %v1327 = vld [vmem:[%s854 + $0x30] sm:$0xff]
        %v1328 = vld [vmem:[%s854 + $0x38] sm:$0xf]
        %v1329 = vld [vmem:[%s854 + $0x3c] sm:$0xff]
        %v1330 = vld [vmem:[%s854 + $0x44] sm:$0xf]
        %v1331 = vld [vmem:[%s854 + $0x48] sm:$0xff]
        %v1332 = vld [vmem:[%s854 + $0x50] sm:$0xf]
        %v1333 = vld [vmem:[%s854 + $0x54] sm:$0xff]
        %v1334 = vld [vmem:[%s854 + $0x5c] sm:$0xf]
        %v1335 = vld [vmem:[%s854 + $0x60] sm:$0xff]
        %v1336 = vld [vmem:[%s854 + $0x68] sm:$0xf]
        %v1337 = vld [vmem:[%s854 + $0x6c] sm:$0xff]
        %v1338 = vld [vmem:[%s854 + $0x74] sm:$0xf]
        %v1339 = vld [vmem:[%s854 + $0x78] sm:$0xff]
        %v1340 = vld [vmem:[%s854 + $0x80] sm:$0xf]
        %v1341 = vld [vmem:[%s854 + $0x84] sm:$0xff]
        %v1342 = vld [vmem:[%s854 + $0x8c] sm:$0xf]
        %v1343 = vld [vmem:[%s854 + $0x90] sm:$0xff]
        %v1344 = vld [vmem:[%s854 + $0x98] sm:$0xf]
        %v1345 = vld [vmem:[%s854 + $0x9c] sm:$0xff]
        %v1346 = vld [vmem:[%s854 + $0xa4] sm:$0xf]
        %v1347 = vld [vmem:[%s854 + $0xa8] sm:$0xff]
        %v1348 = vld [vmem:[%s854 + $0xb0] sm:$0xf]
        %v1349 = vld [vmem:[%s854 + $0xb4] sm:$0xff]
        %v1350 = vld [vmem:[%s854 + $0xbc] sm:$0xf]
        %v1351 = vlaneseq
        %v1352 = vshrl.u32 %v1351, 7
        %v1353 = vsub.s32 0, %v1352
        %v1354 = vrot.slane %v1314, %v1353
        %v1355 = vlaneseq
        %v1356 = vshrl.u32 %v1355, 7
        %v1357 = vsub.s32 0, %v1356
        %v1358 = vrot.slane %v1315, %v1357
        %v1359 = vlaneseq
        %v1360 = vshrl.u32 %v1359, 7
        %v1361 = vsub.s32 0, %v1360
        %v1362 = vrot.slane %v1316, %v1361
        %v1395 = vunpack.c.l.b16 %v1319
        %v1396 = vunpack.c.h.b16 %v1319
        %v1397 = vunpack.c.l.b16 %v1320
        %v1398 = vunpack.c.l.b16 %v1321
        %v1399 = vunpack.c.h.b16 %v1321
        %v1400 = vunpack.c.l.b16 %v1322
        %v1401 = vunpack.c.l.b16 %v1323
        %v1402 = vunpack.c.h.b16 %v1323
        %v1403 = vunpack.c.l.b16 %v1324
        %v1404 = vunpack.c.l.b16 %v1325
        %v1405 = vunpack.c.h.b16 %v1325
        %v1406 = vunpack.c.l.b16 %v1326
        %v1407 = vunpack.c.l.b16 %v1327
        %v1408 = vunpack.c.h.b16 %v1327
        %v1409 = vunpack.c.l.b16 %v1328
        %v1410 = vunpack.c.l.b16 %v1329
        %v1411 = vunpack.c.h.b16 %v1329
        %v1412 = vunpack.c.l.b16 %v1330
        %v1413 = vunpack.c.l.b16 %v1331
        %v1414 = vunpack.c.h.b16 %v1331
        %v1415 = vunpack.c.l.b16 %v1332
        %v1416 = vunpack.c.l.b16 %v1333
        %v1417 = vunpack.c.h.b16 %v1333
        %v1418 = vunpack.c.l.b16 %v1334
        %v1419 = vunpack.c.l.b16 %v1335
        %v1420 = vunpack.c.h.b16 %v1335
        %v1421 = vunpack.c.l.b16 %v1336
        %v1422 = vunpack.c.l.b16 %v1337
        %v1423 = vunpack.c.h.b16 %v1337
        %v1424 = vunpack.c.l.b16 %v1338
        %v1425 = vunpack.c.l.b16 %v1339
        %v1426 = vunpack.c.h.b16 %v1339
        %v1427 = vunpack.c.l.b16 %v1340
        %v1428 = vunpack.c.l.b16 %v1341
        %v1429 = vunpack.c.h.b16 %v1341
        %v1430 = vunpack.c.l.b16 %v1342
        %v1431 = vunpack.c.l.b16 %v1343
        %v1432 = vunpack.c.h.b16 %v1343
        %v1433 = vunpack.c.l.b16 %v1344
        %v1434 = vunpack.c.l.b16 %v1345
        %v1435 = vunpack.c.h.b16 %v1345
        %v1436 = vunpack.c.l.b16 %v1346
        %v1437 = vunpack.c.l.b16 %v1347
        %v1438 = vunpack.c.h.b16 %v1347
        %v1439 = vunpack.c.l.b16 %v1348
        %v1440 = vunpack.c.l.b16 %v1349
        %v1441 = vunpack.c.h.b16 %v1349
        %v1442 = vunpack.c.l.b16 %v1350
        %v1443 = vpack.c.b16 %v1398, %v1395
        %v1444 = vpack.c.b16 %v1399, %v1396
        %v1445 = vpack.c.b16 %v1400, %v1397
        %v1446 = vpack.c.b16 %v1404, %v1401
        %v1447 = vpack.c.b16 %v1405, %v1402
        %v1448 = vpack.c.b16 %v1406, %v1403
        %v1449 = vpack.c.b16 %v1410, %v1407
        %v1450 = vpack.c.b16 %v1411, %v1408
        %v1451 = vpack.c.b16 %v1412, %v1409
        %v1452 = vpack.c.b16 %v1416, %v1413
        %v1453 = vpack.c.b16 %v1417, %v1414
        %v1454 = vpack.c.b16 %v1418, %v1415
        %v1455 = vpack.c.b16 %v1422, %v1419
        %v1456 = vpack.c.b16 %v1423, %v1420
        %v1457 = vpack.c.b16 %v1424, %v1421
        %v1458 = vpack.c.b16 %v1428, %v1425
        %v1459 = vpack.c.b16 %v1429, %v1426
        %v1460 = vpack.c.b16 %v1430, %v1427
        %v1461 = vpack.c.b16 %v1434, %v1431
        %v1462 = vpack.c.b16 %v1435, %v1432
        %v1463 = vpack.c.b16 %v1436, %v1433
        %v1464 = vpack.c.b16 %v1440, %v1437
        %v1465 = vpack.c.b16 %v1441, %v1438
        %v1466 = vpack.c.b16 %v1442, %v1439
        %1491 = vmatprep.subr.bf16.mxu0 %v1444
        %1492 = vmatpush1.bf16.msra.mxu0 %v1443
        %1493 = vmatprep.subr.bf16.mxu0 %v1447
        %1494 = vmatpush1.bf16.msra.mxu0 %v1446
        %1495 = vmatprep.subr.bf16.mxu0 %v1450
        %1496 = vmatpush1.bf16.msra.mxu0 %v1449
        %1497 = vmatprep.subr.bf16.mxu0 %v1453
        %1498 = vmatpush1.bf16.msra.mxu0 %v1452
        %1499 = vmatprep.subr.bf16.mxu0 %v1456
        %1500 = vmatpush1.bf16.msra.mxu0 %v1455
        %1501 = vmatprep.subr.bf16.mxu0 %v1459
        %1502 = vmatpush1.bf16.msra.mxu0 %v1458
        %1503 = vmatprep.subr.bf16.mxu0 %v1462
        %1504 = vmatpush1.bf16.msra.mxu0 %v1461
        %1505 = vmatprep.subr.bf16.mxu0 %v1465
        %1506 = vmatpush1.bf16.msra.mxu0 %v1464
        %1507 = vmatprep.subr.bf16.mxu0 0
        %1508 = vmatpush1.bf16.msra.mxu0 0
        %1509 = vmatprep.subr.bf16.mxu0 0
        %1510 = vmatpush1.bf16.msra.mxu0 0
        %1511 = vmatprep.subr.bf16.mxu0 0
        %1512 = vmatpush1.bf16.msra.mxu0 0
        %1513 = vmatprep.subr.bf16.mxu0 0
        %1514 = vmatpush1.bf16.msra.mxu0 0
        %1515 = vmatprep.subr.bf16.mxu0 0
        %1516 = vmatpush1.bf16.msra.mxu0 0
        %1517 = vmatprep.subr.bf16.mxu0 0
        %1518 = vmatpush1.bf16.msra.mxu0 0
        %1519 = vmatprep.subr.bf16.mxu0 0
        %1520 = vmatpush1.bf16.msra.mxu0 0
        %1521 = vmatprep.subr.bf16.mxu0 0
        %1522 = vmatpush1.bf16.msra.mxu0 0
        %1523 = vmatprep.mubr.bf16.mxu0 0
        %1524 = vmatmul.mubr.bf16.gmra.mrb[0].mxu0 %v1318
        %v1525 = vpop.f32.mrb[0].mxu0
        %v1526 = vadd.f32 %v1354, %v1525
        %v1527 = vpop.f32.mrb[0].mxu0
        %v1528 = vadd.f32 %v1358, %v1527
        %v1529 = vpop.f32.mrb[0].mxu0
        %v1530 = vpop.f32.mrb[0].mxu0
        %1531 = vdwg.mxu0
        %1532 = vmatprep.subr.bf16.mxu0 0
        %1533 = vmatpush1.bf16.msra.mxu0 %v1445
        %1534 = vmatprep.subr.bf16.mxu0 0
        %1535 = vmatpush1.bf16.msra.mxu0 %v1448
        %1536 = vmatprep.subr.bf16.mxu0 0
        %1537 = vmatpush1.bf16.msra.mxu0 %v1451
        %1538 = vmatprep.subr.bf16.mxu0 0
        %1539 = vmatpush1.bf16.msra.mxu0 %v1454
        %1540 = vmatprep.subr.bf16.mxu0 0
        %1541 = vmatpush1.bf16.msra.mxu0 %v1457
        %1542 = vmatprep.subr.bf16.mxu0 0
        %1543 = vmatpush1.bf16.msra.mxu0 %v1460
        %1544 = vmatprep.subr.bf16.mxu0 0
        %1545 = vmatpush1.bf16.msra.mxu0 %v1463
        %1546 = vmatprep.subr.bf16.mxu0 0
        %1547 = vmatpush1.bf16.msra.mxu0 %v1466
        %1548 = vmatprep.subr.bf16.mxu0 0
        %1549 = vmatpush1.bf16.msra.mxu0 0
        %1550 = vmatprep.subr.bf16.mxu0 0
        %1551 = vmatpush1.bf16.msra.mxu0 0
        %1552 = vmatprep.subr.bf16.mxu0 0
        %1553 = vmatpush1.bf16.msra.mxu0 0
        %1554 = vmatprep.subr.bf16.mxu0 0
        %1555 = vmatpush1.bf16.msra.mxu0 0
        %1556 = vmatprep.subr.bf16.mxu0 0
        %1557 = vmatpush1.bf16.msra.mxu0 0
        %1558 = vmatprep.subr.bf16.mxu0 0
        %1559 = vmatpush1.bf16.msra.mxu0 0
        %1560 = vmatprep.subr.bf16.mxu0 0
        %1561 = vmatpush1.bf16.msra.mxu0 0
        %1562 = vmatprep.subr.bf16.mxu0 0
        %1563 = vmatpush1.bf16.msra.mxu0 0
        %1564 = vmatprep.mubr.bf16.mxu0 0
        %1565 = vmatmul.mubr.bf16.gmra.mrb[0].mxu0 %v1318
        %v1566 = vpop.f32.mrb[0].mxu0
        %v1567 = vadd.f32 %v1362, %v1566
        %v1568 = vpop.f32.mrb[0].mxu0
        %v1569 = vpop.f32.mrb[0].mxu0
        %v1570 = vpop.f32.mrb[0].mxu0
        %1571 = vdwg.mxu0
        %v1572 = vpack.c.bf16 %v1526, %v1526
        %v1573 = vpack.c.bf16 %v1528, %v1528
        %v1574 = vpack.c.bf16 %v1567, %v1567
        %v1575 = vld [vmem:[%s1024] sm:$0x1]
        %v1576 = vlaneseq
        %v1577 = vshrl.u32 %v1576, 7
        %v1578 = vlaneseq
        %v1579 = vand.u32 %v1578, 127
        %vm1580 = vcmp.gt.s32.totalorder %v1579, %v1577
        %v1581 = vsel %vm1580, -1e+09, 0.0
        %v1583 = vlaneseq
        %v1584 = vshrl.u32 %v1583, 7
        %v1585 = vsub.s32 0, %v1584
        %v1586 = vrot.slane %v1575, %v1585
        %v1588 = vadd.f32 %v1581, %v1586
        %vm1589 = vcmask 261120
        %v1591 = vsel %vm1589, %v1572, 0
        %v1594 = vsel %vm1589, %v1573, 0
        %1596 = vmatprep.subr.bf16.mxu0 0
        %1597 = vmatpush1.bf16.xpose.msra.mxu0 %v1594
        %1598 = vmatprep.subr.bf16.mxu0 0
        %1599 = vmatpush1.bf16.xpose.msra.mxu0 0
        %1600 = vmatprep.subr.bf16.mxu0 0
        %1601 = vmatpush1.bf16.xpose.msra.mxu0 0
        %1602 = vmatprep.subr.bf16.mxu0 0
        %1603 = vmatpush1.bf16.xpose.msra.mxu0 0
        %1604 = vmatprep.subr.bf16.mxu0 0
        %1605 = vmatpush1.bf16.xpose.msra.mxu0 0
        %1606 = vmatprep.subr.bf16.mxu0 0
        %1607 = vmatpush1.bf16.xpose.msra.mxu0 0
        %1608 = vmatprep.subr.bf16.mxu0 0
        %1609 = vmatpush1.bf16.xpose.msra.mxu0 0
        %1610 = vmatprep.subr.bf16.mxu0 0
        %1611 = vmatpush1.bf16.xpose.msra.mxu0 0
        %1612 = vmatprep.subr.bf16.mxu0 0
        %1613 = vmatpush1.bf16.xpose.msra.mxu0 0
        %1614 = vmatprep.subr.bf16.mxu0 0
        %1615 = vmatpush1.bf16.xpose.msra.mxu0 0
        %1616 = vmatprep.subr.bf16.mxu0 0
        %1617 = vmatpush1.bf16.xpose.msra.mxu0 0
        %1618 = vmatprep.subr.bf16.mxu0 0
        %1619 = vmatpush1.bf16.xpose.msra.mxu0 0
        %1620 = vmatprep.subr.bf16.mxu0 0
        %1621 = vmatpush1.bf16.xpose.msra.mxu0 0
        %1622 = vmatprep.subr.bf16.mxu0 0
        %1623 = vmatpush1.bf16.xpose.msra.mxu0 0
        %1624 = vmatprep.subr.bf16.mxu0 0
        %1625 = vmatpush1.bf16.xpose.msra.mxu0 0
        %1626 = vmatprep.subr.bf16.mxu0 0
        %1627 = vmatpush1.bf16.xpose.msra.mxu0 0
        %1628 = vmatprep.mubr.bf16.mxu0 0
        %1629 = vmatmul.mubr.bf16.gmra.mrb[0].mxu0 %v1591
        %v1630 = vpop.f32.mrb[0].mxu0
        %v1631 = vadd.f32 %v1588, %v1630
        %v1632 = vpop.f32.mrb[0].mxu0
        %v1633 = vpop.f32.mrb[0].mxu0
        %v1634 = vpop.f32.mrb[0].mxu0
        %1635 = vdwg.mxu0
        %vm1636 = vcmask 64512
        %v1637 = vsel %vm1636, %v1631, -inf
        %1638 = vmax.xlane.f32.xlu0 %v1637
        %v1639 = vpop.xlane.xlu0 %1638
        %v1640 = vsub.f32 %v1631, %v1639
        %v1641 = vmul.f32 %v1640, 1.442695
        %v1642 = vpow.pop %v1641
        %v1643 = vsel %vm1636, %v1642, 0.0
        %1644 = vadd.xlane.f32.xlu0 %v1643
        %v1645 = vpop.xlane.xlu0 %1644
        %v1646 = vrcp.pop %v1645
        %v1647 = vmul.f32 %v1642, %v1646
        %v1648 = vpack.c.bf16 %v1647, %v1647
        %v1650 = vsel %vm1636, %v1648, 0
        %vm1652 = vcmask 1043456
        %v1654 = vsel %vm1652, %v1574, 0
        %1656 = vmatprep.subr.bf16.mxu0 0
        %1657 = vmatpush1.bf16.msra.mxu0 %v1654
        %1658 = vmatprep.subr.bf16.mxu0 0
        %1659 = vmatpush1.bf16.msra.mxu0 0
        %1660 = vmatprep.subr.bf16.mxu0 0
        %1661 = vmatpush1.bf16.msra.mxu0 0
        %1662 = vmatprep.subr.bf16.mxu0 0
        %1663 = vmatpush1.bf16.msra.mxu0 0
        %1664 = vmatprep.subr.bf16.mxu0 0
        %1665 = vmatpush1.bf16.msra.mxu0 0
        %1666 = vmatprep.subr.bf16.mxu0 0
        %1667 = vmatpush1.bf16.msra.mxu0 0
        %1668 = vmatprep.subr.bf16.mxu0 0
        %1669 = vmatpush1.bf16.msra.mxu0 0
        %1670 = vmatprep.subr.bf16.mxu0 0
        %1671 = vmatpush1.bf16.msra.mxu0 0
        %1672 = vmatprep.subr.bf16.mxu0 0
        %1673 = vmatpush1.bf16.msra.mxu0 0
        %1674 = vmatprep.subr.bf16.mxu0 0
        %1675 = vmatpush1.bf16.msra.mxu0 0
        %1676 = vmatprep.subr.bf16.mxu0 0
        %1677 = vmatpush1.bf16.msra.mxu0 0
        %1678 = vmatprep.subr.bf16.mxu0 0
        %1679 = vmatpush1.bf16.msra.mxu0 0
        %1680 = vmatprep.subr.bf16.mxu0 0
        %1681 = vmatpush1.bf16.msra.mxu0 0
        %1682 = vmatprep.subr.bf16.mxu0 0
        %1683 = vmatpush1.bf16.msra.mxu0 0
        %1684 = vmatprep.subr.bf16.mxu0 0
        %1685 = vmatpush1.bf16.msra.mxu0 0
        %1686 = vmatprep.subr.bf16.mxu0 0
        %1687 = vmatpush1.bf16.msra.mxu0 0
        %1688 = vmatprep.mubr.bf16.mxu0 0
        %1689 = vmatmul.mubr.bf16.gmra.mrb[0].mxu0 %v1650
        %v1690 = vpop.f32.mrb[0].mxu0
        %v1691 = vadd.f32 0.0, %v1690
        %v1692 = vpop.f32.mrb[0].mxu0
        %v1693 = vpop.f32.mrb[0].mxu0
        %v1694 = vpop.f32.mrb[0].mxu0
        %1695 = vdwg.mxu0
        %1697 = vrot.lane.b32.xlu0 %v1572, 96
        %v1698 = vpop.permute.xlu0 %1697
        %1700 = vrot.lane.b32.xlu0 %v1573, 96
        %v1701 = vpop.permute.xlu0 %1700
        %v1703 = vsel %vm1589, %v1698, 0
        %v1706 = vsel %vm1589, %v1701, 0
        %1708 = vmatprep.subr.bf16.mxu0 0
        %1709 = vmatpush1.bf16.xpose.msra.mxu0 %v1706
        %1710 = vmatprep.subr.bf16.mxu0 0
        %1711 = vmatpush1.bf16.xpose.msra.mxu0 0
        %1712 = vmatprep.subr.bf16.mxu0 0
        %1713 = vmatpush1.bf16.xpose.msra.mxu0 0
        %1714 = vmatprep.subr.bf16.mxu0 0
        %1715 = vmatpush1.bf16.xpose.msra.mxu0 0
        %1716 = vmatprep.subr.bf16.mxu0 0
        %1717 = vmatpush1.bf16.xpose.msra.mxu0 0
        %1718 = vmatprep.subr.bf16.mxu0 0
        %1719 = vmatpush1.bf16.xpose.msra.mxu0 0
        %1720 = vmatprep.subr.bf16.mxu0 0
        %1721 = vmatpush1.bf16.xpose.msra.mxu0 0
        %1722 = vmatprep.subr.bf16.mxu0 0
        %1723 = vmatpush1.bf16.xpose.msra.mxu0 0
        %1724 = vmatprep.subr.bf16.mxu0 0
        %1725 = vmatpush1.bf16.xpose.msra.mxu0 0
        %1726 = vmatprep.subr.bf16.mxu0 0
        %1727 = vmatpush1.bf16.xpose.msra.mxu0 0
        %1728 = vmatprep.subr.bf16.mxu0 0
        %1729 = vmatpush1.bf16.xpose.msra.mxu0 0
        %1730 = vmatprep.subr.bf16.mxu0 0
        %1731 = vmatpush1.bf16.xpose.msra.mxu0 0
        %1732 = vmatprep.subr.bf16.mxu0 0
        %1733 = vmatpush1.bf16.xpose.msra.mxu0 0
        %1734 = vmatprep.subr.bf16.mxu0 0
        %1735 = vmatpush1.bf16.xpose.msra.mxu0 0
        %1736 = vmatprep.subr.bf16.mxu0 0
        %1737 = vmatpush1.bf16.xpose.msra.mxu0 0
        %1738 = vmatprep.subr.bf16.mxu0 0
        %1739 = vmatpush1.bf16.xpose.msra.mxu0 0
        %1740 = vmatprep.mubr.bf16.mxu0 0
        %1741 = vmatmul.mubr.bf16.gmra.mrb[0].mxu0 %v1703
        %v1742 = vpop.f32.mrb[0].mxu0
        %v1743 = vadd.f32 %v1588, %v1742
        %v1744 = vpop.f32.mrb[0].mxu0
        %v1745 = vpop.f32.mrb[0].mxu0
        %v1746 = vpop.f32.mrb[0].mxu0
        %1747 = vdwg.mxu0
        %v1748 = vsel %vm1636, %v1743, -inf
        %1749 = vmax.xlane.f32.xlu0 %v1748
        %v1750 = vpop.xlane.xlu0 %1749
        %v1751 = vsub.f32 %v1743, %v1750
        %v1752 = vmul.f32 %v1751, 1.442695
        %v1753 = vpow.pop %v1752
        %v1754 = vsel %vm1636, %v1753, 0.0
        %1755 = vadd.xlane.f32.xlu0 %v1754
        %v1756 = vpop.xlane.xlu0 %1755
        %v1757 = vrcp.pop %v1756
        %v1758 = vmul.f32 %v1753, %v1757
        %v1759 = vpack.c.bf16 %v1758, %v1758
        %1761 = vrot.lane.b32.xlu0 %v1574, 96
        %v1762 = vpop.permute.xlu0 %1761
        %v1764 = vsel %vm1636, %v1759, 0
        %v1767 = vsel %vm1652, %v1762, 0
        %1769 = vmatprep.subr.bf16.mxu0 0
        %1770 = vmatpush1.bf16.msra.mxu0 %v1767
        %1771 = vmatprep.subr.bf16.mxu0 0
        %1772 = vmatpush1.bf16.msra.mxu0 0
        %1773 = vmatprep.subr.bf16.mxu0 0
        %1774 = vmatpush1.bf16.msra.mxu0 0
        %1775 = vmatprep.subr.bf16.mxu0 0
        %1776 = vmatpush1.bf16.msra.mxu0 0
        %1777 = vmatprep.subr.bf16.mxu0 0
        %1778 = vmatpush1.bf16.msra.mxu0 0
        %1779 = vmatprep.subr.bf16.mxu0 0
        %1780 = vmatpush1.bf16.msra.mxu0 0
        %1781 = vmatprep.subr.bf16.mxu0 0
        %1782 = vmatpush1.bf16.msra.mxu0 0
        %1783 = vmatprep.subr.bf16.mxu0 0
        %1784 = vmatpush1.bf16.msra.mxu0 0
        %1785 = vmatprep.subr.bf16.mxu0 0
        %1786 = vmatpush1.bf16.msra.mxu0 0
        %1787 = vmatprep.subr.bf16.mxu0 0
        %1788 = vmatpush1.bf16.msra.mxu0 0
        %1789 = vmatprep.subr.bf16.mxu0 0
        %1790 = vmatpush1.bf16.msra.mxu0 0
        %1791 = vmatprep.subr.bf16.mxu0 0
        %1792 = vmatpush1.bf16.msra.mxu0 0
        %1793 = vmatprep.subr.bf16.mxu0 0
        %1794 = vmatpush1.bf16.msra.mxu0 0
        %1795 = vmatprep.subr.bf16.mxu0 0
        %1796 = vmatpush1.bf16.msra.mxu0 0
        %1797 = vmatprep.subr.bf16.mxu0 0
        %1798 = vmatpush1.bf16.msra.mxu0 0
        %1799 = vmatprep.subr.bf16.mxu0 0
        %1800 = vmatpush1.bf16.msra.mxu0 0
        %1801 = vmatprep.mubr.bf16.mxu0 0
        %1802 = vmatmul.mubr.bf16.gmra.mrb[0].mxu0 %v1764
        %v1803 = vpop.f32.mrb[0].mxu0
        %v1804 = vadd.f32 0.0, %v1803
        %v1805 = vpop.f32.mrb[0].mxu0
        %v1806 = vpop.f32.mrb[0].mxu0
        %v1807 = vpop.f32.mrb[0].mxu0
        %1808 = vdwg.mxu0
        %1809 = vrot.lane.b32.xlu0 %v1572, 64
        %v1810 = vpop.permute.xlu0 %1809
        %1811 = vrot.lane.b32.xlu0 %v1573, 64
        %v1812 = vpop.permute.xlu0 %1811
        %v1814 = vsel %vm1589, %v1810, 0
        %v1817 = vsel %vm1589, %v1812, 0
        %1819 = vmatprep.subr.bf16.mxu0 0
        %1820 = vmatpush1.bf16.xpose.msra.mxu0 %v1817
        %1821 = vmatprep.subr.bf16.mxu0 0
        %1822 = vmatpush1.bf16.xpose.msra.mxu0 0
        %1823 = vmatprep.subr.bf16.mxu0 0
        %1824 = vmatpush1.bf16.xpose.msra.mxu0 0
        %1825 = vmatprep.subr.bf16.mxu0 0
        %1826 = vmatpush1.bf16.xpose.msra.mxu0 0
        %1827 = vmatprep.subr.bf16.mxu0 0
        %1828 = vmatpush1.bf16.xpose.msra.mxu0 0
        %1829 = vmatprep.subr.bf16.mxu0 0
        %1830 = vmatpush1.bf16.xpose.msra.mxu0 0
        %1831 = vmatprep.subr.bf16.mxu0 0
        %1832 = vmatpush1.bf16.xpose.msra.mxu0 0
        %1833 = vmatprep.subr.bf16.mxu0 0
        %1834 = vmatpush1.bf16.xpose.msra.mxu0 0
        %1835 = vmatprep.subr.bf16.mxu0 0
        %1836 = vmatpush1.bf16.xpose.msra.mxu0 0
        %1837 = vmatprep.subr.bf16.mxu0 0
        %1838 = vmatpush1.bf16.xpose.msra.mxu0 0
        %1839 = vmatprep.subr.bf16.mxu0 0
        %1840 = vmatpush1.bf16.xpose.msra.mxu0 0
        %1841 = vmatprep.subr.bf16.mxu0 0
        %1842 = vmatpush1.bf16.xpose.msra.mxu0 0
        %1843 = vmatprep.subr.bf16.mxu0 0
        %1844 = vmatpush1.bf16.xpose.msra.mxu0 0
        %1845 = vmatprep.subr.bf16.mxu0 0
        %1846 = vmatpush1.bf16.xpose.msra.mxu0 0
        %1847 = vmatprep.subr.bf16.mxu0 0
        %1848 = vmatpush1.bf16.xpose.msra.mxu0 0
        %1849 = vmatprep.subr.bf16.mxu0 0
        %1850 = vmatpush1.bf16.xpose.msra.mxu0 0
        %1851 = vmatprep.mubr.bf16.mxu0 0
        %1852 = vmatmul.mubr.bf16.gmra.mrb[0].mxu0 %v1814
        %v1853 = vpop.f32.mrb[0].mxu0
        %v1854 = vadd.f32 %v1588, %v1853
        %v1855 = vpop.f32.mrb[0].mxu0
        %v1856 = vpop.f32.mrb[0].mxu0
        %v1857 = vpop.f32.mrb[0].mxu0
        %1858 = vdwg.mxu0
        %v1859 = vsel %vm1636, %v1854, -inf
        %1860 = vmax.xlane.f32.xlu0 %v1859
        %v1861 = vpop.xlane.xlu0 %1860
        %v1862 = vsub.f32 %v1854, %v1861
        %v1863 = vmul.f32 %v1862, 1.442695
        %v1864 = vpow.pop %v1863
        %v1865 = vsel %vm1636, %v1864, 0.0
        %1866 = vadd.xlane.f32.xlu0 %v1865
        %v1867 = vpop.xlane.xlu0 %1866
        %v1868 = vrcp.pop %v1867
        %v1869 = vmul.f32 %v1864, %v1868
        %v1870 = vpack.c.bf16 %v1869, %v1869
        %1871 = vrot.lane.b32.xlu0 %v1574, 64
        %v1872 = vpop.permute.xlu0 %1871
        %v1874 = vsel %vm1636, %v1870, 0
        %v1877 = vsel %vm1652, %v1872, 0
        %1879 = vmatprep.subr.bf16.mxu0 0
        %1880 = vmatpush1.bf16.msra.mxu0 %v1877
        %1881 = vmatprep.subr.bf16.mxu0 0
        %1882 = vmatpush1.bf16.msra.mxu0 0
        %1883 = vmatprep.subr.bf16.mxu0 0
        %1884 = vmatpush1.bf16.msra.mxu0 0
        %1885 = vmatprep.subr.bf16.mxu0 0
        %1886 = vmatpush1.bf16.msra.mxu0 0
        %1887 = vmatprep.subr.bf16.mxu0 0
        %1888 = vmatpush1.bf16.msra.mxu0 0
        %1889 = vmatprep.subr.bf16.mxu0 0
        %1890 = vmatpush1.bf16.msra.mxu0 0
        %1891 = vmatprep.subr.bf16.mxu0 0
        %1892 = vmatpush1.bf16.msra.mxu0 0
        %1893 = vmatprep.subr.bf16.mxu0 0
        %1894 = vmatpush1.bf16.msra.mxu0 0
        %1895 = vmatprep.subr.bf16.mxu0 0
        %1896 = vmatpush1.bf16.msra.mxu0 0
        %1897 = vmatprep.subr.bf16.mxu0 0
        %1898 = vmatpush1.bf16.msra.mxu0 0
        %1899 = vmatprep.subr.bf16.mxu0 0
        %1900 = vmatpush1.bf16.msra.mxu0 0
        %1901 = vmatprep.subr.bf16.mxu0 0
        %1902 = vmatpush1.bf16.msra.mxu0 0
        %1903 = vmatprep.subr.bf16.mxu0 0
        %1904 = vmatpush1.bf16.msra.mxu0 0
        %1905 = vmatprep.subr.bf16.mxu0 0
        %1906 = vmatpush1.bf16.msra.mxu0 0
        %1907 = vmatprep.subr.bf16.mxu0 0
        %1908 = vmatpush1.bf16.msra.mxu0 0
        %1909 = vmatprep.subr.bf16.mxu0 0
        %1910 = vmatpush1.bf16.msra.mxu0 0
        %1911 = vmatprep.mubr.bf16.mxu0 0
        %1912 = vmatmul.mubr.bf16.gmra.mrb[0].mxu0 %v1874
        %v1913 = vpop.f32.mrb[0].mxu0
        %v1914 = vadd.f32 0.0, %v1913
        %v1915 = vpop.f32.mrb[0].mxu0
        %v1916 = vpop.f32.mrb[0].mxu0
        %v1917 = vpop.f32.mrb[0].mxu0
        %1918 = vdwg.mxu0
        %1919 = vrot.lane.b32.xlu0 %v1572, 32
        %v1920 = vpop.permute.xlu0 %1919
        %1921 = vrot.lane.b32.xlu0 %v1573, 32
        %v1922 = vpop.permute.xlu0 %1921
        %v1924 = vsel %vm1589, %v1920, 0
        %v1927 = vsel %vm1589, %v1922, 0
        %1929 = vmatprep.subr.bf16.mxu0 0
        %1930 = vmatpush1.bf16.xpose.msra.mxu0 %v1927
        %1931 = vmatprep.subr.bf16.mxu0 0
        %1932 = vmatpush1.bf16.xpose.msra.mxu0 0
        %1933 = vmatprep.subr.bf16.mxu0 0
        %1934 = vmatpush1.bf16.xpose.msra.mxu0 0
        %1935 = vmatprep.subr.bf16.mxu0 0
        %1936 = vmatpush1.bf16.xpose.msra.mxu0 0
        %1937 = vmatprep.subr.bf16.mxu0 0
        %1938 = vmatpush1.bf16.xpose.msra.mxu0 0
        %1939 = vmatprep.subr.bf16.mxu0 0
        %1940 = vmatpush1.bf16.xpose.msra.mxu0 0
        %1941 = vmatprep.subr.bf16.mxu0 0
        %1942 = vmatpush1.bf16.xpose.msra.mxu0 0
        %1943 = vmatprep.subr.bf16.mxu0 0
        %1944 = vmatpush1.bf16.xpose.msra.mxu0 0
        %1945 = vmatprep.subr.bf16.mxu0 0
        %1946 = vmatpush1.bf16.xpose.msra.mxu0 0
        %1947 = vmatprep.subr.bf16.mxu0 0
        %1948 = vmatpush1.bf16.xpose.msra.mxu0 0
        %1949 = vmatprep.subr.bf16.mxu0 0
        %1950 = vmatpush1.bf16.xpose.msra.mxu0 0
        %1951 = vmatprep.subr.bf16.mxu0 0
        %1952 = vmatpush1.bf16.xpose.msra.mxu0 0
        %1953 = vmatprep.subr.bf16.mxu0 0
        %1954 = vmatpush1.bf16.xpose.msra.mxu0 0
        %1955 = vmatprep.subr.bf16.mxu0 0
        %1956 = vmatpush1.bf16.xpose.msra.mxu0 0
        %1957 = vmatprep.subr.bf16.mxu0 0
        %1958 = vmatpush1.bf16.xpose.msra.mxu0 0
        %1959 = vmatprep.subr.bf16.mxu0 0
        %1960 = vmatpush1.bf16.xpose.msra.mxu0 0
        %1961 = vmatprep.mubr.bf16.mxu0 0
        %1962 = vmatmul.mubr.bf16.gmra.mrb[0].mxu0 %v1924
        %v1963 = vpop.f32.mrb[0].mxu0
        %v1964 = vadd.f32 %v1588, %v1963
        %v1965 = vpop.f32.mrb[0].mxu0
        %v1966 = vpop.f32.mrb[0].mxu0
        %v1967 = vpop.f32.mrb[0].mxu0
        %1968 = vdwg.mxu0
        %v1969 = vsel %vm1636, %v1964, -inf
        %1970 = vmax.xlane.f32.xlu0 %v1969
        %v1971 = vpop.xlane.xlu0 %1970
        %v1972 = vsub.f32 %v1964, %v1971
        %v1973 = vmul.f32 %v1972, 1.442695
        %v1974 = vpow.pop %v1973
        %v1975 = vsel %vm1636, %v1974, 0.0
        %1976 = vadd.xlane.f32.xlu0 %v1975
        %v1977 = vpop.xlane.xlu0 %1976
        %v1978 = vrcp.pop %v1977
        %v1979 = vmul.f32 %v1974, %v1978
        %v1980 = vpack.c.bf16 %v1979, %v1979
        %1981 = vrot.lane.b32.xlu0 %v1574, 32
        %v1982 = vpop.permute.xlu0 %1981
        %v1984 = vsel %vm1636, %v1980, 0
        %v1987 = vsel %vm1652, %v1982, 0
        %1989 = vmatprep.subr.bf16.mxu0 0
        %1990 = vmatpush1.bf16.msra.mxu0 %v1987
        %1991 = vmatprep.subr.bf16.mxu0 0
        %1992 = vmatpush1.bf16.msra.mxu0 0
        %1993 = vmatprep.subr.bf16.mxu0 0
        %1994 = vmatpush1.bf16.msra.mxu0 0
        %1995 = vmatprep.subr.bf16.mxu0 0
        %1996 = vmatpush1.bf16.msra.mxu0 0
        %1997 = vmatprep.subr.bf16.mxu0 0
        %1998 = vmatpush1.bf16.msra.mxu0 0
        %1999 = vmatprep.subr.bf16.mxu0 0
        %2000 = vmatpush1.bf16.msra.mxu0 0
        %2001 = vmatprep.subr.bf16.mxu0 0
        %2002 = vmatpush1.bf16.msra.mxu0 0
        %2003 = vmatprep.subr.bf16.mxu0 0
        %2004 = vmatpush1.bf16.msra.mxu0 0
        %2005 = vmatprep.subr.bf16.mxu0 0
        %2006 = vmatpush1.bf16.msra.mxu0 0
        %2007 = vmatprep.subr.bf16.mxu0 0
        %2008 = vmatpush1.bf16.msra.mxu0 0
        %2009 = vmatprep.subr.bf16.mxu0 0
        %2010 = vmatpush1.bf16.msra.mxu0 0
        %2011 = vmatprep.subr.bf16.mxu0 0
        %2012 = vmatpush1.bf16.msra.mxu0 0
        %2013 = vmatprep.subr.bf16.mxu0 0
        %2014 = vmatpush1.bf16.msra.mxu0 0
        %2015 = vmatprep.subr.bf16.mxu0 0
        %2016 = vmatpush1.bf16.msra.mxu0 0
        %2017 = vmatprep.subr.bf16.mxu0 0
        %2018 = vmatpush1.bf16.msra.mxu0 0
        %2019 = vmatprep.subr.bf16.mxu0 0
        %2020 = vmatpush1.bf16.msra.mxu0 0
        %2021 = vmatprep.mubr.bf16.mxu0 0
        %2022 = vmatmul.mubr.bf16.gmra.mrb[0].mxu0 %v1984
        %v2023 = vpop.f32.mrb[0].mxu0
        %v2024 = vadd.f32 0.0, %v2023
        %v2025 = vpop.f32.mrb[0].mxu0
        %v2026 = vpop.f32.mrb[0].mxu0
        %v2027 = vpop.f32.mrb[0].mxu0
        %2028 = vdwg.mxu0
        %2030 = vrot.lane.b32.xlu0 %v1804, 32
        %v2031 = vpop.permute.xlu0 %2030
        %2034 = vrot.lane.b32.xlu0 %v1914, 64
        %v2035 = vpop.permute.xlu0 %2034
        %2038 = vrot.lane.b32.xlu0 %v2024, 96
        %v2039 = vpop.permute.xlu0 %2038
        %v2041 = vsel %vm1589, %v1691, %v2031
        %vm2042 = vcmask 523264
        %v2043 = vsel %vm2042, %v2041, %v2035
        %vm2044 = vcmask 785408
        %v2045 = vsel %vm2044, %v2043, %v2039
        %v2046 = vpack.c.bf16 %v2045, %v2045
        %v2047 = vld [vmem:[%s863] sm:$0xf]
        %v2048 = vld [vmem:[%s863 + $0x4] sm:$0xf]
        %v2049 = vld [vmem:[%s863 + $0x8] sm:$0xf]
        %v2050 = vld [vmem:[%s863 + $0xc] sm:$0xf]
        %v2051 = vld [vmem:[%s863 + $0x10] sm:$0xf]
        %v2052 = vld [vmem:[%s863 + $0x14] sm:$0xf]
        %v2053 = vld [vmem:[%s863 + $0x18] sm:$0xf]
        %v2054 = vld [vmem:[%s863 + $0x1c] sm:$0xf]
        %v2055 = vld [vmem:[%s863 + $0x20] sm:$0xf]
        %v2056 = vld [vmem:[%s863 + $0x24] sm:$0xf]
        %v2057 = vld [vmem:[%s863 + $0x28] sm:$0xf]
        %v2058 = vld [vmem:[%s863 + $0x2c] sm:$0xf]
        %v2059 = vld [vmem:[%s863 + $0x30] sm:$0xf]
        %v2060 = vld [vmem:[%s863 + $0x34] sm:$0xf]
        %v2061 = vld [vmem:[%s863 + $0x38] sm:$0xf]
        %v2062 = vld [vmem:[%s863 + $0x3c] sm:$0xf]
        %v2063 = vlaneseq
        %v2064 = vshrl.u32 %v2063, 7
        %v2065 = vsub.s32 1, %v2064
        %v2066 = vrot.slane %v1314, %v2065
        %v2083 = vunpack.c.l.b16 %v2047
        %v2084 = vunpack.c.l.b16 %v2048
        %v2085 = vunpack.c.l.b16 %v2049
        %v2086 = vunpack.c.l.b16 %v2050
        %v2087 = vunpack.c.l.b16 %v2051
        %v2088 = vunpack.c.l.b16 %v2052
        %v2089 = vunpack.c.l.b16 %v2053
        %v2090 = vunpack.c.l.b16 %v2054
        %v2091 = vunpack.c.l.b16 %v2055
        %v2092 = vunpack.c.l.b16 %v2056
        %v2093 = vunpack.c.l.b16 %v2057
        %v2094 = vunpack.c.l.b16 %v2058
        %v2095 = vunpack.c.l.b16 %v2059
        %v2096 = vunpack.c.l.b16 %v2060
        %v2097 = vunpack.c.l.b16 %v2061
        %v2098 = vunpack.c.l.b16 %v2062
        %v2099 = vpack.c.b16 %v2084, %v2083
        %v2100 = vpack.c.b16 %v2086, %v2085
        %v2101 = vpack.c.b16 %v2088, %v2087
        %v2102 = vpack.c.b16 %v2090, %v2089
        %v2103 = vpack.c.b16 %v2092, %v2091
        %v2104 = vpack.c.b16 %v2094, %v2093
        %v2105 = vpack.c.b16 %v2096, %v2095
        %v2106 = vpack.c.b16 %v2098, %v2097
        %2115 = vmatprep.subr.bf16.mxu0 0
        %2116 = vmatpush1.bf16.msra.mxu0 %v2099
        %2117 = vmatprep.subr.bf16.mxu0 0
        %2118 = vmatpush1.bf16.msra.mxu0 %v2100
        %2119 = vmatprep.subr.bf16.mxu0 0
        %2120 = vmatpush1.bf16.msra.mxu0 %v2101
        %2121 = vmatprep.subr.bf16.mxu0 0
        %2122 = vmatpush1.bf16.msra.mxu0 %v2102
        %2123 = vmatprep.subr.bf16.mxu0 0
        %2124 = vmatpush1.bf16.msra.mxu0 %v2103
        %2125 = vmatprep.subr.bf16.mxu0 0
        %2126 = vmatpush1.bf16.msra.mxu0 %v2104
        %2127 = vmatprep.subr.bf16.mxu0 0
        %2128 = vmatpush1.bf16.msra.mxu0 %v2105
        %2129 = vmatprep.subr.bf16.mxu0 0
        %2130 = vmatpush1.bf16.msra.mxu0 %v2106
        %2131 = vmatprep.subr.bf16.mxu0 0
        %2132 = vmatpush1.bf16.msra.mxu0 0
        %2133 = vmatprep.subr.bf16.mxu0 0
        %2134 = vmatpush1.bf16.msra.mxu0 0
        %2135 = vmatprep.subr.bf16.mxu0 0
        %2136 = vmatpush1.bf16.msra.mxu0 0
        %2137 = vmatprep.subr.bf16.mxu0 0
        %2138 = vmatpush1.bf16.msra.mxu0 0
        %2139 = vmatprep.subr.bf16.mxu0 0
        %2140 = vmatpush1.bf16.msra.mxu0 0
        %2141 = vmatprep.subr.bf16.mxu0 0
        %2142 = vmatpush1.bf16.msra.mxu0 0
        %2143 = vmatprep.subr.bf16.mxu0 0
        %2144 = vmatpush1.bf16.msra.mxu0 0
        %2145 = vmatprep.subr.bf16.mxu0 0
        %2146 = vmatpush1.bf16.msra.mxu0 0
        %2147 = vmatprep.mubr.bf16.mxu0 0
        %2148 = vmatmul.mubr.bf16.gmra.mrb[0].mxu0 %v2046
        %v2149 = vpop.f32.mrb[0].mxu0
        %v2150 = vadd.f32 %v2066, %v2149
        %v2151 = vpop.f32.mrb[0].mxu0
        %v2152 = vpop.f32.mrb[0].mxu0
        %v2153 = vpop.f32.mrb[0].mxu0
        %2154 = vdwg.mxu0
        %v2155 = vadd.f32 %v1312, %v2150
        %2156 = vadd.xlane.f32.xlu0 %v2155
        %v2157 = vpop.xlane.xlu0 %2156
        %v2158 = vmul.f32 %v2157, 0.03125
        %v2159 = vmul.f32 %v2155, %v2155
        %2160 = vadd.xlane.f32.xlu0 %v2159
        %v2161 = vpop.xlane.xlu0 %2160
        %v2162 = vmul.f32 %v2161, 0.03125
        %v2163 = vmul.f32 %v2158, %v2158
        %v2164 = vsub.f32 %v2162, %v2163
        %v2165 = vsub.f32 %v2155, %v2158
        %v2166 = vadd.f32 %v2164, 1e-05
        %v2167 = vrsqrt.pop %v2166
        %v2168 = vmul.f32 %v2165, %v2167
        %v2169 = vlaneseq
        %v2170 = vshrl.u32 %v2169, 7
        %v2171 = vsub.s32 2, %v2170
        %v2172 = vrot.slane %v1314, %v2171
        %v2173 = vmul.f32 %v2168, %v2172
        %v2174 = vlaneseq
        %v2175 = vshrl.u32 %v2174, 7
        %v2176 = vsub.s32 3, %v2175
        %v2177 = vrot.slane %v1314, %v2176
        %v2178 = vadd.f32 %v2173, %v2177
        %v2179 = vpack.c.bf16 %v2178, %v2178
        %v2180 = vld [vmem:[%s872] sm:$0xf]
        %v2181 = vld [vmem:[%s872 + $0x4] sm:$0xf]
        %v2182 = vld [vmem:[%s872 + $0x8] sm:$0xf]
        %v2183 = vld [vmem:[%s872 + $0xc] sm:$0xf]
        %v2184 = vld [vmem:[%s872 + $0x10] sm:$0xf]
        %v2185 = vld [vmem:[%s872 + $0x14] sm:$0xf]
        %v2186 = vld [vmem:[%s872 + $0x18] sm:$0xf]
        %v2187 = vld [vmem:[%s872 + $0x1c] sm:$0xf]
        %v2188 = vld [vmem:[%s872 + $0x20] sm:$0xf]
        %v2189 = vld [vmem:[%s872 + $0x24] sm:$0xf]
        %v2190 = vld [vmem:[%s872 + $0x28] sm:$0xf]
        %v2191 = vld [vmem:[%s872 + $0x2c] sm:$0xf]
        %v2192 = vld [vmem:[%s872 + $0x30] sm:$0xf]
        %v2193 = vld [vmem:[%s872 + $0x34] sm:$0xf]
        %v2194 = vld [vmem:[%s872 + $0x38] sm:$0xf]
        %v2195 = vld [vmem:[%s872 + $0x3c] sm:$0xf]
        %v2196 = vlaneseq
        %v2197 = vshrl.u32 %v2196, 7
        %v2198 = vsub.s32 4, %v2197
        %v2199 = vrot.slane %v1314, %v2198
        %v2216 = vunpack.c.l.b16 %v2180
        %v2217 = vunpack.c.l.b16 %v2181
        %v2218 = vunpack.c.l.b16 %v2182
        %v2219 = vunpack.c.l.b16 %v2183
        %v2220 = vunpack.c.l.b16 %v2184
        %v2221 = vunpack.c.l.b16 %v2185
        %v2222 = vunpack.c.l.b16 %v2186
        %v2223 = vunpack.c.l.b16 %v2187
        %v2224 = vunpack.c.l.b16 %v2188
        %v2225 = vunpack.c.l.b16 %v2189
        %v2226 = vunpack.c.l.b16 %v2190
        %v2227 = vunpack.c.l.b16 %v2191
        %v2228 = vunpack.c.l.b16 %v2192
        %v2229 = vunpack.c.l.b16 %v2193
        %v2230 = vunpack.c.l.b16 %v2194
        %v2231 = vunpack.c.l.b16 %v2195
        %v2232 = vpack.c.b16 %v2217, %v2216
        %v2233 = vpack.c.b16 %v2219, %v2218
        %v2234 = vpack.c.b16 %v2221, %v2220
        %v2235 = vpack.c.b16 %v2223, %v2222
        %v2236 = vpack.c.b16 %v2225, %v2224
        %v2237 = vpack.c.b16 %v2227, %v2226
        %v2238 = vpack.c.b16 %v2229, %v2228
        %v2239 = vpack.c.b16 %v2231, %v2230
        %2248 = vmatprep.subr.bf16.mxu0 0
        %2249 = vmatpush1.bf16.msra.mxu0 %v2232
        %2250 = vmatprep.subr.bf16.mxu0 0
        %2251 = vmatpush1.bf16.msra.mxu0 %v2233
        %2252 = vmatprep.subr.bf16.mxu0 0
        %2253 = vmatpush1.bf16.msra.mxu0 %v2234
        %2254 = vmatprep.subr.bf16.mxu0 0
        %2255 = vmatpush1.bf16.msra.mxu0 %v2235
        %2256 = vmatprep.subr.bf16.mxu0 0
        %2257 = vmatpush1.bf16.msra.mxu0 %v2236
        %2258 = vmatprep.subr.bf16.mxu0 0
        %2259 = vmatpush1.bf16.msra.mxu0 %v2237
        %2260 = vmatprep.subr.bf16.mxu0 0
        %2261 = vmatpush1.bf16.msra.mxu0 %v2238
        %2262 = vmatprep.subr.bf16.mxu0 0
        %2263 = vmatpush1.bf16.msra.mxu0 %v2239
        %2264 = vmatprep.subr.bf16.mxu0 0
        %2265 = vmatpush1.bf16.msra.mxu0 0
        %2266 = vmatprep.subr.bf16.mxu0 0
        %2267 = vmatpush1.bf16.msra.mxu0 0
        %2268 = vmatprep.subr.bf16.mxu0 0
        %2269 = vmatpush1.bf16.msra.mxu0 0
        %2270 = vmatprep.subr.bf16.mxu0 0
        %2271 = vmatpush1.bf16.msra.mxu0 0
        %2272 = vmatprep.subr.bf16.mxu0 0
        %2273 = vmatpush1.bf16.msra.mxu0 0
        %2274 = vmatprep.subr.bf16.mxu0 0
        %2275 = vmatpush1.bf16.msra.mxu0 0
        %2276 = vmatprep.subr.bf16.mxu0 0
        %2277 = vmatpush1.bf16.msra.mxu0 0
        %2278 = vmatprep.subr.bf16.mxu0 0
        %2279 = vmatpush1.bf16.msra.mxu0 0
        %2280 = vmatprep.mubr.bf16.mxu0 0
        %2281 = vmatmul.mubr.bf16.gmra.mrb[0].mxu0 %v2179
        %v2282 = vpop.f32.mrb[0].mxu0
        %v2283 = vadd.f32 %v2199, %v2282
        %v2284 = vpop.f32.mrb[0].mxu0
        %v2285 = vpop.f32.mrb[0].mxu0
        %v2286 = vpop.f32.mrb[0].mxu0
        %2287 = vdwg.mxu0
        %v2288 = vpack.c.bf16 %v2283, %v2283
        %v2289 = vld [vmem:[%s881] sm:$0xff]
        %v2290 = vld [vmem:[%s881 + $0x8] sm:$0xff]
        %v2291 = vld [vmem:[%s881 + $0x10] sm:$0xff]
        %v2292 = vld [vmem:[%s881 + $0x18] sm:$0xff]
        %v2293 = vld [vmem:[%s881 + $0x20] sm:$0xff]
        %v2294 = vld [vmem:[%s881 + $0x28] sm:$0xff]
        %v2295 = vld [vmem:[%s881 + $0x30] sm:$0xff]
        %v2296 = vld [vmem:[%s881 + $0x38] sm:$0xff]
        %v2297 = vld [vmem:[%s881 + $0x40] sm:$0xff]
        %v2298 = vld [vmem:[%s881 + $0x48] sm:$0xff]
        %v2299 = vld [vmem:[%s881 + $0x50] sm:$0xff]
        %v2300 = vld [vmem:[%s881 + $0x58] sm:$0xff]
        %v2301 = vld [vmem:[%s881 + $0x60] sm:$0xff]
        %v2302 = vld [vmem:[%s881 + $0x68] sm:$0xff]
        %v2303 = vld [vmem:[%s881 + $0x70] sm:$0xff]
        %v2304 = vld [vmem:[%s881 + $0x78] sm:$0xff]
        %v2305 = vlaneseq
        %v2306 = vshrl.u32 %v2305, 7
        %v2307 = vsub.s32 5, %v2306
        %v2308 = vrot.slane %v1314, %v2307
        %v2309 = vlaneseq
        %v2310 = vshrl.u32 %v2309, 7
        %v2311 = vsub.s32 5, %v2310
        %v2312 = vrot.slane %v1315, %v2311
        %v2329 = vunpack.c.l.b16 %v2289
        %v2330 = vunpack.c.h.b16 %v2289
        %v2331 = vunpack.c.l.b16 %v2290
        %v2332 = vunpack.c.h.b16 %v2290
        %v2333 = vunpack.c.l.b16 %v2291
        %v2334 = vunpack.c.h.b16 %v2291
        %v2335 = vunpack.c.l.b16 %v2292
        %v2336 = vunpack.c.h.b16 %v2292
        %v2337 = vunpack.c.l.b16 %v2293
        %v2338 = vunpack.c.h.b16 %v2293
        %v2339 = vunpack.c.l.b16 %v2294
        %v2340 = vunpack.c.h.b16 %v2294
        %v2341 = vunpack.c.l.b16 %v2295
        %v2342 = vunpack.c.h.b16 %v2295
        %v2343 = vunpack.c.l.b16 %v2296
        %v2344 = vunpack.c.h.b16 %v2296
        %v2345 = vunpack.c.l.b16 %v2297
        %v2346 = vunpack.c.h.b16 %v2297
        %v2347 = vunpack.c.l.b16 %v2298
        %v2348 = vunpack.c.h.b16 %v2298
        %v2349 = vunpack.c.l.b16 %v2299
        %v2350 = vunpack.c.h.b16 %v2299
        %v2351 = vunpack.c.l.b16 %v2300
        %v2352 = vunpack.c.h.b16 %v2300
        %v2353 = vunpack.c.l.b16 %v2301
        %v2354 = vunpack.c.h.b16 %v2301
        %v2355 = vunpack.c.l.b16 %v2302
        %v2356 = vunpack.c.h.b16 %v2302
        %v2357 = vunpack.c.l.b16 %v2303
        %v2358 = vunpack.c.h.b16 %v2303
        %v2359 = vunpack.c.l.b16 %v2304
        %v2360 = vunpack.c.h.b16 %v2304
        %v2361 = vpack.c.b16 %v2331, %v2329
        %v2362 = vpack.c.b16 %v2332, %v2330
        %v2363 = vpack.c.b16 %v2335, %v2333
        %v2364 = vpack.c.b16 %v2336, %v2334
        %v2365 = vpack.c.b16 %v2339, %v2337
        %v2366 = vpack.c.b16 %v2340, %v2338
        %v2367 = vpack.c.b16 %v2343, %v2341
        %v2368 = vpack.c.b16 %v2344, %v2342
        %v2369 = vpack.c.b16 %v2347, %v2345
        %v2370 = vpack.c.b16 %v2348, %v2346
        %v2371 = vpack.c.b16 %v2351, %v2349
        %v2372 = vpack.c.b16 %v2352, %v2350
        %v2373 = vpack.c.b16 %v2355, %v2353
        %v2374 = vpack.c.b16 %v2356, %v2354
        %v2375 = vpack.c.b16 %v2359, %v2357
        %v2376 = vpack.c.b16 %v2360, %v2358
        %2393 = vmatprep.subr.bf16.mxu0 %v2362
        %2394 = vmatpush1.bf16.msra.mxu0 %v2361
        %2395 = vmatprep.subr.bf16.mxu0 %v2364
        %2396 = vmatpush1.bf16.msra.mxu0 %v2363
        %2397 = vmatprep.subr.bf16.mxu0 %v2366
        %2398 = vmatpush1.bf16.msra.mxu0 %v2365
        %2399 = vmatprep.subr.bf16.mxu0 %v2368
        %2400 = vmatpush1.bf16.msra.mxu0 %v2367
        %2401 = vmatprep.subr.bf16.mxu0 %v2370
        %2402 = vmatpush1.bf16.msra.mxu0 %v2369
        %2403 = vmatprep.subr.bf16.mxu0 %v2372
        %2404 = vmatpush1.bf16.msra.mxu0 %v2371
        %2405 = vmatprep.subr.bf16.mxu0 %v2374
        %2406 = vmatpush1.bf16.msra.mxu0 %v2373
        %2407 = vmatprep.subr.bf16.mxu0 %v2376
        %2408 = vmatpush1.bf16.msra.mxu0 %v2375
        %2409 = vmatprep.subr.bf16.mxu0 0
        %2410 = vmatpush1.bf16.msra.mxu0 0
        %2411 = vmatprep.subr.bf16.mxu0 0
        %2412 = vmatpush1.bf16.msra.mxu0 0
        %2413 = vmatprep.subr.bf16.mxu0 0
        %2414 = vmatpush1.bf16.msra.mxu0 0
        %2415 = vmatprep.subr.bf16.mxu0 0
        %2416 = vmatpush1.bf16.msra.mxu0 0
        %2417 = vmatprep.subr.bf16.mxu0 0
        %2418 = vmatpush1.bf16.msra.mxu0 0
        %2419 = vmatprep.subr.bf16.mxu0 0
        %2420 = vmatpush1.bf16.msra.mxu0 0
        %2421 = vmatprep.subr.bf16.mxu0 0
        %2422 = vmatpush1.bf16.msra.mxu0 0
        %2423 = vmatprep.subr.bf16.mxu0 0
        %2424 = vmatpush1.bf16.msra.mxu0 0
        %2425 = vmatprep.mubr.bf16.mxu0 0
        %2426 = vmatmul.mubr.bf16.gmra.mrb[0].mxu0 %v1313
        %v2427 = vpop.f32.mrb[0].mxu0
        %v2428 = vadd.f32 %v2308, %v2427
        %v2429 = vpop.f32.mrb[0].mxu0
        %v2430 = vadd.f32 %v2312, %v2429
        %v2431 = vpop.f32.mrb[0].mxu0
        %v2432 = vpop.f32.mrb[0].mxu0
        %2433 = vdwg.mxu0
        %v2434 = vpack.c.bf16 %v2428, %v2428
        %v2435 = vpack.c.bf16 %v2430, %v2430
        %v2436 = vld [vmem:[%s833] sm:$0x1]
        %v2438 = vlaneseq
        %v2439 = vshrl.u32 %v2438, 7
        %v2440 = vsub.s32 0, %v2439
        %v2441 = vrot.slane %v2436, %v2440
        %v2444 = vsel %vm1589, %v2288, 0
        %v2447 = vsel %vm1589, %v2434, 0
        %2449 = vmatprep.subr.bf16.mxu0 0
        %2450 = vmatpush1.bf16.xpose.msra.mxu0 %v2447
        %2451 = vmatprep.subr.bf16.mxu0 0
        %2452 = vmatpush1.bf16.xpose.msra.mxu0 0
        %2453 = vmatprep.subr.bf16.mxu0 0
        %2454 = vmatpush1.bf16.xpose.msra.mxu0 0
        %2455 = vmatprep.subr.bf16.mxu0 0
        %2456 = vmatpush1.bf16.xpose.msra.mxu0 0
        %2457 = vmatprep.subr.bf16.mxu0 0
        %2458 = vmatpush1.bf16.xpose.msra.mxu0 0
        %2459 = vmatprep.subr.bf16.mxu0 0
        %2460 = vmatpush1.bf16.xpose.msra.mxu0 0
        %2461 = vmatprep.subr.bf16.mxu0 0
        %2462 = vmatpush1.bf16.xpose.msra.mxu0 0
        %2463 = vmatprep.subr.bf16.mxu0 0
        %2464 = vmatpush1.bf16.xpose.msra.mxu0 0
        %2465 = vmatprep.subr.bf16.mxu0 0
        %2466 = vmatpush1.bf16.xpose.msra.mxu0 0
        %2467 = vmatprep.subr.bf16.mxu0 0
        %2468 = vmatpush1.bf16.xpose.msra.mxu0 0
        %2469 = vmatprep.subr.bf16.mxu0 0
        %2470 = vmatpush1.bf16.xpose.msra.mxu0 0
        %2471 = vmatprep.subr.bf16.mxu0 0
        %2472 = vmatpush1.bf16.xpose.msra.mxu0 0
        %2473 = vmatprep.subr.bf16.mxu0 0
        %2474 = vmatpush1.bf16.xpose.msra.mxu0 0
        %2475 = vmatprep.subr.bf16.mxu0 0
        %2476 = vmatpush1.bf16.xpose.msra.mxu0 0
        %2477 = vmatprep.subr.bf16.mxu0 0
        %2478 = vmatpush1.bf16.xpose.msra.mxu0 0
        %2479 = vmatprep.subr.bf16.mxu0 0
        %2480 = vmatpush1.bf16.xpose.msra.mxu0 0
        %2481 = vmatprep.mubr.bf16.mxu0 0
        %2482 = vmatmul.mubr.bf16.gmra.mrb[0].mxu0 %v2444
        %v2483 = vpop.f32.mrb[0].mxu0
        %v2484 = vadd.f32 %v2441, %v2483
        %v2485 = vpop.f32.mrb[0].mxu0
        %v2486 = vpop.f32.mrb[0].mxu0
        %v2487 = vpop.f32.mrb[0].mxu0
        %2488 = vdwg.mxu0
        %v2489 = vsel %vm1636, %v2484, -inf
        %2490 = vmax.xlane.f32.xlu0 %v2489
        %v2491 = vpop.xlane.xlu0 %2490
        %v2492 = vsub.f32 %v2484, %v2491
        %v2493 = vmul.f32 %v2492, 1.442695
        %v2494 = vpow.pop %v2493
        %v2495 = vsel %vm1636, %v2494, 0.0
        %2496 = vadd.xlane.f32.xlu0 %v2495
        %v2497 = vpop.xlane.xlu0 %2496
        %v2498 = vrcp.pop %v2497
        %v2499 = vmul.f32 %v2494, %v2498
        %v2500 = vpack.c.bf16 %v2499, %v2499
        %v2502 = vsel %vm1636, %v2500, 0
        %v2505 = vsel %vm1652, %v2435, 0
        %2507 = vmatprep.subr.bf16.mxu0 0
        %2508 = vmatpush1.bf16.msra.mxu0 %v2505
        %2509 = vmatprep.subr.bf16.mxu0 0
        %2510 = vmatpush1.bf16.msra.mxu0 0
        %2511 = vmatprep.subr.bf16.mxu0 0
        %2512 = vmatpush1.bf16.msra.mxu0 0
        %2513 = vmatprep.subr.bf16.mxu0 0
        %2514 = vmatpush1.bf16.msra.mxu0 0
        %2515 = vmatprep.subr.bf16.mxu0 0
        %2516 = vmatpush1.bf16.msra.mxu0 0
        %2517 = vmatprep.subr.bf16.mxu0 0
        %2518 = vmatpush1.bf16.msra.mxu0 0
        %2519 = vmatprep.subr.bf16.mxu0 0
        %2520 = vmatpush1.bf16.msra.mxu0 0
        %2521 = vmatprep.subr.bf16.mxu0 0
        %2522 = vmatpush1.bf16.msra.mxu0 0
        %2523 = vmatprep.subr.bf16.mxu0 0
        %2524 = vmatpush1.bf16.msra.mxu0 0
        %2525 = vmatprep.subr.bf16.mxu0 0
        %2526 = vmatpush1.bf16.msra.mxu0 0
        %2527 = vmatprep.subr.bf16.mxu0 0
        %2528 = vmatpush1.bf16.msra.mxu0 0
        %2529 = vmatprep.subr.bf16.mxu0 0
        %2530 = vmatpush1.bf16.msra.mxu0 0
        %2531 = vmatprep.subr.bf16.mxu0 0
        %2532 = vmatpush1.bf16.msra.mxu0 0
        %2533 = vmatprep.subr.bf16.mxu0 0
        %2534 = vmatpush1.bf16.msra.mxu0 0
        %2535 = vmatprep.subr.bf16.mxu0 0
        %2536 = vmatpush1.bf16.msra.mxu0 0
        %2537 = vmatprep.subr.bf16.mxu0 0
        %2538 = vmatpush1.bf16.msra.mxu0 0
        %2539 = vmatprep.mubr.bf16.mxu0 0
        %2540 = vmatmul.mubr.bf16.gmra.mrb[0].mxu0 %v2502
        %v2541 = vpop.f32.mrb[0].mxu0
        %v2542 = vadd.f32 0.0, %v2541
        %v2543 = vpop.f32.mrb[0].mxu0
        %v2544 = vpop.f32.mrb[0].mxu0
        %v2545 = vpop.f32.mrb[0].mxu0
        %2546 = vdwg.mxu0
        %2548 = vrot.lane.b32.xlu0 %v2288, 96
        %v2549 = vpop.permute.xlu0 %2548
        %2551 = vrot.lane.b32.xlu0 %v2434, 96
        %v2552 = vpop.permute.xlu0 %2551
        %v2554 = vsel %vm1589, %v2549, 0
        %v2557 = vsel %vm1589, %v2552, 0
        %2559 = vmatprep.subr.bf16.mxu0 0
        %2560 = vmatpush1.bf16.xpose.msra.mxu0 %v2557
        %2561 = vmatprep.subr.bf16.mxu0 0
        %2562 = vmatpush1.bf16.xpose.msra.mxu0 0
        %2563 = vmatprep.subr.bf16.mxu0 0
        %2564 = vmatpush1.bf16.xpose.msra.mxu0 0
        %2565 = vmatprep.subr.bf16.mxu0 0
        %2566 = vmatpush1.bf16.xpose.msra.mxu0 0
        %2567 = vmatprep.subr.bf16.mxu0 0
        %2568 = vmatpush1.bf16.xpose.msra.mxu0 0
        %2569 = vmatprep.subr.bf16.mxu0 0
        %2570 = vmatpush1.bf16.xpose.msra.mxu0 0
        %2571 = vmatprep.subr.bf16.mxu0 0
        %2572 = vmatpush1.bf16.xpose.msra.mxu0 0
        %2573 = vmatprep.subr.bf16.mxu0 0
        %2574 = vmatpush1.bf16.xpose.msra.mxu0 0
        %2575 = vmatprep.subr.bf16.mxu0 0
        %2576 = vmatpush1.bf16.xpose.msra.mxu0 0
        %2577 = vmatprep.subr.bf16.mxu0 0
        %2578 = vmatpush1.bf16.xpose.msra.mxu0 0
        %2579 = vmatprep.subr.bf16.mxu0 0
        %2580 = vmatpush1.bf16.xpose.msra.mxu0 0
        %2581 = vmatprep.subr.bf16.mxu0 0
        %2582 = vmatpush1.bf16.xpose.msra.mxu0 0
        %2583 = vmatprep.subr.bf16.mxu0 0
        %2584 = vmatpush1.bf16.xpose.msra.mxu0 0
        %2585 = vmatprep.subr.bf16.mxu0 0
        %2586 = vmatpush1.bf16.xpose.msra.mxu0 0
        %2587 = vmatprep.subr.bf16.mxu0 0
        %2588 = vmatpush1.bf16.xpose.msra.mxu0 0
        %2589 = vmatprep.subr.bf16.mxu0 0
        %2590 = vmatpush1.bf16.xpose.msra.mxu0 0
        %2591 = vmatprep.mubr.bf16.mxu0 0
        %2592 = vmatmul.mubr.bf16.gmra.mrb[0].mxu0 %v2554
        %v2593 = vpop.f32.mrb[0].mxu0
        %v2594 = vadd.f32 %v2441, %v2593
        %v2595 = vpop.f32.mrb[0].mxu0
        %v2596 = vpop.f32.mrb[0].mxu0
        %v2597 = vpop.f32.mrb[0].mxu0
        %2598 = vdwg.mxu0
        %v2599 = vsel %vm1636, %v2594, -inf
        %2600 = vmax.xlane.f32.xlu0 %v2599
        %v2601 = vpop.xlane.xlu0 %2600
        %v2602 = vsub.f32 %v2594, %v2601
        %v2603 = vmul.f32 %v2602, 1.442695
        %v2604 = vpow.pop %v2603
        %v2605 = vsel %vm1636, %v2604, 0.0
        %2606 = vadd.xlane.f32.xlu0 %v2605
        %v2607 = vpop.xlane.xlu0 %2606
        %v2608 = vrcp.pop %v2607
        %v2609 = vmul.f32 %v2604, %v2608
        %v2610 = vpack.c.bf16 %v2609, %v2609
        %2612 = vrot.lane.b32.xlu0 %v2435, 96
        %v2613 = vpop.permute.xlu0 %2612
        %v2615 = vsel %vm1636, %v2610, 0
        %v2618 = vsel %vm1652, %v2613, 0
        %2620 = vmatprep.subr.bf16.mxu0 0
        %2621 = vmatpush1.bf16.msra.mxu0 %v2618
        %2622 = vmatprep.subr.bf16.mxu0 0
        %2623 = vmatpush1.bf16.msra.mxu0 0
        %2624 = vmatprep.subr.bf16.mxu0 0
        %2625 = vmatpush1.bf16.msra.mxu0 0
        %2626 = vmatprep.subr.bf16.mxu0 0
        %2627 = vmatpush1.bf16.msra.mxu0 0
        %2628 = vmatprep.subr.bf16.mxu0 0
        %2629 = vmatpush1.bf16.msra.mxu0 0
        %2630 = vmatprep.subr.bf16.mxu0 0
        %2631 = vmatpush1.bf16.msra.mxu0 0
        %2632 = vmatprep.subr.bf16.mxu0 0
        %2633 = vmatpush1.bf16.msra.mxu0 0
        %2634 = vmatprep.subr.bf16.mxu0 0
        %2635 = vmatpush1.bf16.msra.mxu0 0
        %2636 = vmatprep.subr.bf16.mxu0 0
        %2637 = vmatpush1.bf16.msra.mxu0 0
        %2638 = vmatprep.subr.bf16.mxu0 0
        %2639 = vmatpush1.bf16.msra.mxu0 0
        %2640 = vmatprep.subr.bf16.mxu0 0
        %2641 = vmatpush1.bf16.msra.mxu0 0
        %2642 = vmatprep.subr.bf16.mxu0 0
        %2643 = vmatpush1.bf16.msra.mxu0 0
        %2644 = vmatprep.subr.bf16.mxu0 0
        %2645 = vmatpush1.bf16.msra.mxu0 0
        %2646 = vmatprep.subr.bf16.mxu0 0
        %2647 = vmatpush1.bf16.msra.mxu0 0
        %2648 = vmatprep.subr.bf16.mxu0 0
        %2649 = vmatpush1.bf16.msra.mxu0 0
        %2650 = vmatprep.subr.bf16.mxu0 0
        %2651 = vmatpush1.bf16.msra.mxu0 0
        %2652 = vmatprep.mubr.bf16.mxu0 0
        %2653 = vmatmul.mubr.bf16.gmra.mrb[0].mxu0 %v2615
        %v2654 = vpop.f32.mrb[0].mxu0
        %v2655 = vadd.f32 0.0, %v2654
        %v2656 = vpop.f32.mrb[0].mxu0
        %v2657 = vpop.f32.mrb[0].mxu0
        %v2658 = vpop.f32.mrb[0].mxu0
        %2659 = vdwg.mxu0
        %2660 = vrot.lane.b32.xlu0 %v2288, 64
        %v2661 = vpop.permute.xlu0 %2660
        %2662 = vrot.lane.b32.xlu0 %v2434, 64
        %v2663 = vpop.permute.xlu0 %2662
        %v2665 = vsel %vm1589, %v2661, 0
        %v2668 = vsel %vm1589, %v2663, 0
        %2670 = vmatprep.subr.bf16.mxu0 0
        %2671 = vmatpush1.bf16.xpose.msra.mxu0 %v2668
        %2672 = vmatprep.subr.bf16.mxu0 0
        %2673 = vmatpush1.bf16.xpose.msra.mxu0 0
        %2674 = vmatprep.subr.bf16.mxu0 0
        %2675 = vmatpush1.bf16.xpose.msra.mxu0 0
        %2676 = vmatprep.subr.bf16.mxu0 0
        %2677 = vmatpush1.bf16.xpose.msra.mxu0 0
        %2678 = vmatprep.subr.bf16.mxu0 0
        %2679 = vmatpush1.bf16.xpose.msra.mxu0 0
        %2680 = vmatprep.subr.bf16.mxu0 0
        %2681 = vmatpush1.bf16.xpose.msra.mxu0 0
        %2682 = vmatprep.subr.bf16.mxu0 0
        %2683 = vmatpush1.bf16.xpose.msra.mxu0 0
        %2684 = vmatprep.subr.bf16.mxu0 0
        %2685 = vmatpush1.bf16.xpose.msra.mxu0 0
        %2686 = vmatprep.subr.bf16.mxu0 0
        %2687 = vmatpush1.bf16.xpose.msra.mxu0 0
        %2688 = vmatprep.subr.bf16.mxu0 0
        %2689 = vmatpush1.bf16.xpose.msra.mxu0 0
        %2690 = vmatprep.subr.bf16.mxu0 0
        %2691 = vmatpush1.bf16.xpose.msra.mxu0 0
        %2692 = vmatprep.subr.bf16.mxu0 0
        %2693 = vmatpush1.bf16.xpose.msra.mxu0 0
        %2694 = vmatprep.subr.bf16.mxu0 0
        %2695 = vmatpush1.bf16.xpose.msra.mxu0 0
        %2696 = vmatprep.subr.bf16.mxu0 0
        %2697 = vmatpush1.bf16.xpose.msra.mxu0 0
        %2698 = vmatprep.subr.bf16.mxu0 0
        %2699 = vmatpush1.bf16.xpose.msra.mxu0 0
        %2700 = vmatprep.subr.bf16.mxu0 0
        %2701 = vmatpush1.bf16.xpose.msra.mxu0 0
        %2702 = vmatprep.mubr.bf16.mxu0 0
        %2703 = vmatmul.mubr.bf16.gmra.mrb[0].mxu0 %v2665
        %v2704 = vpop.f32.mrb[0].mxu0
        %v2705 = vadd.f32 %v2441, %v2704
        %v2706 = vpop.f32.mrb[0].mxu0
        %v2707 = vpop.f32.mrb[0].mxu0
        %v2708 = vpop.f32.mrb[0].mxu0
        %2709 = vdwg.mxu0
        %v2710 = vsel %vm1636, %v2705, -inf
        %2711 = vmax.xlane.f32.xlu0 %v2710
        %v2712 = vpop.xlane.xlu0 %2711
        %v2713 = vsub.f32 %v2705, %v2712
        %v2714 = vmul.f32 %v2713, 1.442695
        %v2715 = vpow.pop %v2714
        %v2716 = vsel %vm1636, %v2715, 0.0
        %2717 = vadd.xlane.f32.xlu0 %v2716
        %v2718 = vpop.xlane.xlu0 %2717
        %v2719 = vrcp.pop %v2718
        %v2720 = vmul.f32 %v2715, %v2719
        %v2721 = vpack.c.bf16 %v2720, %v2720
        %2722 = vrot.lane.b32.xlu0 %v2435, 64
        %v2723 = vpop.permute.xlu0 %2722
        %v2725 = vsel %vm1636, %v2721, 0
        %v2728 = vsel %vm1652, %v2723, 0
        %2730 = vmatprep.subr.bf16.mxu0 0
        %2731 = vmatpush1.bf16.msra.mxu0 %v2728
        %2732 = vmatprep.subr.bf16.mxu0 0
        %2733 = vmatpush1.bf16.msra.mxu0 0
        %2734 = vmatprep.subr.bf16.mxu0 0
        %2735 = vmatpush1.bf16.msra.mxu0 0
        %2736 = vmatprep.subr.bf16.mxu0 0
        %2737 = vmatpush1.bf16.msra.mxu0 0
        %2738 = vmatprep.subr.bf16.mxu0 0
        %2739 = vmatpush1.bf16.msra.mxu0 0
        %2740 = vmatprep.subr.bf16.mxu0 0
        %2741 = vmatpush1.bf16.msra.mxu0 0
        %2742 = vmatprep.subr.bf16.mxu0 0
        %2743 = vmatpush1.bf16.msra.mxu0 0
        %2744 = vmatprep.subr.bf16.mxu0 0
        %2745 = vmatpush1.bf16.msra.mxu0 0
        %2746 = vmatprep.subr.bf16.mxu0 0
        %2747 = vmatpush1.bf16.msra.mxu0 0
        %2748 = vmatprep.subr.bf16.mxu0 0
        %2749 = vmatpush1.bf16.msra.mxu0 0
        %2750 = vmatprep.subr.bf16.mxu0 0
        %2751 = vmatpush1.bf16.msra.mxu0 0
        %2752 = vmatprep.subr.bf16.mxu0 0
        %2753 = vmatpush1.bf16.msra.mxu0 0
        %2754 = vmatprep.subr.bf16.mxu0 0
        %2755 = vmatpush1.bf16.msra.mxu0 0
        %2756 = vmatprep.subr.bf16.mxu0 0
        %2757 = vmatpush1.bf16.msra.mxu0 0
        %2758 = vmatprep.subr.bf16.mxu0 0
        %2759 = vmatpush1.bf16.msra.mxu0 0
        %2760 = vmatprep.subr.bf16.mxu0 0
        %2761 = vmatpush1.bf16.msra.mxu0 0
        %2762 = vmatprep.mubr.bf16.mxu0 0
        %2763 = vmatmul.mubr.bf16.gmra.mrb[0].mxu0 %v2725
        %v2764 = vpop.f32.mrb[0].mxu0
        %v2765 = vadd.f32 0.0, %v2764
        %v2766 = vpop.f32.mrb[0].mxu0
        %v2767 = vpop.f32.mrb[0].mxu0
        %v2768 = vpop.f32.mrb[0].mxu0
        %2769 = vdwg.mxu0
        %2770 = vrot.lane.b32.xlu0 %v2288, 32
        %v2771 = vpop.permute.xlu0 %2770
        %2772 = vrot.lane.b32.xlu0 %v2434, 32
        %v2773 = vpop.permute.xlu0 %2772
        %v2775 = vsel %vm1589, %v2771, 0
        %v2778 = vsel %vm1589, %v2773, 0
        %2780 = vmatprep.subr.bf16.mxu0 0
        %2781 = vmatpush1.bf16.xpose.msra.mxu0 %v2778
        %2782 = vmatprep.subr.bf16.mxu0 0
        %2783 = vmatpush1.bf16.xpose.msra.mxu0 0
        %2784 = vmatprep.subr.bf16.mxu0 0
        %2785 = vmatpush1.bf16.xpose.msra.mxu0 0
        %2786 = vmatprep.subr.bf16.mxu0 0
        %2787 = vmatpush1.bf16.xpose.msra.mxu0 0
        %2788 = vmatprep.subr.bf16.mxu0 0
        %2789 = vmatpush1.bf16.xpose.msra.mxu0 0
        %2790 = vmatprep.subr.bf16.mxu0 0
        %2791 = vmatpush1.bf16.xpose.msra.mxu0 0
        %2792 = vmatprep.subr.bf16.mxu0 0
        %2793 = vmatpush1.bf16.xpose.msra.mxu0 0
        %2794 = vmatprep.subr.bf16.mxu0 0
        %2795 = vmatpush1.bf16.xpose.msra.mxu0 0
        %2796 = vmatprep.subr.bf16.mxu0 0
        %2797 = vmatpush1.bf16.xpose.msra.mxu0 0
        %2798 = vmatprep.subr.bf16.mxu0 0
        %2799 = vmatpush1.bf16.xpose.msra.mxu0 0
        %2800 = vmatprep.subr.bf16.mxu0 0
        %2801 = vmatpush1.bf16.xpose.msra.mxu0 0
        %2802 = vmatprep.subr.bf16.mxu0 0
        %2803 = vmatpush1.bf16.xpose.msra.mxu0 0
        %2804 = vmatprep.subr.bf16.mxu0 0
        %2805 = vmatpush1.bf16.xpose.msra.mxu0 0
        %2806 = vmatprep.subr.bf16.mxu0 0
        %2807 = vmatpush1.bf16.xpose.msra.mxu0 0
        %2808 = vmatprep.subr.bf16.mxu0 0
        %2809 = vmatpush1.bf16.xpose.msra.mxu0 0
        %2810 = vmatprep.subr.bf16.mxu0 0
        %2811 = vmatpush1.bf16.xpose.msra.mxu0 0
        %2812 = vmatprep.mubr.bf16.mxu0 0
        %2813 = vmatmul.mubr.bf16.gmra.mrb[0].mxu0 %v2775
        %v2814 = vpop.f32.mrb[0].mxu0
        %v2815 = vadd.f32 %v2441, %v2814
        %v2816 = vpop.f32.mrb[0].mxu0
        %v2817 = vpop.f32.mrb[0].mxu0
        %v2818 = vpop.f32.mrb[0].mxu0
        %2819 = vdwg.mxu0
        %v2820 = vsel %vm1636, %v2815, -inf
        %2821 = vmax.xlane.f32.xlu0 %v2820
        %v2822 = vpop.xlane.xlu0 %2821
        %v2823 = vsub.f32 %v2815, %v2822
        %v2824 = vmul.f32 %v2823, 1.442695
        %v2825 = vpow.pop %v2824
        %v2826 = vsel %vm1636, %v2825, 0.0
        %2827 = vadd.xlane.f32.xlu0 %v2826
        %v2828 = vpop.xlane.xlu0 %2827
        %v2829 = vrcp.pop %v2828
        %v2830 = vmul.f32 %v2825, %v2829
        %v2831 = vpack.c.bf16 %v2830, %v2830
        %2832 = vrot.lane.b32.xlu0 %v2435, 32
        %v2833 = vpop.permute.xlu0 %2832
        %v2835 = vsel %vm1636, %v2831, 0
        %v2838 = vsel %vm1652, %v2833, 0
        %2840 = vmatprep.subr.bf16.mxu0 0
        %2841 = vmatpush1.bf16.msra.mxu0 %v2838
        %2842 = vmatprep.subr.bf16.mxu0 0
        %2843 = vmatpush1.bf16.msra.mxu0 0
        %2844 = vmatprep.subr.bf16.mxu0 0
        %2845 = vmatpush1.bf16.msra.mxu0 0
        %2846 = vmatprep.subr.bf16.mxu0 0
        %2847 = vmatpush1.bf16.msra.mxu0 0
        %2848 = vmatprep.subr.bf16.mxu0 0
        %2849 = vmatpush1.bf16.msra.mxu0 0
        %2850 = vmatprep.subr.bf16.mxu0 0
        %2851 = vmatpush1.bf16.msra.mxu0 0
        %2852 = vmatprep.subr.bf16.mxu0 0
        %2853 = vmatpush1.bf16.msra.mxu0 0
        %2854 = vmatprep.subr.bf16.mxu0 0
        %2855 = vmatpush1.bf16.msra.mxu0 0
        %2856 = vmatprep.subr.bf16.mxu0 0
        %2857 = vmatpush1.bf16.msra.mxu0 0
        %2858 = vmatprep.subr.bf16.mxu0 0
        %2859 = vmatpush1.bf16.msra.mxu0 0
        %2860 = vmatprep.subr.bf16.mxu0 0
        %2861 = vmatpush1.bf16.msra.mxu0 0
        %2862 = vmatprep.subr.bf16.mxu0 0
        %2863 = vmatpush1.bf16.msra.mxu0 0
        %2864 = vmatprep.subr.bf16.mxu0 0
        %2865 = vmatpush1.bf16.msra.mxu0 0
        %2866 = vmatprep.subr.bf16.mxu0 0
        %2867 = vmatpush1.bf16.msra.mxu0 0
        %2868 = vmatprep.subr.bf16.mxu0 0
        %2869 = vmatpush1.bf16.msra.mxu0 0
        %2870 = vmatprep.subr.bf16.mxu0 0
        %2871 = vmatpush1.bf16.msra.mxu0 0
        %2872 = vmatprep.mubr.bf16.mxu0 0
        %2873 = vmatmul.mubr.bf16.gmra.mrb[0].mxu0 %v2835
        %v2874 = vpop.f32.mrb[0].mxu0
        %v2875 = vadd.f32 0.0, %v2874
        %v2876 = vpop.f32.mrb[0].mxu0
        %v2877 = vpop.f32.mrb[0].mxu0
        %v2878 = vpop.f32.mrb[0].mxu0
        %2879 = vdwg.mxu0
        %2881 = vrot.lane.b32.xlu0 %v2655, 32
        %v2882 = vpop.permute.xlu0 %2881
        %2885 = vrot.lane.b32.xlu0 %v2765, 64
        %v2886 = vpop.permute.xlu0 %2885
        %2889 = vrot.lane.b32.xlu0 %v2875, 96
        %v2890 = vpop.permute.xlu0 %2889
        %v2892 = vsel %vm1589, %v2542, %v2882
        %v2893 = vsel %vm2042, %v2892, %v2886
        %v2894 = vsel %vm2044, %v2893, %v2890
        %v2895 = vpack.c.bf16 %v2894, %v2894
        %v2896 = vld [vmem:[%s890] sm:$0xf]
        %v2897 = vld [vmem:[%s890 + $0x4] sm:$0xf]
        %v2898 = vld [vmem:[%s890 + $0x8] sm:$0xf]
        %v2899 = vld [vmem:[%s890 + $0xc] sm:$0xf]
        %v2900 = vld [vmem:[%s890 + $0x10] sm:$0xf]
        %v2901 = vld [vmem:[%s890 + $0x14] sm:$0xf]
        %v2902 = vld [vmem:[%s890 + $0x18] sm:$0xf]
        %v2903 = vld [vmem:[%s890 + $0x1c] sm:$0xf]
        %v2904 = vld [vmem:[%s890 + $0x20] sm:$0xf]
        %v2905 = vld [vmem:[%s890 + $0x24] sm:$0xf]
        %v2906 = vld [vmem:[%s890 + $0x28] sm:$0xf]
        %v2907 = vld [vmem:[%s890 + $0x2c] sm:$0xf]
        %v2908 = vld [vmem:[%s890 + $0x30] sm:$0xf]
        %v2909 = vld [vmem:[%s890 + $0x34] sm:$0xf]
        %v2910 = vld [vmem:[%s890 + $0x38] sm:$0xf]
        %v2911 = vld [vmem:[%s890 + $0x3c] sm:$0xf]
        %v2912 = vlaneseq
        %v2913 = vshrl.u32 %v2912, 7
        %v2914 = vsub.s32 6, %v2913
        %v2915 = vrot.slane %v1314, %v2914
        %v2932 = vunpack.c.l.b16 %v2896
        %v2933 = vunpack.c.l.b16 %v2897
        %v2934 = vunpack.c.l.b16 %v2898
        %v2935 = vunpack.c.l.b16 %v2899
        %v2936 = vunpack.c.l.b16 %v2900
        %v2937 = vunpack.c.l.b16 %v2901
        %v2938 = vunpack.c.l.b16 %v2902
        %v2939 = vunpack.c.l.b16 %v2903
        %v2940 = vunpack.c.l.b16 %v2904
        %v2941 = vunpack.c.l.b16 %v2905
        %v2942 = vunpack.c.l.b16 %v2906
        %v2943 = vunpack.c.l.b16 %v2907
        %v2944 = vunpack.c.l.b16 %v2908
        %v2945 = vunpack.c.l.b16 %v2909
        %v2946 = vunpack.c.l.b16 %v2910
        %v2947 = vunpack.c.l.b16 %v2911
        %v2948 = vpack.c.b16 %v2933, %v2932
        %v2949 = vpack.c.b16 %v2935, %v2934
        %v2950 = vpack.c.b16 %v2937, %v2936
        %v2951 = vpack.c.b16 %v2939, %v2938
        %v2952 = vpack.c.b16 %v2941, %v2940
        %v2953 = vpack.c.b16 %v2943, %v2942
        %v2954 = vpack.c.b16 %v2945, %v2944
        %v2955 = vpack.c.b16 %v2947, %v2946
        %2964 = vmatprep.subr.bf16.mxu0 0
        %2965 = vmatpush1.bf16.msra.mxu0 %v2948
        %2966 = vmatprep.subr.bf16.mxu0 0
        %2967 = vmatpush1.bf16.msra.mxu0 %v2949
        %2968 = vmatprep.subr.bf16.mxu0 0
        %2969 = vmatpush1.bf16.msra.mxu0 %v2950
        %2970 = vmatprep.subr.bf16.mxu0 0
        %2971 = vmatpush1.bf16.msra.mxu0 %v2951
        %2972 = vmatprep.subr.bf16.mxu0 0
        %2973 = vmatpush1.bf16.msra.mxu0 %v2952
        %2974 = vmatprep.subr.bf16.mxu0 0
        %2975 = vmatpush1.bf16.msra.mxu0 %v2953
        %2976 = vmatprep.subr.bf16.mxu0 0
        %2977 = vmatpush1.bf16.msra.mxu0 %v2954
        %2978 = vmatprep.subr.bf16.mxu0 0
        %2979 = vmatpush1.bf16.msra.mxu0 %v2955
        %2980 = vmatprep.subr.bf16.mxu0 0
        %2981 = vmatpush1.bf16.msra.mxu0 0
        %2982 = vmatprep.subr.bf16.mxu0 0
        %2983 = vmatpush1.bf16.msra.mxu0 0
        %2984 = vmatprep.subr.bf16.mxu0 0
        %2985 = vmatpush1.bf16.msra.mxu0 0
        %2986 = vmatprep.subr.bf16.mxu0 0
        %2987 = vmatpush1.bf16.msra.mxu0 0
        %2988 = vmatprep.subr.bf16.mxu0 0
        %2989 = vmatpush1.bf16.msra.mxu0 0
        %2990 = vmatprep.subr.bf16.mxu0 0
        %2991 = vmatpush1.bf16.msra.mxu0 0
        %2992 = vmatprep.subr.bf16.mxu0 0
        %2993 = vmatpush1.bf16.msra.mxu0 0
        %2994 = vmatprep.subr.bf16.mxu0 0
        %2995 = vmatpush1.bf16.msra.mxu0 0
        %2996 = vmatprep.mubr.bf16.mxu0 0
        %2997 = vmatmul.mubr.bf16.gmra.mrb[0].mxu0 %v2895
        %v2998 = vpop.f32.mrb[0].mxu0
        %v2999 = vadd.f32 %v2915, %v2998
        %v3000 = vpop.f32.mrb[0].mxu0
        %v3001 = vpop.f32.mrb[0].mxu0
        %v3002 = vpop.f32.mrb[0].mxu0
        %3003 = vdwg.mxu0
        %v3004 = vadd.f32 %v2178, %v2999
        %3005 = vadd.xlane.f32.xlu0 %v3004
        %v3006 = vpop.xlane.xlu0 %3005
        %v3007 = vmul.f32 %v3006, 0.03125
        %v3008 = vmul.f32 %v3004, %v3004
        %3009 = vadd.xlane.f32.xlu0 %v3008
        %v3010 = vpop.xlane.xlu0 %3009
        %v3011 = vmul.f32 %v3010, 0.03125
        %v3012 = vmul.f32 %v3007, %v3007
        %v3013 = vsub.f32 %v3011, %v3012
        %v3014 = vsub.f32 %v3004, %v3007
        %v3015 = vadd.f32 %v3013, 1e-05
        %v3016 = vrsqrt.pop %v3015
        %v3017 = vmul.f32 %v3014, %v3016
        %v3018 = vlaneseq
        %v3019 = vshrl.u32 %v3018, 7
        %v3020 = vsub.s32 7, %v3019
        %v3021 = vrot.slane %v1314, %v3020
        %v3022 = vmul.f32 %v3017, %v3021
        %v3023 = vlaneseq
        %v3024 = vshrl.u32 %v3023, 7
        %v3025 = vsub.s32 0, %v3024
        %v3026 = vrot.slane %v1317, %v3025
        %v3027 = vadd.f32 %v3022, %v3026
        %v3028 = vpack.c.bf16 %v3027, %v3027
        %v3029 = vld [vmem:[%s899] sm:$0xf]
        %v3030 = vld [vmem:[%s899 + $0x4] sm:$0xf]
        %v3031 = vld [vmem:[%s899 + $0x8] sm:$0xf]
        %v3032 = vld [vmem:[%s899 + $0xc] sm:$0xf]
        %v3033 = vld [vmem:[%s899 + $0x10] sm:$0xf]
        %v3034 = vld [vmem:[%s899 + $0x14] sm:$0xf]
        %v3035 = vld [vmem:[%s899 + $0x18] sm:$0xf]
        %v3036 = vld [vmem:[%s899 + $0x1c] sm:$0xf]
        %v3037 = vld [vmem:[%s899 + $0x20] sm:$0xf]
        %v3038 = vld [vmem:[%s899 + $0x24] sm:$0xf]
        %v3039 = vld [vmem:[%s899 + $0x28] sm:$0xf]
        %v3040 = vld [vmem:[%s899 + $0x2c] sm:$0xf]
        %v3041 = vld [vmem:[%s899 + $0x30] sm:$0xf]
        %v3042 = vld [vmem:[%s899 + $0x34] sm:$0xf]
        %v3043 = vld [vmem:[%s899 + $0x38] sm:$0xf]
        %v3044 = vld [vmem:[%s899 + $0x3c] sm:$0xf]
        %v3045 = vlaneseq
        %v3046 = vshrl.u32 %v3045, 7
        %v3047 = vsub.s32 1, %v3046
        %v3048 = vrot.slane %v1317, %v3047
        %v3065 = vunpack.c.l.b16 %v3029
        %v3066 = vunpack.c.l.b16 %v3030
        %v3067 = vunpack.c.l.b16 %v3031
        %v3068 = vunpack.c.l.b16 %v3032
        %v3069 = vunpack.c.l.b16 %v3033
        %v3070 = vunpack.c.l.b16 %v3034
        %v3071 = vunpack.c.l.b16 %v3035
        %v3072 = vunpack.c.l.b16 %v3036
        %v3073 = vunpack.c.l.b16 %v3037
        %v3074 = vunpack.c.l.b16 %v3038
        %v3075 = vunpack.c.l.b16 %v3039
        %v3076 = vunpack.c.l.b16 %v3040
        %v3077 = vunpack.c.l.b16 %v3041
        %v3078 = vunpack.c.l.b16 %v3042
        %v3079 = vunpack.c.l.b16 %v3043
        %v3080 = vunpack.c.l.b16 %v3044
        %v3081 = vpack.c.b16 %v3066, %v3065
        %v3082 = vpack.c.b16 %v3068, %v3067
        %v3083 = vpack.c.b16 %v3070, %v3069
        %v3084 = vpack.c.b16 %v3072, %v3071
        %v3085 = vpack.c.b16 %v3074, %v3073
        %v3086 = vpack.c.b16 %v3076, %v3075
        %v3087 = vpack.c.b16 %v3078, %v3077
        %v3088 = vpack.c.b16 %v3080, %v3079
        %3097 = vmatprep.subr.bf16.mxu0 0
        %3098 = vmatpush1.bf16.msra.mxu0 %v3081
        %3099 = vmatprep.subr.bf16.mxu0 0
        %3100 = vmatpush1.bf16.msra.mxu0 %v3082
        %3101 = vmatprep.subr.bf16.mxu0 0
        %3102 = vmatpush1.bf16.msra.mxu0 %v3083
        %3103 = vmatprep.subr.bf16.mxu0 0
        %3104 = vmatpush1.bf16.msra.mxu0 %v3084
        %3105 = vmatprep.subr.bf16.mxu0 0
        %3106 = vmatpush1.bf16.msra.mxu0 %v3085
        %3107 = vmatprep.subr.bf16.mxu0 0
        %3108 = vmatpush1.bf16.msra.mxu0 %v3086
        %3109 = vmatprep.subr.bf16.mxu0 0
        %3110 = vmatpush1.bf16.msra.mxu0 %v3087
        %3111 = vmatprep.subr.bf16.mxu0 0
        %3112 = vmatpush1.bf16.msra.mxu0 %v3088
        %3113 = vmatprep.subr.bf16.mxu0 0
        %3114 = vmatpush1.bf16.msra.mxu0 0
        %3115 = vmatprep.subr.bf16.mxu0 0
        %3116 = vmatpush1.bf16.msra.mxu0 0
        %3117 = vmatprep.subr.bf16.mxu0 0
        %3118 = vmatpush1.bf16.msra.mxu0 0
        %3119 = vmatprep.subr.bf16.mxu0 0
        %3120 = vmatpush1.bf16.msra.mxu0 0
        %3121 = vmatprep.subr.bf16.mxu0 0
        %3122 = vmatpush1.bf16.msra.mxu0 0
        %3123 = vmatprep.subr.bf16.mxu0 0
        %3124 = vmatpush1.bf16.msra.mxu0 0
        %3125 = vmatprep.subr.bf16.mxu0 0
        %3126 = vmatpush1.bf16.msra.mxu0 0
        %3127 = vmatprep.subr.bf16.mxu0 0
        %3128 = vmatpush1.bf16.msra.mxu0 0
        %3129 = vmatprep.mubr.bf16.mxu0 0
        %3130 = vmatmul.mubr.bf16.gmra.mrb[0].mxu0 %v3028
        %v3131 = vpop.f32.mrb[0].mxu0
        %v3132 = vadd.f32 %v3048, %v3131
        %v3133 = vpop.f32.mrb[0].mxu0
        %v3134 = vpop.f32.mrb[0].mxu0
        %v3135 = vpop.f32.mrb[0].mxu0
        %3136 = vdwg.mxu0
        %v3137 = vmax.f32 %v3132, 0.0
        %v3138 = vpack.c.bf16 %v3137, %v3137
        %v3139 = vld [vmem:[%s908] sm:$0xf]
        %v3140 = vld [vmem:[%s908 + $0x4] sm:$0xf]
        %v3141 = vld [vmem:[%s908 + $0x8] sm:$0xf]
        %v3142 = vld [vmem:[%s908 + $0xc] sm:$0xf]
        %v3143 = vld [vmem:[%s908 + $0x10] sm:$0xf]
        %v3144 = vld [vmem:[%s908 + $0x14] sm:$0xf]
        %v3145 = vld [vmem:[%s908 + $0x18] sm:$0xf]
        %v3146 = vld [vmem:[%s908 + $0x1c] sm:$0xf]
        %v3147 = vld [vmem:[%s908 + $0x20] sm:$0xf]
        %v3148 = vld [vmem:[%s908 + $0x24] sm:$0xf]
        %v3149 = vld [vmem:[%s908 + $0x28] sm:$0xf]
        %v3150 = vld [vmem:[%s908 + $0x2c] sm:$0xf]
        %v3151 = vld [vmem:[%s908 + $0x30] sm:$0xf]
        %v3152 = vld [vmem:[%s908 + $0x34] sm:$0xf]
        %v3153 = vld [vmem:[%s908 + $0x38] sm:$0xf]
        %v3154 = vld [vmem:[%s908 + $0x3c] sm:$0xf]
        %v3155 = vlaneseq
        %v3156 = vshrl.u32 %v3155, 7
        %v3157 = vsub.s32 2, %v3156
        %v3158 = vrot.slane %v1317, %v3157
        %v3175 = vunpack.c.l.b16 %v3139
        %v3176 = vunpack.c.l.b16 %v3140
        %v3177 = vunpack.c.l.b16 %v3141
        %v3178 = vunpack.c.l.b16 %v3142
        %v3179 = vunpack.c.l.b16 %v3143
        %v3180 = vunpack.c.l.b16 %v3144
        %v3181 = vunpack.c.l.b16 %v3145
        %v3182 = vunpack.c.l.b16 %v3146
        %v3183 = vunpack.c.l.b16 %v3147
        %v3184 = vunpack.c.l.b16 %v3148
        %v3185 = vunpack.c.l.b16 %v3149
        %v3186 = vunpack.c.l.b16 %v3150
        %v3187 = vunpack.c.l.b16 %v3151
        %v3188 = vunpack.c.l.b16 %v3152
        %v3189 = vunpack.c.l.b16 %v3153
        %v3190 = vunpack.c.l.b16 %v3154
        %v3191 = vpack.c.b16 %v3176, %v3175
        %v3192 = vpack.c.b16 %v3178, %v3177
        %v3193 = vpack.c.b16 %v3180, %v3179
        %v3194 = vpack.c.b16 %v3182, %v3181
        %v3195 = vpack.c.b16 %v3184, %v3183
        %v3196 = vpack.c.b16 %v3186, %v3185
        %v3197 = vpack.c.b16 %v3188, %v3187
        %v3198 = vpack.c.b16 %v3190, %v3189
        %3207 = vmatprep.subr.bf16.mxu0 0
        %3208 = vmatpush1.bf16.msra.mxu0 %v3191
        %3209 = vmatprep.subr.bf16.mxu0 0
        %3210 = vmatpush1.bf16.msra.mxu0 %v3192
        %3211 = vmatprep.subr.bf16.mxu0 0
        %3212 = vmatpush1.bf16.msra.mxu0 %v3193
        %3213 = vmatprep.subr.bf16.mxu0 0
        %3214 = vmatpush1.bf16.msra.mxu0 %v3194
        %3215 = vmatprep.subr.bf16.mxu0 0
        %3216 = vmatpush1.bf16.msra.mxu0 %v3195
        %3217 = vmatprep.subr.bf16.mxu0 0
        %3218 = vmatpush1.bf16.msra.mxu0 %v3196
        %3219 = vmatprep.subr.bf16.mxu0 0
        %3220 = vmatpush1.bf16.msra.mxu0 %v3197
        %3221 = vmatprep.subr.bf16.mxu0 0
        %3222 = vmatpush1.bf16.msra.mxu0 %v3198
        %3223 = vmatprep.subr.bf16.mxu0 0
        %3224 = vmatpush1.bf16.msra.mxu0 0
        %3225 = vmatprep.subr.bf16.mxu0 0
        %3226 = vmatpush1.bf16.msra.mxu0 0
        %3227 = vmatprep.subr.bf16.mxu0 0
        %3228 = vmatpush1.bf16.msra.mxu0 0
        %3229 = vmatprep.subr.bf16.mxu0 0
        %3230 = vmatpush1.bf16.msra.mxu0 0
        %3231 = vmatprep.subr.bf16.mxu0 0
        %3232 = vmatpush1.bf16.msra.mxu0 0
        %3233 = vmatprep.subr.bf16.mxu0 0
        %3234 = vmatpush1.bf16.msra.mxu0 0
        %3235 = vmatprep.subr.bf16.mxu0 0
        %3236 = vmatpush1.bf16.msra.mxu0 0
        %3237 = vmatprep.subr.bf16.mxu0 0
        %3238 = vmatpush1.bf16.msra.mxu0 0
        %3239 = vmatprep.mubr.bf16.mxu0 0
        %3240 = vmatmul.mubr.bf16.gmra.mrb[0].mxu0 %v3138
        %v3241 = vpop.f32.mrb[0].mxu0
        %v3242 = vadd.f32 %v3158, %v3241
        %v3243 = vpop.f32.mrb[0].mxu0
        %v3244 = vpop.f32.mrb[0].mxu0
        %v3245 = vpop.f32.mrb[0].mxu0
        %3246 = vdwg.mxu0
        %v3247 = vadd.f32 %v3027, %v3242
        %3248 = vadd.xlane.f32.xlu0 %v3247
        %v3249 = vpop.xlane.xlu0 %3248
        %v3250 = vmul.f32 %v3249, 0.03125
        %v3251 = vmul.f32 %v3247, %v3247
        %3252 = vadd.xlane.f32.xlu0 %v3251
        %v3253 = vpop.xlane.xlu0 %3252
        %v3254 = vmul.f32 %v3253, 0.03125
        %v3255 = vmul.f32 %v3250, %v3250
        %v3256 = vsub.f32 %v3254, %v3255
        %v3257 = vsub.f32 %v3247, %v3250
        %v3258 = vadd.f32 %v3256, 1e-05
        %v3259 = vrsqrt.pop %v3258
        %v3260 = vmul.f32 %v3257, %v3259
        %v3261 = vlaneseq
        %v3262 = vshrl.u32 %v3261, 7
        %v3263 = vsub.s32 3, %v3262
        %v3264 = vrot.slane %v1317, %v3263
        %v3265 = vmul.f32 %v3260, %v3264
        %v3266 = vlaneseq
        %v3267 = vshrl.u32 %v3266, 7
        %v3268 = vsub.s32 4, %v3267
        %v3269 = vrot.slane %v1317, %v3268
        %v3270 = vadd.f32 %v3265, %v3269
        %3271 = vst [vmem:[#allocation2] sm:$0xff] %v3270
        %p3272 = scmp.eq.s32.totalorder %s45, 1
        // Predicated region
        $region153: #{tpu_custom_call.1} parent=91 // pred_check
          %p3273 = pneg %p3272
        $region154: #{tpu_custom_call.1} parent=91 // pred_check_branch
          %3275 = sbr.rel (%p3273) target = $region156
        $region155: #{tpu_custom_call.1} parent=91 // pred_region
          %v3276 = vld [vmem:[%s8] sm:$0xff]
          %v3277 = vpack.c.bf16 %v3270, %v3270
          %v3278 = vld [vmem:[#allocation12] sm:$0xf]
          %v3279 = vld [vmem:[#allocation12 + $0x4] sm:$0xf]
          %v3280 = vld [vmem:[#allocation12 + $0x8] sm:$0xf]
          %v3281 = vld [vmem:[#allocation12 + $0xc] sm:$0xf]
          %v3282 = vld [vmem:[#allocation12 + $0x10] sm:$0xf]
          %v3283 = vld [vmem:[#allocation12 + $0x14] sm:$0xf]
          %v3284 = vld [vmem:[#allocation12 + $0x18] sm:$0xf]
          %v3285 = vld [vmem:[#allocation12 + $0x1c] sm:$0xf]
          %v3286 = vld [vmem:[#allocation12 + $0x20] sm:$0xf]
          %v3287 = vld [vmem:[#allocation12 + $0x24] sm:$0xf]
          %v3288 = vld [vmem:[#allocation12 + $0x28] sm:$0xf]
          %v3289 = vld [vmem:[#allocation12 + $0x2c] sm:$0xf]
          %v3290 = vld [vmem:[#allocation12 + $0x30] sm:$0xf]
          %v3291 = vld [vmem:[#allocation12 + $0x34] sm:$0xf]
          %v3292 = vld [vmem:[#allocation12 + $0x38] sm:$0xf]
          %v3293 = vld [vmem:[#allocation12 + $0x3c] sm:$0xf]
          %v3294 = vlaneseq
          %v3295 = vshrl.u32 %v3294, 7
          %v3296 = vsub.s32 3, %v3295
          %v3297 = vrot.slane %v3276, %v3296
          %v3314 = vunpack.c.l.b16 %v3278
          %v3315 = vunpack.c.l.b16 %v3279
          %v3316 = vunpack.c.l.b16 %v3280
          %v3317 = vunpack.c.l.b16 %v3281
          %v3318 = vunpack.c.l.b16 %v3282
          %v3319 = vunpack.c.l.b16 %v3283
          %v3320 = vunpack.c.l.b16 %v3284
          %v3321 = vunpack.c.l.b16 %v3285
          %v3322 = vunpack.c.l.b16 %v3286
          %v3323 = vunpack.c.l.b16 %v3287
          %v3324 = vunpack.c.l.b16 %v3288
          %v3325 = vunpack.c.l.b16 %v3289
          %v3326 = vunpack.c.l.b16 %v3290
          %v3327 = vunpack.c.l.b16 %v3291
          %v3328 = vunpack.c.l.b16 %v3292
          %v3329 = vunpack.c.l.b16 %v3293
          %v3330 = vpack.c.b16 %v3315, %v3314
          %v3331 = vpack.c.b16 %v3317, %v3316
          %v3332 = vpack.c.b16 %v3319, %v3318
          %v3333 = vpack.c.b16 %v3321, %v3320
          %v3334 = vpack.c.b16 %v3323, %v3322
          %v3335 = vpack.c.b16 %v3325, %v3324
          %v3336 = vpack.c.b16 %v3327, %v3326
          %v3337 = vpack.c.b16 %v3329, %v3328
          %3346 = vmatprep.subr.bf16.mxu0 0
          %3347 = vmatpush1.bf16.msra.mxu0 %v3330
          %3348 = vmatprep.subr.bf16.mxu0 0
          %3349 = vmatpush1.bf16.msra.mxu0 %v3331
          %3350 = vmatprep.subr.bf16.mxu0 0
          %3351 = vmatpush1.bf16.msra.mxu0 %v3332
          %3352 = vmatprep.subr.bf16.mxu0 0
          %3353 = vmatpush1.bf16.msra.mxu0 %v3333
          %3354 = vmatprep.subr.bf16.mxu0 0
          %3355 = vmatpush1.bf16.msra.mxu0 %v3334
          %3356 = vmatprep.subr.bf16.mxu0 0
          %3357 = vmatpush1.bf16.msra.mxu0 %v3335
          %3358 = vmatprep.subr.bf16.mxu0 0
          %3359 = vmatpush1.bf16.msra.mxu0 %v3336
          %3360 = vmatprep.subr.bf16.mxu0 0
          %3361 = vmatpush1.bf16.msra.mxu0 %v3337
          %3362 = vmatprep.subr.bf16.mxu0 0
          %3363 = vmatpush1.bf16.msra.mxu0 0
          %3364 = vmatprep.subr.bf16.mxu0 0
          %3365 = vmatpush1.bf16.msra.mxu0 0
          %3366 = vmatprep.subr.bf16.mxu0 0
          %3367 = vmatpush1.bf16.msra.mxu0 0
          %3368 = vmatprep.subr.bf16.mxu0 0
          %3369 = vmatpush1.bf16.msra.mxu0 0
          %3370 = vmatprep.subr.bf16.mxu0 0
          %3371 = vmatpush1.bf16.msra.mxu0 0
          %3372 = vmatprep.subr.bf16.mxu0 0
          %3373 = vmatpush1.bf16.msra.mxu0 0
          %3374 = vmatprep.subr.bf16.mxu0 0
          %3375 = vmatpush1.bf16.msra.mxu0 0
          %3376 = vmatprep.subr.bf16.mxu0 0
          %3377 = vmatpush1.bf16.msra.mxu0 0
          %3378 = vmatprep.mubr.bf16.mxu0 0
          %3379 = vmatmul.mubr.bf16.gmra.mrb[0].mxu0 %v3277
          %v3380 = vpop.f32.mrb[0].mxu0
          %v3381 = vadd.f32 %v3297, %v3380
          %v3382 = vpop.f32.mrb[0].mxu0
          %v3383 = vpop.f32.mrb[0].mxu0
          %v3384 = vpop.f32.mrb[0].mxu0
          %3385 = vdwg.mxu0
          %vm3386 = vcmp.eq.s32.totalorder %v1579, 16
          %v3387 = vxor.u32 %v3381, 2147483648
          %v3388 = vmul.f32 %v3387, 1.442695
          %v3389 = vpow.pop %v3388
          %v3390 = vadd.f32 %v3389, 1.0
          %v3391 = vrcp.pop %v3390
          %v3392 = vmul.f32 1.0, %v3391
          %v3393 = vsel %vm3386, %v3392, %v3381
          %3394 = vst [vmem:[%s1021] sm:$0xff] %v3393
        $region156: #{tpu_custom_call.1} parent=91 // pred_fallthru
          _
        %s3395 = sand.u32 %s498, 1
        %s3396 = scalar_lea.sflag [#allocation5], %s3395
        %s3397 = sand.u32 %s498, 1
        %s3398 = smul.addr %s3397, 8
        %s3399 = scalar_lea.vmem [#allocation22], %s3398
        // Predicated region
        $region157: #{tpu_custom_call.1} parent=91 // pred_check
          %p3400 = pneg %p508
        $region158: #{tpu_custom_call.1} parent=91 // pred_check_branch
          %3402 = sbr.rel (%p3400) target = $region160
        $region159: #{tpu_custom_call.1} parent=91 // pred_region
          %s3404 = ssub.s32 128, 128
          %3405 = vsyncadd %s3396, %s3404
          %s3406 = smul.addr %s44, 128
          %s3407 = scalar_lea.hbm %s18, %s3406
          %s3409 = sshll.u32 %s3399, 4
          %s3410 = int_to_ptr.vmem [resolvable:$true] %s3409
          %3412 = dma.vmem_to_hbm [thread:$0]  %s3410, 128, %s3407, %s3396
        $region160: #{tpu_custom_call.1} parent=91 // pred_fallthru
          _
      $region92: #{tpu_custom_call.1} parent=5 // pred_fallthru
        _
      %p3413 = scmp.le.s32.totalorder 2, %s35
      // Predicated region
      $region161: #{tpu_custom_call.1} parent=5 // pred_check
        %p3414 = pneg %p3413
      $region162: #{tpu_custom_call.1} parent=5 // pred_check_branch
        %3416 = sbr.rel (%p3414) target = $region164
      $region163: #{tpu_custom_call.1} parent=5 // pred_region
        %s3417 = ssub.s32 %s35, 2
        // Predicated region
        $region165: #{tpu_custom_call.1} parent=163 // pred_check
          %p3418 = pneg %p514
        $region166: #{tpu_custom_call.1} parent=163 // pred_check_branch
          %3420 = sbr.rel (%p3418) target = $region168
        $region167: #{tpu_custom_call.1} parent=163 // pred_region
          %s3421 = sand.u32 %s499, 1
          %s3422 = scalar_lea.sflag [#allocation5], %s3421
          %s3423 = sand.u32 %s499, 1
          %s3424 = smul.addr %s3423, 8
          %s3425 = scalar_lea.vmem [#allocation22], %s3424
          %3426 = dma.done %s3422, 128
        $region168: #{tpu_custom_call.1} parent=163 // pred_fallthru
          _
      $region164: #{tpu_custom_call.1} parent=5 // pred_fallthru
        _
    $region6: #{tpu_custom_call.1} parent=1 // loop_footer
      %s39 = sadd.s32 1, %s35
    $region7: #{tpu_custom_call.1} parent=1 // loop_footer_branch
      %34 = sbr.rel target = $region3
    $region8: #{tpu_custom_call.1} parent=1 // loop_exit
      _
    %3427 = vsyncpa [#allocation4], 1
    %s3428 = scalar_lea.sflag [#allocation4], 1
    %3429 = vsyncpa %s3428, 1
    %3430 = vsyncpa [#allocation7], 1
    %s3431 = scalar_lea.sflag [#allocation7], 1
    %3432 = vsyncpa %s3431, 1
    %3433 = vsyncpa [#allocation10], 1
    %3434 = vsyncpa [#allocation13], 1
    %3435 = vsyncpa [#allocation5], 1
    %s3436 = scalar_lea.sflag [#allocation5], 1
    %3437 = vsyncpa %s3436, 1

</llo_original>
